<compile_context>
chip_gen: v7x
topology: tpu7x:2x2x1
jax: 0.10.0
libtpu: 0.0.40
codegen_flags: <defaults>
</compile_context>

<pallas_src>
import functools
import math

import jax
import jax.numpy as jnp
from jax import lax
from jax.experimental import pallas as pl
from jax.experimental.pallas import tpu as pltpu


def _round_up(v, m):
    return (v + m - 1) // m * m


def _vmem_limit_bytes():
    """Generation-aware VMEM budget (~7/8 of physical, leaves headroom)."""
    try:
        cap = getattr(pltpu.get_tpu_info(), "vmem_capacity_bytes", None)
        if cap:
            return int(cap) * 7 // 8        # ~112 MiB on v5e/v6e, ~56 MiB on v7x
    except Exception:
        pass
    return 64 * 1024 * 1024


def mha_kernel(xt_ref, wqkv_ref, bqkv_ref, wp_ref, bp_ref, o_ref, acc_ref,
               *, heads_per_step, head_dim, emb_size, seq_len):
    """Grid = (batch, head_group). One group of G heads per step.

    xt_ref  : (1, E_p, N_p)  bf16   x^T, padded (zeros in pad rows/cols)
    wqkv_ref: (1, 3*G*D, E_p) bf16  [q_h0..q_hG-1 | k_h0.. | v_h0..] rows, padded input dim
    bqkv_ref: (1, 3*G*D, 1)  f32
    wp_ref  : (1, G*D, E_p)  bf16   projection weight slice (in, out-padded)
    bp_ref  : (1, E_p)       f32
    o_ref   : (1, N_p, E_p)
    acc_ref : (N_p, E_p)     f32 accumulator scratch (resident across groups)
    """
    g = pl.program_id(1)
    G, D = heads_per_step, head_dim
    scale = float(emb_size) ** 0.5            # original emb_size, not padded

    xt = xt_ref[0]                                           # (E_p, N_p) bf16
    n_pad = xt.shape[1]

    # Fused QKV projection for this group: one (3GD, E_p) x (E_p, N_p) matmul.
    qkv = lax.dot_general(wqkv_ref[0], xt, (((1,), (0,)), ((), ())),
                          preferred_element_type=jnp.float32)  # (3GD, N_p) f32
    qkv = qkv + bqkv_ref[0]                                    # (3GD,1) broadcast

    # Mask padded key positions (hoisted out of the per-head loop).
    if seq_len != n_pad:
        key_valid = lax.broadcasted_iota(jnp.int32, (1, n_pad), 1) < seq_len
    else:
        key_valid = None

    ctx_parts = []
    for j in range(G):                         # static unroll over heads in group
        # Static sublane slices of the fused group projection.
        qt = qkv[j * D:(j + 1) * D].astype(jnp.bfloat16)               # (D, N_p)
        kt = qkv[(G + j) * D:(G + j + 1) * D].astype(jnp.bfloat16)     # (D, N_p)
        vt = qkv[(2 * G + j) * D:(2 * G + j + 1) * D].astype(jnp.bfloat16)

        # energy[q, k] = sum_d qT[d, q] * kT[d, k]
        energy = lax.dot_general(qt, kt, (((0,), (0,)), ((), ())),
                                 preferred_element_type=jnp.float32)   # (N_p, N_p)
        if key_valid is not None:
            energy = jnp.where(key_valid, energy, jnp.finfo(jnp.float32).min)

        # softmax over keys; 1/sqrt(E) folded into the denominator (EUP recip).
        m = jnp.max(energy, axis=-1, keepdims=True)
        e = jnp.exp(energy - m)
        denom = jnp.sum(e, axis=-1, keepdims=True) * scale
        attn = (e * pl.reciprocal(denom, approx=True)).astype(jnp.bfloat16)
        # dropout p=0.0 -> identity

        # ctx^T[d, q] = sum_k vT[d, k] * attn[q, k]
        ctx_parts.append(
            lax.dot_general(vt, attn, (((1,), (1,)), ((), ())),
                            preferred_element_type=jnp.float32
                            ).astype(jnp.bfloat16))                    # (D, N_p)

    ctx = ctx_parts[0] if G == 1 else jnp.concatenate(ctx_parts, axis=0)  # (GD, N_p)

    # This group's contribution to the output projection: contraction over G*D
    # (~256 wide -> feeds the full v6e/v7x MXU); head concat folded into the
    # projection weight slicing.
    contrib = lax.dot_general(ctx, wp_ref[0], (((0,), (0,)), ((), ())),
                              preferred_element_type=jnp.float32)      # (N_p, E_p)

    @pl.when(g == 0)
    def _():
        acc_ref[...] = contrib + bp_ref[...]

    @pl.when(g > 0)
    def _():
        acc_ref[...] += contrib

    @pl.when(g == pl.num_programs(1) - 1)
    def _():
        o_ref[0] = acc_ref[...].astype(o_ref.dtype)   # single, lane-dense store


def multi_head_attention(x, params, *, num_head):
    """x: (B, N, E) float32. params: packed weights (see pack_params)."""
    B, N, E = x.shape
    H = num_head
    assert E % H == 0, "emb_size must be divisible by num_head"
    D = E // H
    G = params["heads_per_step"]
    n_groups = H // G
    E_p = params["wqkv"].shape[-1]
    N_p = _round_up(max(N, 128), 128)   # lane-dense intermediates & output stores
    out_dtype = x.dtype

    # Pad (zeros), transpose and cast activations once in the wrapper so the
    # kernel sees a lane-dense bf16 (E_p, N_p) slab per batch element.
    x_p = jnp.pad(x, ((0, 0), (0, N_p - N), (0, E_p - E)))
    x_t = jnp.transpose(x_p, (0, 2, 1)).astype(jnp.bfloat16)       # (B, E_p, N_p)

    kernel = functools.partial(mha_kernel, heads_per_step=G, head_dim=D,
                               emb_size=E, seq_len=N)

    out_p = pl.pallas_call(
        kernel,
        out_shape=jax.ShapeDtypeStruct((B, N_p, E_p), out_dtype),
        grid_spec=pltpu.PrefetchScalarGridSpec(
            num_scalar_prefetch=0,
            grid=(B, n_groups),
            in_specs=[
                pl.BlockSpec((1, E_p, N_p), lambda b, g: (b, 0, 0)),        # x^T
                pl.BlockSpec((1, 3 * G * D, E_p), lambda b, g: (g, 0, 0)),  # Wqkv group
                pl.BlockSpec((1, 3 * G * D, 1), lambda b, g: (g, 0, 0)),    # bqkv group
                pl.BlockSpec((1, G * D, E_p), lambda b, g: (g, 0, 0)),      # Wp group
                pl.BlockSpec((1, E_p), lambda b, g: (0, 0)),                # bp
            ],
            out_specs=pl.BlockSpec((1, N_p, E_p), lambda b, g: (b, 0, 0)),
            scratch_shapes=[pltpu.VMEM((N_p, E_p), jnp.float32)],           # f32 acc
        ),
        compiler_params=pltpu.CompilerParams(
            dimension_semantics=("parallel", "arbitrary"),
            vmem_limit_bytes=_vmem_limit_bytes()),
    )(x_t, params["wqkv"], params["bqkv"], params["wp"], params["bp"])

    return out_p[:, :N, :E]


def pack_params(wq, bq, wk, bk, wv, bv, wp, bp, num_head, heads_per_step=None):
    """Repack torch-layout (out, in) Linear weights for the kernel.

    * E is zero-padded to a multiple of 128 on contraction/output dims so all
      kernel blocks are lane-dense.
    * Heads are grouped (G per grid step) so the fused projection contraction
      G*D is ~256 wide (v6e/v7x MXU); G=1 would also be correct (v5e-style).
    * Per group: Q/K/V weight rows fused head-major -> (3*G*D, E_p); biases
      -> (3*G*D, 1); projection weight transposed to (in, out) and split by
      group along the (head-major) input dim -> (H//G, G*D, E_p).
    * MXU operands (weights) pre-cast to bf16; biases stay f32.
    """
    E = wq.shape[0]
    H = num_head
    assert E % H == 0
    D = E // H
    E_p = _round_up(E, 128)

    if heads_per_step is None:
        G = max(1, min(H, 256 // max(D, 1)))   # target ~256-wide projection contraction
        while H % G:
            G -= 1
    else:
        G = heads_per_step
        assert H % G == 0
    n_groups = H // G

    def pad_in(w):  # pad the contraction (input) dim E -> E_p with zeros
        return jnp.pad(w, ((0, 0), (0, E_p - E)))

    wq_p, wk_p, wv_p = pad_in(wq), pad_in(wk), pad_in(wv)       # (E, E_p)

    wqkv_g, bqkv_g = [], []
    for gi in range(n_groups):
        lo, hi = gi * G * D, (gi + 1) * G * D
        wqkv_g.append(jnp.concatenate([wq_p[lo:hi], wk_p[lo:hi], wv_p[lo:hi]], axis=0))
        bqkv_g.append(jnp.concatenate([bq[lo:hi], bk[lo:hi], bv[lo:hi]])[:, None])
    wqkv_g = jnp.stack(wqkv_g)                                  # (H//G, 3GD, E_p)
    bqkv_g = jnp.stack(bqkv_g)                                  # (H//G, 3GD, 1)

    wp_t = jnp.pad(wp.T, ((0, 0), (0, E_p - E)))                # (E, E_p), (in, out)
    wp_g = wp_t.reshape(n_groups, G * D, E_p)                   # head-major groups
    bp_p = jnp.pad(bp, (0, E_p - E)).reshape(1, E_p)

    return {
        "wqkv": wqkv_g.astype(jnp.bfloat16),
        "bqkv": bqkv_g.astype(jnp.float32),
        "wp": wp_g.astype(jnp.bfloat16),
        "bp": bp_p.astype(jnp.float32),
        "heads_per_step": G,
    }


def _init_linear(key, in_features, out_features):
    """PyTorch nn.Linear default init (uniform +- 1/sqrt(in))."""
    kw, kb = jax.random.split(key)
    bound = 1.0 / math.sqrt(in_features)
    w = jax.random.uniform(kw, (out_features, in_features), jnp.float32,
                           minval=-bound, maxval=bound)
    b = jax.random.uniform(kb, (out_features,), jnp.float32,
                           minval=-bound, maxval=bound)
    return w, b


def _reference(x, raw, num_head):
    """Pure-JAX f32 reference (same math as the torch module, mask=None)."""
    B, N, E = x.shape
    D = E // num_head
    q = x @ raw["wq"].T + raw["bq"]
    k = x @ raw["wk"].T + raw["bk"]
    v = x @ raw["wv"].T + raw["bv"]

    def split_heads(t):  # (B, N, E) -> (B, H, N, D)
        return t.reshape(B, N, num_head, D).transpose(0, 2, 1, 3)

    qh, kh, vh = split_heads(q), split_heads(k), split_heads(v)
    energy = jnp.einsum("bhqd,bhkd->bhqk", qh, kh)
    attn = jax.nn.softmax(energy, axis=-1) / (E ** 0.5)
    out = jnp.einsum("bhal,bhlv->bhav", attn, vh)
    out = out.transpose(0, 2, 1, 3).reshape(B, N, E)
    return out @ raw["wp"].T + raw["bp"]


if __name__ == "__main__":
    # Small shapes consistent with the module (emb_size divisible by num_head=8).
    B, N, E, H = 2, 8, 32, 8

    key = jax.random.PRNGKey(0)
    kx, kq, kk, kv, kp = jax.random.split(key, 5)

    x = jax.random.normal(kx, (B, N, E), jnp.float32)

    wq, bq = _init_linear(kq, E, E)
    wk, bk = _init_linear(kk, E, E)
    wv, bv = _init_linear(kv, E, E)
    wp, bp = _init_linear(kp, E, E)

    raw = {"wq": wq, "bq": bq, "wk": wk, "bk": bk,
           "wv": wv, "bv": bv, "wp": wp, "bp": bp}
    params = pack_params(wq, bq, wk, bk, wv, bv, wp, bp, H)

    out = multi_head_attention(x, params, num_head=H)
    out = jax.block_until_ready(out)

    ref = _reference(x, raw, H)
    assert out.shape == (B, N, E)
    # Tolerance accounts for bf16 MXU operands (f32 accumulation / f32 softmax)
    # and the approximate EUP reciprocal on the softmax denominator.
    assert jnp.allclose(out, ref, rtol=2e-2, atol=2e-2), "mismatch vs reference"

    print("KERNEL_OK")
</pallas_src>

<mosaic_0001>
module attributes {stable_mosaic.version = 11 : i64} {
  func.func @mha_kernel(%arg0: i32, %arg1: i32, %arg2: memref<1x128x128xbf16, #tpu.memory_space<vmem>>, %arg3: memref<1x96x128xbf16, #tpu.memory_space<vmem>>, %arg4: memref<1x96x1xf32, #tpu.memory_space<vmem>>, %arg5: memref<1x32x128xbf16, #tpu.memory_space<vmem>>, %arg6: memref<1x128xf32, #tpu.memory_space<vmem>>, %arg7: memref<1x128x128xf32, #tpu.memory_space<vmem>>, %arg8: memref<128x128xf32, #tpu.memory_space<vmem>>) attributes {dimension_semantics = [#tpu.dimension_semantics<parallel>, #tpu.dimension_semantics<arbitrary>], iteration_bounds = array<i64: 2, 1>, scalar_prefetch = 0 : i64, scratch_operands = 1 : i64, tpu.core_type = #tpu.core_type<tc>, window_params = [{transform_indices = @transform_0, window_bounds = array<i64: 1, 128, 128>}, {transform_indices = @transform_1, window_bounds = array<i64: 1, 96, 128>}, {transform_indices = @transform_2, window_bounds = array<i64: 1, 96, 1>}, {transform_indices = @transform_3, window_bounds = array<i64: 1, 32, 128>}, {pipeline_mode = #tpu.pipeline_mode<synchronous>, transform_indices = @transform_4, window_bounds = array<i64: 1, 128>}, {transform_indices = @transform_5, window_bounds = array<i64: 1, 128, 128>}]} {
    %c0 = arith.constant 0 : index
    %c0_0 = arith.constant 0 : index
    %c0_1 = arith.constant 0 : index
    %0 = vector.load %arg2[%c0, %c0_0, %c0_1] : memref<1x128x128xbf16, #tpu.memory_space<vmem>>, vector<1x128x128xbf16>
    %1 = vector.shape_cast %0 : vector<1x128x128xbf16> to vector<128x128xbf16>
    %c0_2 = arith.constant 0 : index
    %c0_3 = arith.constant 0 : index
    %c0_4 = arith.constant 0 : index
    %2 = vector.load %arg3[%c0_2, %c0_3, %c0_4] : memref<1x96x128xbf16, #tpu.memory_space<vmem>>, vector<1x96x128xbf16>
    %3 = vector.shape_cast %2 : vector<1x96x128xbf16> to vector<96x128xbf16>
    %cst = arith.constant dense<0.000000e+00> : vector<96x128xf32>
    %4 = tpu.matmul %3, %1, %cst {dimension_numbers = #tpu.dot_dimension_numbers<[1], [0], [0], [1], [0, 0, 1, 1], [], []>} : vector<96x128xbf16>, vector<128x128xbf16>, vector<96x128xf32> -> vector<96x128xf32>
    %c0_5 = arith.constant 0 : index
    %c0_6 = arith.constant 0 : index
    %c0_7 = arith.constant 0 : index
    %5 = vector.load %arg4[%c0_5, %c0_6, %c0_7] : memref<1x96x1xf32, #tpu.memory_space<vmem>>, vector<1x96x1xf32>
    %6 = vector.shape_cast %5 : vector<1x96x1xf32> to vector<96x1xf32>
    %7 = vector.broadcast %6 : vector<96x1xf32> to vector<96x128xf32>
    %8 = arith.addf %4, %7 : vector<96x128xf32>
    %9 = tpu.iota {dimensions = array<i32: 1>} : vector<1x128xi32>
    %c8_i32 = arith.constant 8 : i32
    %10 = vector.broadcast %c8_i32 : i32 to vector<1x128xi32>
    %11 = arith.cmpi slt, %9, %10 : vector<1x128xi32>
    %12 = vector.extract_strided_slice %8 {offsets = [0, 0], sizes = [4, 128], strides = [1, 1]} : vector<96x128xf32> to vector<4x128xf32>
    %13 = arith.truncf %12 : vector<4x128xf32> to vector<4x128xbf16>
    %14 = vector.extract_strided_slice %8 {offsets = [32, 0], sizes = [4, 128], strides = [1, 1]} : vector<96x128xf32> to vector<4x128xf32>
    %15 = arith.truncf %14 : vector<4x128xf32> to vector<4x128xbf16>
    %16 = vector.extract_strided_slice %8 {offsets = [64, 0], sizes = [4, 128], strides = [1, 1]} : vector<96x128xf32> to vector<4x128xf32>
    %17 = arith.truncf %16 : vector<4x128xf32> to vector<4x128xbf16>
    %cst_8 = arith.constant dense<0.000000e+00> : vector<128x128xf32>
    %18 = tpu.matmul %13, %15, %cst_8 {dimension_numbers = #tpu.dot_dimension_numbers<[0], [0], [1], [1], [0, 1, 1, 1], [], []>} : vector<4x128xbf16>, vector<4x128xbf16>, vector<128x128xf32> -> vector<128x128xf32>
    %cst_9 = arith.constant -3.40282347E+38 : f32
    %19 = vector.shape_cast %11 : vector<1x128xi1> to vector<1x128xi1>
    %20 = vector.broadcast %19 : vector<1x128xi1> to vector<128x128xi1>
    %21 = vector.broadcast %cst_9 : f32 to vector<128x128xf32>
    %22 = arith.select %20, %18, %21 : vector<128x128xi1>, vector<128x128xf32>
    %cst_10 = arith.constant dense<0xFF800000> : vector<128xf32>
    %23 = vector.multi_reduction <maximumf>, %22, %cst_10 [1] : vector<128x128xf32> to vector<128xf32>
    %24 = vector.shape_cast %23 : vector<128xf32> to vector<128x1xf32>
    %25 = vector.broadcast %24 : vector<128x1xf32> to vector<128x128xf32>
    %26 = arith.subf %22, %25 : vector<128x128xf32>
    %27 = math.exp %26 : vector<128x128xf32>
    %cst_11 = arith.constant dense<0.000000e+00> : vector<128xf32>
    %28 = vector.multi_reduction <add>, %27, %cst_11 [1] : vector<128x128xf32> to vector<128xf32>
    %29 = vector.shape_cast %28 : vector<128xf32> to vector<128x1xf32>
    %cst_12 = arith.constant 5.65685415 : f32
    %30 = vector.broadcast %cst_12 : f32 to vector<128x1xf32>
    %31 = arith.mulf %29, %30 : vector<128x1xf32>
    %32 = tpu.reciprocal %31 {approx = true} : vector<128x1xf32> -> vector<128x1xf32>
    %33 = vector.broadcast %32 : vector<128x1xf32> to vector<128x128xf32>
    %34 = arith.mulf %27, %33 : vector<128x128xf32>
    %35 = arith.truncf %34 : vector<128x128xf32> to vector<128x128xbf16>
    %cst_13 = arith.constant dense<0.000000e+00> : vector<4x128xf32>
    %36 = tpu.matmul %17, %35, %cst_13 {dimension_numbers = #tpu.dot_dimension_numbers<[1], [1], [0], [0], [0, 0, 1, 0], [], []>} : vector<4x128xbf16>, vector<128x128xbf16>, vector<4x128xf32> -> vector<4x128xf32>
    %37 = arith.truncf %36 : vector<4x128xf32> to vector<4x128xbf16>
    %38 = vector.extract_strided_slice %8 {offsets = [4, 0], sizes = [4, 128], strides = [1, 1]} : vector<96x128xf32> to vector<4x128xf32>
    %39 = arith.truncf %38 : vector<4x128xf32> to vector<4x128xbf16>
    %40 = vector.extract_strided_slice %8 {offsets = [36, 0], sizes = [4, 128], strides = [1, 1]} : vector<96x128xf32> to vector<4x128xf32>
    %41 = arith.truncf %40 : vector<4x128xf32> to vector<4x128xbf16>
    %42 = vector.extract_strided_slice %8 {offsets = [68, 0], sizes = [4, 128], strides = [1, 1]} : vector<96x128xf32> to vector<4x128xf32>
    %43 = arith.truncf %42 : vector<4x128xf32> to vector<4x128xbf16>
    %cst_14 = arith.constant dense<0.000000e+00> : vector<128x128xf32>
    %44 = tpu.matmul %39, %41, %cst_14 {dimension_numbers = #tpu.dot_dimension_numbers<[0], [0], [1], [1], [0, 1, 1, 1], [], []>} : vector<4x128xbf16>, vector<4x128xbf16>, vector<128x128xf32> -> vector<128x128xf32>
    %cst_15 = arith.constant -3.40282347E+38 : f32
    %45 = vector.shape_cast %11 : vector<1x128xi1> to vector<1x128xi1>
    %46 = vector.broadcast %45 : vector<1x128xi1> to vector<128x128xi1>
    %47 = vector.broadcast %cst_15 : f32 to vector<128x128xf32>
    %48 = arith.select %46, %44, %47 : vector<128x128xi1>, vector<128x128xf32>
    %cst_16 = arith.constant dense<0xFF800000> : vector<128xf32>
    %49 = vector.multi_reduction <maximumf>, %48, %cst_16 [1] : vector<128x128xf32> to vector<128xf32>
    %50 = vector.shape_cast %49 : vector<128xf32> to vector<128x1xf32>
    %51 = vector.broadcast %50 : vector<128x1xf32> to vector<128x128xf32>
    %52 = arith.subf %48, %51 : vector<128x128xf32>
    %53 = math.exp %52 : vector<128x128xf32>
    %cst_17 = arith.constant dense<0.000000e+00> : vector<128xf32>
    %54 = vector.multi_reduction <add>, %53, %cst_17 [1] : vector<128x128xf32> to vector<128xf32>
    %55 = vector.shape_cast %54 : vector<128xf32> to vector<128x1xf32>
    %cst_18 = arith.constant 5.65685415 : f32
    %56 = vector.broadcast %cst_18 : f32 to vector<128x1xf32>
    %57 = arith.mulf %55, %56 : vector<128x1xf32>
    %58 = tpu.reciprocal %57 {approx = true} : vector<128x1xf32> -> vector<128x1xf32>
    %59 = vector.broadcast %58 : vector<128x1xf32> to vector<128x128xf32>
    %60 = arith.mulf %53, %59 : vector<128x128xf32>
    %61 = arith.truncf %60 : vector<128x128xf32> to vector<128x128xbf16>
    %cst_19 = arith.constant dense<0.000000e+00> : vector<4x128xf32>
    %62 = tpu.matmul %43, %61, %cst_19 {dimension_numbers = #tpu.dot_dimension_numbers<[1], [1], [0], [0], [0, 0, 1, 0], [], []>} : vector<4x128xbf16>, vector<128x128xbf16>, vector<4x128xf32> -> vector<4x128xf32>
    %63 = arith.truncf %62 : vector<4x128xf32> to vector<4x128xbf16>
    %64 = vector.extract_strided_slice %8 {offsets = [8, 0], sizes = [4, 128], strides = [1, 1]} : vector<96x128xf32> to vector<4x128xf32>
    %65 = arith.truncf %64 : vector<4x128xf32> to vector<4x128xbf16>
    %66 = vector.extract_strided_slice %8 {offsets = [40, 0], sizes = [4, 128], strides = [1, 1]} : vector<96x128xf32> to vector<4x128xf32>
    %67 = arith.truncf %66 : vector<4x128xf32> to vector<4x128xbf16>
    %68 = vector.extract_strided_slice %8 {offsets = [72, 0], sizes = [4, 128], strides = [1, 1]} : vector<96x128xf32> to vector<4x128xf32>
    %69 = arith.truncf %68 : vector<4x128xf32> to vector<4x128xbf16>
    %cst_20 = arith.constant dense<0.000000e+00> : vector<128x128xf32>
    %70 = tpu.matmul %65, %67, %cst_20 {dimension_numbers = #tpu.dot_dimension_numbers<[0], [0], [1], [1], [0, 1, 1, 1], [], []>} : vector<4x128xbf16>, vector<4x128xbf16>, vector<128x128xf32> -> vector<128x128xf32>
    %cst_21 = arith.constant -3.40282347E+38 : f32
    %71 = vector.shape_cast %11 : vector<1x128xi1> to vector<1x128xi1>
    %72 = vector.broadcast %71 : vector<1x128xi1> to vector<128x128xi1>
    %73 = vector.broadcast %cst_21 : f32 to vector<128x128xf32>
    %74 = arith.select %72, %70, %73 : vector<128x128xi1>, vector<128x128xf32>
    %cst_22 = arith.constant dense<0xFF800000> : vector<128xf32>
    %75 = vector.multi_reduction <maximumf>, %74, %cst_22 [1] : vector<128x128xf32> to vector<128xf32>
    %76 = vector.shape_cast %75 : vector<128xf32> to vector<128x1xf32>
    %77 = vector.broadcast %76 : vector<128x1xf32> to vector<128x128xf32>
    %78 = arith.subf %74, %77 : vector<128x128xf32>
    %79 = math.exp %78 : vector<128x128xf32>
    %cst_23 = arith.constant dense<0.000000e+00> : vector<128xf32>
    %80 = vector.multi_reduction <add>, %79, %cst_23 [1] : vector<128x128xf32> to vector<128xf32>
    %81 = vector.shape_cast %80 : vector<128xf32> to vector<128x1xf32>
    %cst_24 = arith.constant 5.65685415 : f32
    %82 = vector.broadcast %cst_24 : f32 to vector<128x1xf32>
    %83 = arith.mulf %81, %82 : vector<128x1xf32>
    %84 = tpu.reciprocal %83 {approx = true} : vector<128x1xf32> -> vector<128x1xf32>
    %85 = vector.broadcast %84 : vector<128x1xf32> to vector<128x128xf32>
    %86 = arith.mulf %79, %85 : vector<128x128xf32>
    %87 = arith.truncf %86 : vector<128x128xf32> to vector<128x128xbf16>
    %cst_25 = arith.constant dense<0.000000e+00> : vector<4x128xf32>
    %88 = tpu.matmul %69, %87, %cst_25 {dimension_numbers = #tpu.dot_dimension_numbers<[1], [1], [0], [0], [0, 0, 1, 0], [], []>} : vector<4x128xbf16>, vector<128x128xbf16>, vector<4x128xf32> -> vector<4x128xf32>
    %89 = arith.truncf %88 : vector<4x128xf32> to vector<4x128xbf16>
    %90 = vector.extract_strided_slice %8 {offsets = [12, 0], sizes = [4, 128], strides = [1, 1]} : vector<96x128xf32> to vector<4x128xf32>
    %91 = arith.truncf %90 : vector<4x128xf32> to vector<4x128xbf16>
    %92 = vector.extract_strided_slice %8 {offsets = [44, 0], sizes = [4, 128], strides = [1, 1]} : vector<96x128xf32> to vector<4x128xf32>
    %93 = arith.truncf %92 : vector<4x128xf32> to vector<4x128xbf16>
    %94 = vector.extract_strided_slice %8 {offsets = [76, 0], sizes = [4, 128], strides = [1, 1]} : vector<96x128xf32> to vector<4x128xf32>
    %95 = arith.truncf %94 : vector<4x128xf32> to vector<4x128xbf16>
    %cst_26 = arith.constant dense<0.000000e+00> : vector<128x128xf32>
    %96 = tpu.matmul %91, %93, %cst_26 {dimension_numbers = #tpu.dot_dimension_numbers<[0], [0], [1], [1], [0, 1, 1, 1], [], []>} : vector<4x128xbf16>, vector<4x128xbf16>, vector<128x128xf32> -> vector<128x128xf32>
    %cst_27 = arith.constant -3.40282347E+38 : f32
    %97 = vector.shape_cast %11 : vector<1x128xi1> to vector<1x128xi1>
    %98 = vector.broadcast %97 : vector<1x128xi1> to vector<128x128xi1>
    %99 = vector.broadcast %cst_27 : f32 to vector<128x128xf32>
    %100 = arith.select %98, %96, %99 : vector<128x128xi1>, vector<128x128xf32>
    %cst_28 = arith.constant dense<0xFF800000> : vector<128xf32>
    %101 = vector.multi_reduction <maximumf>, %100, %cst_28 [1] : vector<128x128xf32> to vector<128xf32>
    %102 = vector.shape_cast %101 : vector<128xf32> to vector<128x1xf32>
    %103 = vector.broadcast %102 : vector<128x1xf32> to vector<128x128xf32>
    %104 = arith.subf %100, %103 : vector<128x128xf32>
    %105 = math.exp %104 : vector<128x128xf32>
    %cst_29 = arith.constant dense<0.000000e+00> : vector<128xf32>
    %106 = vector.multi_reduction <add>, %105, %cst_29 [1] : vector<128x128xf32> to vector<128xf32>
    %107 = vector.shape_cast %106 : vector<128xf32> to vector<128x1xf32>
    %cst_30 = arith.constant 5.65685415 : f32
    %108 = vector.broadcast %cst_30 : f32 to vector<128x1xf32>
    %109 = arith.mulf %107, %108 : vector<128x1xf32>
    %110 = tpu.reciprocal %109 {approx = true} : vector<128x1xf32> -> vector<128x1xf32>
    %111 = vector.broadcast %110 : vector<128x1xf32> to vector<128x128xf32>
    %112 = arith.mulf %105, %111 : vector<128x128xf32>
    %113 = arith.truncf %112 : vector<128x128xf32> to vector<128x128xbf16>
    %cst_31 = arith.constant dense<0.000000e+00> : vector<4x128xf32>
    %114 = tpu.matmul %95, %113, %cst_31 {dimension_numbers = #tpu.dot_dimension_numbers<[1], [1], [0], [0], [0, 0, 1, 0], [], []>} : vector<4x128xbf16>, vector<128x128xbf16>, vector<4x128xf32> -> vector<4x128xf32>
    %115 = arith.truncf %114 : vector<4x128xf32> to vector<4x128xbf16>
    %116 = vector.extract_strided_slice %8 {offsets = [16, 0], sizes = [4, 128], strides = [1, 1]} : vector<96x128xf32> to vector<4x128xf32>
    %117 = arith.truncf %116 : vector<4x128xf32> to vector<4x128xbf16>
    %118 = vector.extract_strided_slice %8 {offsets = [48, 0], sizes = [4, 128], strides = [1, 1]} : vector<96x128xf32> to vector<4x128xf32>
    %119 = arith.truncf %118 : vector<4x128xf32> to vector<4x128xbf16>
    %120 = vector.extract_strided_slice %8 {offsets = [80, 0], sizes = [4, 128], strides = [1, 1]} : vector<96x128xf32> to vector<4x128xf32>
    %121 = arith.truncf %120 : vector<4x128xf32> to vector<4x128xbf16>
    %cst_32 = arith.constant dense<0.000000e+00> : vector<128x128xf32>
    %122 = tpu.matmul %117, %119, %cst_32 {dimension_numbers = #tpu.dot_dimension_numbers<[0], [0], [1], [1], [0, 1, 1, 1], [], []>} : vector<4x128xbf16>, vector<4x128xbf16>, vector<128x128xf32> -> vector<128x128xf32>
    %cst_33 = arith.constant -3.40282347E+38 : f32
    %123 = vector.shape_cast %11 : vector<1x128xi1> to vector<1x128xi1>
    %124 = vector.broadcast %123 : vector<1x128xi1> to vector<128x128xi1>
    %125 = vector.broadcast %cst_33 : f32 to vector<128x128xf32>
    %126 = arith.select %124, %122, %125 : vector<128x128xi1>, vector<128x128xf32>
    %cst_34 = arith.constant dense<0xFF800000> : vector<128xf32>
    %127 = vector.multi_reduction <maximumf>, %126, %cst_34 [1] : vector<128x128xf32> to vector<128xf32>
    %128 = vector.shape_cast %127 : vector<128xf32> to vector<128x1xf32>
    %129 = vector.broadcast %128 : vector<128x1xf32> to vector<128x128xf32>
    %130 = arith.subf %126, %129 : vector<128x128xf32>
    %131 = math.exp %130 : vector<128x128xf32>
    %cst_35 = arith.constant dense<0.000000e+00> : vector<128xf32>
    %132 = vector.multi_reduction <add>, %131, %cst_35 [1] : vector<128x128xf32> to vector<128xf32>
    %133 = vector.shape_cast %132 : vector<128xf32> to vector<128x1xf32>
    %cst_36 = arith.constant 5.65685415 : f32
    %134 = vector.broadcast %cst_36 : f32 to vector<128x1xf32>
    %135 = arith.mulf %133, %134 : vector<128x1xf32>
    %136 = tpu.reciprocal %135 {approx = true} : vector<128x1xf32> -> vector<128x1xf32>
    %137 = vector.broadcast %136 : vector<128x1xf32> to vector<128x128xf32>
    %138 = arith.mulf %131, %137 : vector<128x128xf32>
    %139 = arith.truncf %138 : vector<128x128xf32> to vector<128x128xbf16>
    %cst_37 = arith.constant dense<0.000000e+00> : vector<4x128xf32>
    %140 = tpu.matmul %121, %139, %cst_37 {dimension_numbers = #tpu.dot_dimension_numbers<[1], [1], [0], [0], [0, 0, 1, 0], [], []>} : vector<4x128xbf16>, vector<128x128xbf16>, vector<4x128xf32> -> vector<4x128xf32>
    %141 = arith.truncf %140 : vector<4x128xf32> to vector<4x128xbf16>
    %142 = vector.extract_strided_slice %8 {offsets = [20, 0], sizes = [4, 128], strides = [1, 1]} : vector<96x128xf32> to vector<4x128xf32>
    %143 = arith.truncf %142 : vector<4x128xf32> to vector<4x128xbf16>
    %144 = vector.extract_strided_slice %8 {offsets = [52, 0], sizes = [4, 128], strides = [1, 1]} : vector<96x128xf32> to vector<4x128xf32>
    %145 = arith.truncf %144 : vector<4x128xf32> to vector<4x128xbf16>
    %146 = vector.extract_strided_slice %8 {offsets = [84, 0], sizes = [4, 128], strides = [1, 1]} : vector<96x128xf32> to vector<4x128xf32>
    %147 = arith.truncf %146 : vector<4x128xf32> to vector<4x128xbf16>
    %cst_38 = arith.constant dense<0.000000e+00> : vector<128x128xf32>
    %148 = tpu.matmul %143, %145, %cst_38 {dimension_numbers = #tpu.dot_dimension_numbers<[0], [0], [1], [1], [0, 1, 1, 1], [], []>} : vector<4x128xbf16>, vector<4x128xbf16>, vector<128x128xf32> -> vector<128x128xf32>
    %cst_39 = arith.constant -3.40282347E+38 : f32
    %149 = vector.shape_cast %11 : vector<1x128xi1> to vector<1x128xi1>
    %150 = vector.broadcast %149 : vector<1x128xi1> to vector<128x128xi1>
    %151 = vector.broadcast %cst_39 : f32 to vector<128x128xf32>
    %152 = arith.select %150, %148, %151 : vector<128x128xi1>, vector<128x128xf32>
    %cst_40 = arith.constant dense<0xFF800000> : vector<128xf32>
    %153 = vector.multi_reduction <maximumf>, %152, %cst_40 [1] : vector<128x128xf32> to vector<128xf32>
    %154 = vector.shape_cast %153 : vector<128xf32> to vector<128x1xf32>
    %155 = vector.broadcast %154 : vector<128x1xf32> to vector<128x128xf32>
    %156 = arith.subf %152, %155 : vector<128x128xf32>
    %157 = math.exp %156 : vector<128x128xf32>
    %cst_41 = arith.constant dense<0.000000e+00> : vector<128xf32>
    %158 = vector.multi_reduction <add>, %157, %cst_41 [1] : vector<128x128xf32> to vector<128xf32>
    %159 = vector.shape_cast %158 : vector<128xf32> to vector<128x1xf32>
    %cst_42 = arith.constant 5.65685415 : f32
    %160 = vector.broadcast %cst_42 : f32 to vector<128x1xf32>
    %161 = arith.mulf %159, %160 : vector<128x1xf32>
    %162 = tpu.reciprocal %161 {approx = true} : vector<128x1xf32> -> vector<128x1xf32>
    %163 = vector.broadcast %162 : vector<128x1xf32> to vector<128x128xf32>
    %164 = arith.mulf %157, %163 : vector<128x128xf32>
    %165 = arith.truncf %164 : vector<128x128xf32> to vector<128x128xbf16>
    %cst_43 = arith.constant dense<0.000000e+00> : vector<4x128xf32>
    %166 = tpu.matmul %147, %165, %cst_43 {dimension_numbers = #tpu.dot_dimension_numbers<[1], [1], [0], [0], [0, 0, 1, 0], [], []>} : vector<4x128xbf16>, vector<128x128xbf16>, vector<4x128xf32> -> vector<4x128xf32>
    %167 = arith.truncf %166 : vector<4x128xf32> to vector<4x128xbf16>
    %168 = vector.extract_strided_slice %8 {offsets = [24, 0], sizes = [4, 128], strides = [1, 1]} : vector<96x128xf32> to vector<4x128xf32>
    %169 = arith.truncf %168 : vector<4x128xf32> to vector<4x128xbf16>
    %170 = vector.extract_strided_slice %8 {offsets = [56, 0], sizes = [4, 128], strides = [1, 1]} : vector<96x128xf32> to vector<4x128xf32>
    %171 = arith.truncf %170 : vector<4x128xf32> to vector<4x128xbf16>
    %172 = vector.extract_strided_slice %8 {offsets = [88, 0], sizes = [4, 128], strides = [1, 1]} : vector<96x128xf32> to vector<4x128xf32>
    %173 = arith.truncf %172 : vector<4x128xf32> to vector<4x128xbf16>
    %cst_44 = arith.constant dense<0.000000e+00> : vector<128x128xf32>
    %174 = tpu.matmul %169, %171, %cst_44 {dimension_numbers = #tpu.dot_dimension_numbers<[0], [0], [1], [1], [0, 1, 1, 1], [], []>} : vector<4x128xbf16>, vector<4x128xbf16>, vector<128x128xf32> -> vector<128x128xf32>
    %cst_45 = arith.constant -3.40282347E+38 : f32
    %175 = vector.shape_cast %11 : vector<1x128xi1> to vector<1x128xi1>
    %176 = vector.broadcast %175 : vector<1x128xi1> to vector<128x128xi1>
    %177 = vector.broadcast %cst_45 : f32 to vector<128x128xf32>
    %178 = arith.select %176, %174, %177 : vector<128x128xi1>, vector<128x128xf32>
    %cst_46 = arith.constant dense<0xFF800000> : vector<128xf32>
    %179 = vector.multi_reduction <maximumf>, %178, %cst_46 [1] : vector<128x128xf32> to vector<128xf32>
    %180 = vector.shape_cast %179 : vector<128xf32> to vector<128x1xf32>
    %181 = vector.broadcast %180 : vector<128x1xf32> to vector<128x128xf32>
    %182 = arith.subf %178, %181 : vector<128x128xf32>
    %183 = math.exp %182 : vector<128x128xf32>
    %cst_47 = arith.constant dense<0.000000e+00> : vector<128xf32>
    %184 = vector.multi_reduction <add>, %183, %cst_47 [1] : vector<128x128xf32> to vector<128xf32>
    %185 = vector.shape_cast %184 : vector<128xf32> to vector<128x1xf32>
    %cst_48 = arith.constant 5.65685415 : f32
    %186 = vector.broadcast %cst_48 : f32 to vector<128x1xf32>
    %187 = arith.mulf %185, %186 : vector<128x1xf32>
    %188 = tpu.reciprocal %187 {approx = true} : vector<128x1xf32> -> vector<128x1xf32>
    %189 = vector.broadcast %188 : vector<128x1xf32> to vector<128x128xf32>
    %190 = arith.mulf %183, %189 : vector<128x128xf32>
    %191 = arith.truncf %190 : vector<128x128xf32> to vector<128x128xbf16>
    %cst_49 = arith.constant dense<0.000000e+00> : vector<4x128xf32>
    %192 = tpu.matmul %173, %191, %cst_49 {dimension_numbers = #tpu.dot_dimension_numbers<[1], [1], [0], [0], [0, 0, 1, 0], [], []>} : vector<4x128xbf16>, vector<128x128xbf16>, vector<4x128xf32> -> vector<4x128xf32>
    %193 = arith.truncf %192 : vector<4x128xf32> to vector<4x128xbf16>
    %194 = vector.extract_strided_slice %8 {offsets = [28, 0], sizes = [4, 128], strides = [1, 1]} : vector<96x128xf32> to vector<4x128xf32>
    %195 = arith.truncf %194 : vector<4x128xf32> to vector<4x128xbf16>
    %196 = vector.extract_strided_slice %8 {offsets = [60, 0], sizes = [4, 128], strides = [1, 1]} : vector<96x128xf32> to vector<4x128xf32>
    %197 = arith.truncf %196 : vector<4x128xf32> to vector<4x128xbf16>
    %198 = vector.extract_strided_slice %8 {offsets = [92, 0], sizes = [4, 128], strides = [1, 1]} : vector<96x128xf32> to vector<4x128xf32>
    %199 = arith.truncf %198 : vector<4x128xf32> to vector<4x128xbf16>
    %cst_50 = arith.constant dense<0.000000e+00> : vector<128x128xf32>
    %200 = tpu.matmul %195, %197, %cst_50 {dimension_numbers = #tpu.dot_dimension_numbers<[0], [0], [1], [1], [0, 1, 1, 1], [], []>} : vector<4x128xbf16>, vector<4x128xbf16>, vector<128x128xf32> -> vector<128x128xf32>
    %cst_51 = arith.constant -3.40282347E+38 : f32
    %201 = vector.shape_cast %11 : vector<1x128xi1> to vector<1x128xi1>
    %202 = vector.broadcast %201 : vector<1x128xi1> to vector<128x128xi1>
    %203 = vector.broadcast %cst_51 : f32 to vector<128x128xf32>
    %204 = arith.select %202, %200, %203 : vector<128x128xi1>, vector<128x128xf32>
    %cst_52 = arith.constant dense<0xFF800000> : vector<128xf32>
    %205 = vector.multi_reduction <maximumf>, %204, %cst_52 [1] : vector<128x128xf32> to vector<128xf32>
    %206 = vector.shape_cast %205 : vector<128xf32> to vector<128x1xf32>
    %207 = vector.broadcast %206 : vector<128x1xf32> to vector<128x128xf32>
    %208 = arith.subf %204, %207 : vector<128x128xf32>
    %209 = math.exp %208 : vector<128x128xf32>
    %cst_53 = arith.constant dense<0.000000e+00> : vector<128xf32>
    %210 = vector.multi_reduction <add>, %209, %cst_53 [1] : vector<128x128xf32> to vector<128xf32>
    %211 = vector.shape_cast %210 : vector<128xf32> to vector<128x1xf32>
    %cst_54 = arith.constant 5.65685415 : f32
    %212 = vector.broadcast %cst_54 : f32 to vector<128x1xf32>
    %213 = arith.mulf %211, %212 : vector<128x1xf32>
    %214 = tpu.reciprocal %213 {approx = true} : vector<128x1xf32> -> vector<128x1xf32>
    %215 = vector.broadcast %214 : vector<128x1xf32> to vector<128x128xf32>
    %216 = arith.mulf %209, %215 : vector<128x128xf32>
    %217 = arith.truncf %216 : vector<128x128xf32> to vector<128x128xbf16>
    %cst_55 = arith.constant dense<0.000000e+00> : vector<4x128xf32>
    %218 = tpu.matmul %199, %217, %cst_55 {dimension_numbers = #tpu.dot_dimension_numbers<[1], [1], [0], [0], [0, 0, 1, 0], [], []>} : vector<4x128xbf16>, vector<128x128xbf16>, vector<4x128xf32> -> vector<4x128xf32>
    %219 = arith.truncf %218 : vector<4x128xf32> to vector<4x128xbf16>
    %220 = tpu.concatenate %37, %63, %89, %115, %141, %167, %193, %219 in 0 : vector<4x128xbf16>, vector<4x128xbf16>, vector<4x128xbf16>, vector<4x128xbf16>, vector<4x128xbf16>, vector<4x128xbf16>, vector<4x128xbf16>, vector<4x128xbf16> -> vector<32x128xbf16>
    %c0_56 = arith.constant 0 : index
    %c0_57 = arith.constant 0 : index
    %c0_58 = arith.constant 0 : index
    %221 = vector.load %arg5[%c0_56, %c0_57, %c0_58] : memref<1x32x128xbf16, #tpu.memory_space<vmem>>, vector<1x32x128xbf16>
    %222 = vector.shape_cast %221 : vector<1x32x128xbf16> to vector<32x128xbf16>
    %cst_59 = arith.constant dense<0.000000e+00> : vector<128x128xf32>
    %223 = tpu.matmul %220, %222, %cst_59 {dimension_numbers = #tpu.dot_dimension_numbers<[0], [0], [1], [1], [0, 1, 1, 1], [], []>} : vector<32x128xbf16>, vector<32x128xbf16>, vector<128x128xf32> -> vector<128x128xf32>
    %c0_i32 = arith.constant 0 : i32
    %224 = arith.cmpi eq, %arg1, %c0_i32 : i32
    %225 = arith.extui %224 : i1 to i32
    %c0_i32_60 = arith.constant 0 : i32
    %226 = arith.cmpi ne, %225, %c0_i32_60 : i32
    scf.if %226 {
      %c0_65 = arith.constant 0 : index
      %c0_66 = arith.constant 0 : index
      %233 = vector.load %arg6[%c0_65, %c0_66] : memref<1x128xf32, #tpu.memory_space<vmem>>, vector<1x128xf32>
      %234 = vector.broadcast %233 : vector<1x128xf32> to vector<128x128xf32>
      %235 = arith.addf %223, %234 : vector<128x128xf32>
      %c0_67 = arith.constant 0 : index
      %c0_68 = arith.constant 0 : index
      %236 = vector.load %arg8[%c0_67, %c0_68] : memref<128x128xf32, #tpu.memory_space<vmem>>, vector<128x128xf32>
      tpu.vector_store %arg8[%c0_67, %c0_68], %235 {strides = array<i32>} : memref<128x128xf32, #tpu.memory_space<vmem>>, vector<128x128xf32>,
    } else {
    }
    %c0_i32_61 = arith.constant 0 : i32
    %227 = arith.cmpi sgt, %arg1, %c0_i32_61 : i32
    %228 = arith.extui %227 : i1 to i32
    %c0_i32_62 = arith.constant 0 : i32
    %229 = arith.cmpi ne, %228, %c0_i32_62 : i32
    scf.if %229 {
      %c0_65 = arith.constant 0 : index
      %c0_66 = arith.constant 0 : index
      %233 = vector.load %arg8[%c0_65, %c0_66] : memref<128x128xf32, #tpu.memory_space<vmem>>, vector<128x128xf32>
      %234 = arith.addf %233, %223 : vector<128x128xf32>
      %c0_67 = arith.constant 0 : index
      %c0_68 = arith.constant 0 : index
      %235 = vector.load %arg8[%c0_67, %c0_68] : memref<128x128xf32, #tpu.memory_space<vmem>>, vector<128x128xf32>
      tpu.vector_store %arg8[%c0_67, %c0_68], %234 {strides = array<i32>} : memref<128x128xf32, #tpu.memory_space<vmem>>, vector<128x128xf32>,
    } else {
    }
    %c0_i32_63 = arith.constant 0 : i32
    %230 = arith.cmpi eq, %arg1, %c0_i32_63 : i32
    %231 = arith.extui %230 : i1 to i32
    %c0_i32_64 = arith.constant 0 : i32
    %232 = arith.cmpi ne, %231, %c0_i32_64 : i32
    scf.if %232 {
      %c0_65 = arith.constant 0 : index
      %c0_66 = arith.constant 0 : index
      %233 = vector.load %arg8[%c0_65, %c0_66] : memref<128x128xf32, #tpu.memory_space<vmem>>, vector<128x128xf32>
      %c0_67 = arith.constant 0 : index
      %c0_68 = arith.constant 0 : index
      %c0_69 = arith.constant 0 : index
      %234 = vector.load %arg7[%c0_67, %c0_68, %c0_69] : memref<1x128x128xf32, #tpu.memory_space<vmem>>, vector<1x128x128xf32>
      %235 = vector.shape_cast %234 : vector<1x128x128xf32> to vector<128x128xf32>
      %236 = vector.shape_cast %233 : vector<128x128xf32> to vector<1x128x128xf32>
      tpu.vector_store %arg7[%c0_67, %c0_68, %c0_69], %236 {strides = array<i32>} : memref<1x128x128xf32, #tpu.memory_space<vmem>>, vector<1x128x128xf32>,
    } else {
    }
    return
  }
  func.func @transform_0(%arg0: i32, %arg1: i32) -> (i32, i32, i32) {
    %c0_i32 = arith.constant 0 : i32
    %c0_i32_0 = arith.constant 0 : i32
    %c0_i32_1 = arith.constant 0 : i32
    return %arg0, %c0_i32, %c0_i32_0 : i32, i32, i32
  }
  func.func @transform_1(%arg0: i32, %arg1: i32) -> (i32, i32, i32) {
    %c0_i32 = arith.constant 0 : i32
    %c0_i32_0 = arith.constant 0 : i32
    %c0_i32_1 = arith.constant 0 : i32
    return %arg1, %c0_i32, %c0_i32_0 : i32, i32, i32
  }
  func.func @transform_2(%arg0: i32, %arg1: i32) -> (i32, i32, i32) {
    %c0_i32 = arith.constant 0 : i32
    %c0_i32_0 = arith.constant 0 : i32
    %c0_i32_1 = arith.constant 0 : i32
    return %arg1, %c0_i32, %c0_i32_0 : i32, i32, i32
  }
  func.func @transform_3(%arg0: i32, %arg1: i32) -> (i32, i32, i32) {
    %c0_i32 = arith.constant 0 : i32
    %c0_i32_0 = arith.constant 0 : i32
    %c0_i32_1 = arith.constant 0 : i32
    return %arg1, %c0_i32, %c0_i32_0 : i32, i32, i32
  }
  func.func @transform_4(%arg0: i32, %arg1: i32) -> (i32, i32) {
    %c0_i32 = arith.constant 0 : i32
    %c0_i32_0 = arith.constant 0 : i32
    %c0_i32_1 = arith.constant 0 : i32
    return %c0_i32, %c0_i32_0 : i32, i32
  }
  func.func @transform_5(%arg0: i32, %arg1: i32) -> (i32, i32, i32) {
    %c0_i32 = arith.constant 0 : i32
    %c0_i32_0 = arith.constant 0 : i32
    %c0_i32_1 = arith.constant 0 : i32
    return %arg0, %c0_i32, %c0_i32_0 : i32, i32, i32
  }
}

</mosaic_0001>

<llo_original>
// kernel: tpu_custom_call.1
$region0: #{tpu_custom_call.1}
  #allocation0 [shape = 'u32[]', space=smem, size = 0x4, offset = 0x4, fixed_abs, tag = 'smem constant byte address 0x4 - core index']
  #allocation1 [shape = 'u32[144,128]{1,0:T(1,128)}', space=vmem, size = 0x12000, scoped, tag = 'internal scratch']
  #allocation2 [shape = 'f32[128,128]{1,0:T(8,128)}', space=vmem, size = 0x10000, scoped, tag = 'scratch operand']
  %s0 = inlined_call_operand.hbm [shape: bf16[2,128,128], index: 0, kind: input, shape index: {}]
  %s1 = inlined_call_operand.hbm [shape: bf16[1,96,128], index: 1, kind: input, shape index: {}]
  %s2 = inlined_call_operand.hbm [shape: f32[1,96,1], index: 2, kind: input, shape index: {}]
  %s3 = inlined_call_operand.hbm [shape: bf16[1,32,128], index: 3, kind: input, shape index: {}]
  %s4 = inlined_call_operand.hbm [shape: f32[1,128], index: 4, kind: input, shape index: {}]
  %s5 = inlined_call_operand.hbm [shape: f32[2,128,128], index: 5, kind: output, shape index: {}]
  %s6 = sld [smem:[#allocation0]]
  $region85: #{tpu_custom_call.1} parent=0
    _
  %s8 = ssub.s32 1, %s6
  %s9 = scalar_select 0, %s8, %s6
  $region1: #{tpu_custom_call.1} parent=0
    #allocation3 [shape = 'u8[65536]{0}', space=vmem, size = 0x10000, scoped, tag = 'input window, operand 0']
    #allocation4 [shape = 's32[2]{0}', space=sflag, size = 0x8, scoped, tag = 'scoped memory for tpu_custom_call.1']
    #allocation5 [shape = 's32[2]{0}', space=sflag, size = 0x8, scoped, tag = 'scoped memory for tpu_custom_call.1']
    #allocation6 [shape = 'u8[24576]{0}', space=vmem, size = 0x6000, scoped, tag = 'input window, operand 1, single buffered']
    #allocation7 [shape = 's32[1]{0}', space=sflag, size = 0x4, scoped, tag = 'scoped memory for tpu_custom_call.1']
    #allocation8 [shape = 'u8[49152]{0}', space=vmem, size = 0xc000, scoped, tag = 'input window, operand 2, single buffered']
    #allocation9 [shape = 'u8[8192]{0}', space=vmem, size = 0x2000, scoped, tag = 'input window, operand 3, single buffered']
    #allocation10 [shape = 's32[1]{0}', space=sflag, size = 0x4, scoped, tag = 'scoped memory for tpu_custom_call.1']
    #allocation11 [shape = 'u8[512]{0}', space=vmem, size = 0x400, scoped, tag = 'input window, operand 4, single buffered']
    #allocation12 [shape = 'u8[131072]{0}', space=vmem, size = 0x20000, scoped, tag = 'output window, operand 0']
    %10 = vsyncpa [#allocation4], 0
    %s11 = scalar_lea.sflag [#allocation4], 1
    %12 = vsyncpa %s11, 0
    %13 = vsyncpa [#allocation7], 0
    %14 = vsyncpa [#allocation10], 0
    %15 = vsyncpa [#allocation5], 0
    %s16 = scalar_lea.sflag [#allocation5], 1
    %17 = vsyncpa %s16, 0
    loop: start=0, step=1, limit=4
    $region2: #{tpu_custom_call.1} parent=1 // loop_pre_header
      _
    $region3: #{tpu_custom_call.1} parent=1 // loop_header
      %s19 = sphi 0, %s23
      %p20 = scmp.ge.s32.totalorder %s19, 4
      %s26 = sphi 0, %s38
      %s27 = sphi 0, %s34
      %s28 = sphi 0, %s26
      %s29 = sphi 0, %s27
      %s30 = sphi 0, %s28
      %s31 = sphi 0, %s29
      %s41 = sphi 0, %s43
      %s44 = sphi 0, %s41
      %s45 = sphi 0, %s44
      %s61 = sphi 0, %s45
      %s67 = sphi 0, %s69
      %s70 = sphi 0, %s67
      %s71 = sphi 0, %s70
      %s87 = sphi 0, %s71
      %s93 = sphi 0, %s95
      %s96 = sphi 0, %s93
      %s97 = sphi 0, %s96
      %s113 = sphi 0, %s97
      %s119 = sphi 0, %s121
      %s122 = sphi 0, %s119
      %s123 = sphi 0, %s122
      %s139 = sphi 0, %s123
      %s143 = sphi 0, %s143
      %s145 = sphi 0, %s143
      %s146 = sphi 0, %s145
      %s160 = sphi 0, %s146
      %s166 = sphi 0, %s168
      %s169 = sphi 0, %s166
      %s170 = sphi 0, %s169
      %s186 = sphi 0, %s170
    $region4: #{tpu_custom_call.1} parent=1 // loop_header_branch
      %22 = sbr.rel (%p20) target = $region8
    $region5: #{tpu_custom_call.1} parent=1 // loop_body
      %s24 = ssub.s32 %s19, 1
      %s25 = ssub.s32 %s19, 2
      %s32 = sadd.s32 1, %s27
      %p33 = scmp.ge.s32.totalorder %s32, 1
      %s34 = scalar_select %p33, 0, %s32
      %s35 = sadd.s32 1, %s26
      %s36 = scalar_select %p33, %s35, %s26
      %p37 = scmp.ge.s32.totalorder %s36, 2
      %s38 = scalar_select %p37, 0, %s36
      %s39 = ssub.s32 %s26, %s38
      %p40 = scmp.eq.s32.totalorder %s39, 0
      %s42 = sadd.s32 %s41, 1
      %s43 = scalar_select %p40, %s41, %s42
      %p46 = pneg %p40
      %p47 = scmp.eq.s32.totalorder %s19, 1
      %p48 = por %p46, %p47
      %p49 = scmp.ne.s32.totalorder %s41, %s44
      %p50 = scmp.eq.s32.totalorder %s19, 0
      %p51 = por %p49, %p50
      %p52 = scmp.ne.s32.totalorder %s41, %s44
      %p53 = scmp.eq.s32.totalorder %s24, 1
      %p54 = por %p52, %p53
      %p55 = scmp.ne.s32.totalorder %s44, %s45
      %p56 = scmp.eq.s32.totalorder %s24, 0
      %p57 = por %p55, %p56
      %p58 = scmp.ne.s32.totalorder %s44, %s45
      %p59 = scmp.eq.s32.totalorder %s25, 1
      %p60 = por %p58, %p59
      %p62 = scmp.ne.s32.totalorder %s45, %s61
      %p63 = scmp.eq.s32.totalorder %s25, 0
      %p64 = por %p62, %p63
      %s65 = ssub.s32 %s27, %s34
      %p66 = scmp.eq.s32.totalorder %s65, 0
      %s68 = sadd.s32 %s67, 1
      %s69 = scalar_select %p66, %s67, %s68
      %p72 = pneg %p66
      %p73 = scmp.eq.s32.totalorder %s19, 1
      %p74 = por %p72, %p73
      %p75 = scmp.ne.s32.totalorder %s67, %s70
      %p76 = scmp.eq.s32.totalorder %s19, 0
      %p77 = por %p75, %p76
      %p78 = scmp.ne.s32.totalorder %s67, %s70
      %p79 = scmp.eq.s32.totalorder %s24, 1
      %p80 = por %p78, %p79
      %p81 = scmp.ne.s32.totalorder %s70, %s71
      %p82 = scmp.eq.s32.totalorder %s24, 0
      %p83 = por %p81, %p82
      %p84 = scmp.ne.s32.totalorder %s70, %s71
      %p85 = scmp.eq.s32.totalorder %s25, 1
      %p86 = por %p84, %p85
      %p88 = scmp.ne.s32.totalorder %s71, %s87
      %p89 = scmp.eq.s32.totalorder %s25, 0
      %p90 = por %p88, %p89
      %s91 = ssub.s32 %s27, %s34
      %p92 = scmp.eq.s32.totalorder %s91, 0
      %s94 = sadd.s32 %s93, 1
      %s95 = scalar_select %p92, %s93, %s94
      %p98 = pneg %p92
      %p99 = scmp.eq.s32.totalorder %s19, 1
      %p100 = por %p98, %p99
      %p101 = scmp.ne.s32.totalorder %s93, %s96
      %p102 = scmp.eq.s32.totalorder %s19, 0
      %p103 = por %p101, %p102
      %p104 = scmp.ne.s32.totalorder %s93, %s96
      %p105 = scmp.eq.s32.totalorder %s24, 1
      %p106 = por %p104, %p105
      %p107 = scmp.ne.s32.totalorder %s96, %s97
      %p108 = scmp.eq.s32.totalorder %s24, 0
      %p109 = por %p107, %p108
      %p110 = scmp.ne.s32.totalorder %s96, %s97
      %p111 = scmp.eq.s32.totalorder %s25, 1
      %p112 = por %p110, %p111
      %p114 = scmp.ne.s32.totalorder %s97, %s113
      %p115 = scmp.eq.s32.totalorder %s25, 0
      %p116 = por %p114, %p115
      %s117 = ssub.s32 %s27, %s34
      %p118 = scmp.eq.s32.totalorder %s117, 0
      %s120 = sadd.s32 %s119, 1
      %s121 = scalar_select %p118, %s119, %s120
      %p124 = pneg %p118
      %p125 = scmp.eq.s32.totalorder %s19, 1
      %p126 = por %p124, %p125
      %p127 = scmp.ne.s32.totalorder %s119, %s122
      %p128 = scmp.eq.s32.totalorder %s19, 0
      %p129 = por %p127, %p128
      %p130 = scmp.ne.s32.totalorder %s119, %s122
      %p131 = scmp.eq.s32.totalorder %s24, 1
      %p132 = por %p130, %p131
      %p133 = scmp.ne.s32.totalorder %s122, %s123
      %p134 = scmp.eq.s32.totalorder %s24, 0
      %p135 = por %p133, %p134
      %p136 = scmp.ne.s32.totalorder %s122, %s123
      %p137 = scmp.eq.s32.totalorder %s25, 1
      %p138 = por %p136, %p137
      %p140 = scmp.ne.s32.totalorder %s123, %s139
      %p141 = scmp.eq.s32.totalorder %s25, 0
      %p142 = por %p140, %p141
      %s144 = sadd.s32 %s143, 1
      %p147 = scmp.eq.s32.totalorder %s19, 1
      %p148 = scmp.ne.s32.totalorder %s143, %s145
      %p149 = scmp.eq.s32.totalorder %s19, 0
      %p150 = por %p148, %p149
      %p151 = scmp.ne.s32.totalorder %s143, %s145
      %p152 = scmp.eq.s32.totalorder %s24, 1
      %p153 = por %p151, %p152
      %p154 = scmp.ne.s32.totalorder %s145, %s146
      %p155 = scmp.eq.s32.totalorder %s24, 0
      %p156 = por %p154, %p155
      %p157 = scmp.ne.s32.totalorder %s145, %s146
      %p158 = scmp.eq.s32.totalorder %s25, 1
      %p159 = por %p157, %p158
      %p161 = scmp.ne.s32.totalorder %s146, %s160
      %p162 = scmp.eq.s32.totalorder %s25, 0
      %p163 = por %p161, %p162
      %s164 = ssub.s32 %s26, %s38
      %p165 = scmp.eq.s32.totalorder %s164, 0
      %s167 = sadd.s32 %s166, 1
      %s168 = scalar_select %p165, %s166, %s167
      %p171 = pneg %p165
      %p172 = scmp.eq.s32.totalorder %s19, 1
      %p173 = por %p171, %p172
      %p174 = scmp.ne.s32.totalorder %s166, %s169
      %p175 = scmp.eq.s32.totalorder %s19, 0
      %p176 = por %p174, %p175
      %p177 = scmp.ne.s32.totalorder %s166, %s169
      %p178 = scmp.eq.s32.totalorder %s24, 1
      %p179 = por %p177, %p178
      %p180 = scmp.ne.s32.totalorder %s169, %s170
      %p181 = scmp.eq.s32.totalorder %s24, 0
      %p182 = por %p180, %p181
      %p183 = scmp.ne.s32.totalorder %s169, %s170
      %p184 = scmp.eq.s32.totalorder %s25, 1
      %p185 = por %p183, %p184
      %p187 = scmp.ne.s32.totalorder %s170, %s186
      %p188 = scmp.eq.s32.totalorder %s25, 0
      %p189 = por %p187, %p188
      %p190 = scmp.le.s32.totalorder 1, %s19
      %p191 = scmp.lt.s32.totalorder %s19, 3
      %p192 = pnand %p190, %p191
      %p193 = pneg %p192
      // Predicated region
      $region9: #{tpu_custom_call.1} parent=5 // pred_check
        _
      $region10: #{tpu_custom_call.1} parent=5 // pred_check_branch
        %195 = sbr.rel (%p192) target = $region12
      $region11: #{tpu_custom_call.1} parent=5 // pred_region
        %s196 = ssub.s32 %s19, 1
        // Predicated region
        $region13: #{tpu_custom_call.1} parent=11 // pred_check
          %p197 = pneg %p83
        $region14: #{tpu_custom_call.1} parent=11 // pred_check_branch
          %199 = sbr.rel (%p197) target = $region16
        $region15: #{tpu_custom_call.1} parent=11 // pred_region
          %s201 = ssub.s32 768, 768
          %202 = vsyncadd [#allocation7], %s201
          %s203 = smul.addr %s29, 12
          %s204 = smul.addr %s203, 64
          %s205 = scalar_lea.hbm %s1, %s204
          %s206 = sshll.u32 [#allocation6], 4
          %s207 = int_to_ptr.vmem [resolvable:$true] %s206
          %212 = dma.hbm_to_vmem [thread:$0]  %s205, 768, %s207, [#allocation7], 64, 64, 4
        $region16: #{tpu_custom_call.1} parent=11 // pred_fallthru
          _
        // Predicated region
        $region17: #{tpu_custom_call.1} parent=11 // pred_check
          %p213 = pneg %p109
        $region18: #{tpu_custom_call.1} parent=11 // pred_check_branch
          %215 = sbr.rel (%p213) target = $region20
        $region19: #{tpu_custom_call.1} parent=11 // pred_region
          %s217 = ssub.s32 1536, 1536
          %218 = vsyncadd [#allocation7], %s217
          %s219 = smul.addr %s29, 12
          %s220 = smul.addr %s219, 128
          %s221 = scalar_lea.hbm %s2, %s220
          %s222 = sshll.u32 [#allocation8], 4
          %s223 = int_to_ptr.vmem [resolvable:$true] %s222
          %228 = dma.hbm_to_vmem [thread:$0]  %s221, 1536, %s223, [#allocation7], 128, 128, 8
        $region20: #{tpu_custom_call.1} parent=11 // pred_fallthru
          _
        // Predicated region
        $region21: #{tpu_custom_call.1} parent=11 // pred_check
          %p229 = pneg %p135
        $region22: #{tpu_custom_call.1} parent=11 // pred_check_branch
          %231 = sbr.rel (%p229) target = $region24
        $region23: #{tpu_custom_call.1} parent=11 // pred_region
          %s233 = ssub.s32 256, 256
          %234 = vsyncadd [#allocation10], %s233
          %s235 = smul.addr %s29, 4
          %s236 = smul.addr %s235, 64
          %s237 = scalar_lea.hbm %s3, %s236
          %s238 = sshll.u32 [#allocation9], 4
          %s239 = int_to_ptr.vmem [resolvable:$true] %s238
          %244 = dma.hbm_to_vmem [thread:$0]  %s237, 256, %s239, [#allocation10], 64, 64, 4
        $region24: #{tpu_custom_call.1} parent=11 // pred_fallthru
          _
        // Predicated region
        $region25: #{tpu_custom_call.1} parent=11 // pred_check
          %p245 = pneg %p156
        $region26: #{tpu_custom_call.1} parent=11 // pred_check_branch
          %247 = sbr.rel (%p245) target = $region28
        $region27: #{tpu_custom_call.1} parent=11 // pred_region
          %s249 = ssub.s32 16, 16
          %250 = vsyncadd [#allocation10], %s249
          %s252 = sshll.u32 [#allocation11], 4
          %s253 = int_to_ptr.vmem [resolvable:$true] %s252
          %255 = dma.hbm_to_vmem [thread:$0]  %s4, 16, %s253, [#allocation10]
        $region28: #{tpu_custom_call.1} parent=11 // pred_fallthru
          _
      $region12: #{tpu_custom_call.1} parent=5 // pred_fallthru
        _
      %p256 = scmp.lt.s32.totalorder %s19, 2
      // Predicated region
      $region29: #{tpu_custom_call.1} parent=5 // pred_check
        %p257 = pneg %p256
      $region30: #{tpu_custom_call.1} parent=5 // pred_check_branch
        %259 = sbr.rel (%p257) target = $region32
      $region31: #{tpu_custom_call.1} parent=5 // pred_region
        // Predicated region
        $region33: #{tpu_custom_call.1} parent=31 // pred_check
          %p260 = pneg %p51
        $region34: #{tpu_custom_call.1} parent=31 // pred_check_branch
          %262 = sbr.rel (%p260) target = $region36
        $region35: #{tpu_custom_call.1} parent=31 // pred_region
          %s263 = sand.u32 %s41, 1
          %s264 = scalar_lea.sflag [#allocation4], %s263
          %s265 = sand.u32 %s41, 1
          %s266 = smul.addr %s265, 64
          %s267 = scalar_lea.vmem [#allocation3], %s266
          %s269 = ssub.s32 1024, 1024
          %270 = vsyncadd %s264, %s269
          %s271 = smul.addr %s26, 16
          %s272 = smul.addr %s271, 64
          %s273 = scalar_lea.hbm %s0, %s272
          %s274 = sshll.u32 %s267, 4
          %s275 = int_to_ptr.vmem [resolvable:$true] %s274
          %280 = dma.hbm_to_vmem [thread:$0]  %s273, 1024, %s275, %s264, 64, 64, 4
        $region36: #{tpu_custom_call.1} parent=31 // pred_fallthru
          _
      $region32: #{tpu_custom_call.1} parent=5 // pred_fallthru
        _
      %p281 = scmp.le.s32.totalorder 1, %s19
      %p282 = scmp.lt.s32.totalorder %s19, 3
      %p283 = pnand %p281, %p282
      %p284 = pneg %p283
      // Predicated region
      $region37: #{tpu_custom_call.1} parent=5 // pred_check
        _
      $region38: #{tpu_custom_call.1} parent=5 // pred_check_branch
        %286 = sbr.rel (%p283) target = $region40
      $region39: #{tpu_custom_call.1} parent=5 // pred_region
        %s287 = ssub.s32 %s19, 1
        %s288 = sand.u32 %s44, 1
        %s289 = scalar_lea.sflag [#allocation4], %s288
        %s290 = sand.u32 %s44, 1
        %s291 = smul.addr %s290, 64
        %s292 = scalar_lea.vmem [#allocation3], %s291
        // Predicated region
        $region41: #{tpu_custom_call.1} parent=39 // pred_check
          %p293 = pneg %p57
        $region42: #{tpu_custom_call.1} parent=39 // pred_check_branch
          %295 = sbr.rel (%p293) target = $region44
        $region43: #{tpu_custom_call.1} parent=39 // pred_region
          %296 = dma.done %s289, 1024
        $region44: #{tpu_custom_call.1} parent=39 // pred_fallthru
          _
        // Predicated region
        $region45: #{tpu_custom_call.1} parent=39 // pred_check
          %p297 = pneg %p83
        $region46: #{tpu_custom_call.1} parent=39 // pred_check_branch
          %299 = sbr.rel (%p297) target = $region48
        $region47: #{tpu_custom_call.1} parent=39 // pred_region
          %300 = dma.done [#allocation7], 768
        $region48: #{tpu_custom_call.1} parent=39 // pred_fallthru
          _
        // Predicated region
        $region49: #{tpu_custom_call.1} parent=39 // pred_check
          %p301 = pneg %p109
        $region50: #{tpu_custom_call.1} parent=39 // pred_check_branch
          %303 = sbr.rel (%p301) target = $region52
        $region51: #{tpu_custom_call.1} parent=39 // pred_region
          %304 = dma.done [#allocation7], 1536
        $region52: #{tpu_custom_call.1} parent=39 // pred_fallthru
          _
        // Predicated region
        $region53: #{tpu_custom_call.1} parent=39 // pred_check
          %p305 = pneg %p135
        $region54: #{tpu_custom_call.1} parent=39 // pred_check_branch
          %307 = sbr.rel (%p305) target = $region56
        $region55: #{tpu_custom_call.1} parent=39 // pred_region
          %308 = dma.done [#allocation10], 256
        $region56: #{tpu_custom_call.1} parent=39 // pred_fallthru
          _
        // Predicated region
        $region57: #{tpu_custom_call.1} parent=39 // pred_check
          %p309 = pneg %p156
        $region58: #{tpu_custom_call.1} parent=39 // pred_check_branch
          %311 = sbr.rel (%p309) target = $region60
        $region59: #{tpu_custom_call.1} parent=39 // pred_region
          %312 = dma.done [#allocation10], 16
        $region60: #{tpu_custom_call.1} parent=39 // pred_fallthru
          _
        %s313 = sand.u32 %s44, 1
        %s314 = scalar_lea.sflag [#allocation4], %s313
        %s315 = sand.u32 %s44, 1
        %s316 = smul.addr %s315, 64
        %s317 = scalar_lea.vmem [#allocation3], %s316
        %p318 = pneg %p57
        %p319 = pneg %p54
        %p320 = pneg %p83
        %p321 = pneg %p80
        %p322 = pneg %p109
        %p323 = pneg %p106
        %p324 = pneg %p135
        %p325 = pneg %p132
        %p326 = pneg %p156
        %p327 = pneg %p153
        %p328 = pneg %p182
        %p329 = pneg %p179
        %s330 = sand.u32 %s169, 1
        %s331 = scalar_lea.sflag [#allocation5], %s330
        %s332 = sand.u32 %s169, 1
        %s333 = smul.addr %s332, 128
        %s334 = scalar_lea.vmem [#allocation12], %s333
        %v336 = vld [vmem:[%s292] sm:$0xf]
        %v337 = vld [vmem:[%s292 + $0x4] sm:$0xf]
        %v338 = vld [vmem:[%s292 + $0x8] sm:$0xf]
        %v339 = vld [vmem:[%s292 + $0xc] sm:$0xf]
        %v340 = vld [vmem:[%s292 + $0x10] sm:$0xf]
        %v341 = vld [vmem:[%s292 + $0x14] sm:$0xf]
        %v342 = vld [vmem:[%s292 + $0x18] sm:$0xf]
        %v343 = vld [vmem:[%s292 + $0x1c] sm:$0xf]
        %v344 = vld [vmem:[%s292 + $0x20] sm:$0xf]
        %v345 = vld [vmem:[%s292 + $0x24] sm:$0xf]
        %v346 = vld [vmem:[%s292 + $0x28] sm:$0xf]
        %v347 = vld [vmem:[%s292 + $0x2c] sm:$0xf]
        %v348 = vld [vmem:[%s292 + $0x30] sm:$0xf]
        %v349 = vld [vmem:[%s292 + $0x34] sm:$0xf]
        %v350 = vld [vmem:[%s292 + $0x38] sm:$0xf]
        %v351 = vld [vmem:[%s292 + $0x3c] sm:$0xf]
        %v352 = vld [vmem:[#allocation6] sm:$0xf]
        %v353 = vld [vmem:[#allocation6 + $0x4] sm:$0xf]
        %v354 = vld [vmem:[#allocation6 + $0x8] sm:$0xf]
        %v355 = vld [vmem:[#allocation6 + $0xc] sm:$0xf]
        %v356 = vld [vmem:[#allocation6 + $0x10] sm:$0xf]
        %v357 = vld [vmem:[#allocation6 + $0x14] sm:$0xf]
        %v358 = vld [vmem:[#allocation6 + $0x18] sm:$0xf]
        %v359 = vld [vmem:[#allocation6 + $0x1c] sm:$0xf]
        %v360 = vld [vmem:[#allocation6 + $0x20] sm:$0xf]
        %v361 = vld [vmem:[#allocation6 + $0x24] sm:$0xf]
        %v362 = vld [vmem:[#allocation6 + $0x28] sm:$0xf]
        %v363 = vld [vmem:[#allocation6 + $0x2c] sm:$0xf]
        %v364 = vld [vmem:[#allocation8] sm:$0xff]
        %v365 = vld [vmem:[#allocation8 + $0x8] sm:$0xff]
        %v366 = vld [vmem:[#allocation8 + $0x10] sm:$0xff]
        %v367 = vld [vmem:[#allocation8 + $0x18] sm:$0xff]
        %v368 = vld [vmem:[#allocation8 + $0x20] sm:$0xff]
        %v369 = vld [vmem:[#allocation8 + $0x28] sm:$0xff]
        %v370 = vld [vmem:[#allocation8 + $0x30] sm:$0xff]
        %v371 = vld [vmem:[#allocation8 + $0x38] sm:$0xff]
        %v372 = vld [vmem:[#allocation8 + $0x40] sm:$0xff]
        %v373 = vld [vmem:[#allocation8 + $0x48] sm:$0xff]
        %v374 = vld [vmem:[#allocation8 + $0x50] sm:$0xff]
        %v375 = vld [vmem:[#allocation8 + $0x58] sm:$0xff]
        %377 = vset.pattern.permute.xlu0 0
        %378 = vperm.xlu0 %377, %v364
        %v379 = vpop.permute.xlu0 %378
        %382 = vset.pattern.permute.xlu0 0
        %383 = vperm.xlu0 %382, %v365
        %v384 = vpop.permute.xlu0 %383
        %387 = vset.pattern.permute.xlu0 0
        %388 = vperm.xlu0 %387, %v366
        %v389 = vpop.permute.xlu0 %388
        %392 = vset.pattern.permute.xlu0 0
        %393 = vperm.xlu0 %392, %v367
        %v394 = vpop.permute.xlu0 %393
        %397 = vset.pattern.permute.xlu0 0
        %398 = vperm.xlu0 %397, %v368
        %v399 = vpop.permute.xlu0 %398
        %402 = vset.pattern.permute.xlu0 0
        %403 = vperm.xlu0 %402, %v369
        %v404 = vpop.permute.xlu0 %403
        %407 = vset.pattern.permute.xlu0 0
        %408 = vperm.xlu0 %407, %v370
        %v409 = vpop.permute.xlu0 %408
        %412 = vset.pattern.permute.xlu0 0
        %413 = vperm.xlu0 %412, %v371
        %v414 = vpop.permute.xlu0 %413
        %417 = vset.pattern.permute.xlu0 0
        %418 = vperm.xlu0 %417, %v372
        %v419 = vpop.permute.xlu0 %418
        %422 = vset.pattern.permute.xlu0 0
        %423 = vperm.xlu0 %422, %v373
        %v424 = vpop.permute.xlu0 %423
        %427 = vset.pattern.permute.xlu0 0
        %428 = vperm.xlu0 %427, %v374
        %v429 = vpop.permute.xlu0 %428
        %432 = vset.pattern.permute.xlu0 0
        %433 = vperm.xlu0 %432, %v375
        %v434 = vpop.permute.xlu0 %433
        %v448 = vunpack.c.l.b16 %v352
        %v449 = vunpack.c.l.b16 %v353
        %v450 = vunpack.c.l.b16 %v354
        %v451 = vunpack.c.l.b16 %v355
        %v452 = vunpack.c.l.b16 %v356
        %v453 = vunpack.c.l.b16 %v357
        %v454 = vunpack.c.l.b16 %v358
        %v455 = vunpack.c.l.b16 %v359
        %v456 = vunpack.c.l.b16 %v360
        %v457 = vunpack.c.l.b16 %v361
        %v458 = vunpack.c.l.b16 %v362
        %v459 = vunpack.c.l.b16 %v363
        %v460 = vpack.c.b16 %v449, %v448
        %v461 = vpack.c.b16 %v451, %v450
        %v462 = vpack.c.b16 %v453, %v452
        %v463 = vpack.c.b16 %v455, %v454
        %v464 = vpack.c.b16 %v457, %v456
        %v465 = vpack.c.b16 %v459, %v458
        %v488 = vunpack.c.l.b16 %v336
        %v489 = vunpack.c.l.b16 %v337
        %v490 = vunpack.c.l.b16 %v338
        %v491 = vunpack.c.l.b16 %v339
        %v492 = vunpack.c.l.b16 %v340
        %v493 = vunpack.c.l.b16 %v341
        %v494 = vunpack.c.l.b16 %v342
        %v495 = vunpack.c.l.b16 %v343
        %v496 = vunpack.c.l.b16 %v344
        %v497 = vunpack.c.l.b16 %v345
        %v498 = vunpack.c.l.b16 %v346
        %v499 = vunpack.c.l.b16 %v347
        %v500 = vunpack.c.l.b16 %v348
        %v501 = vunpack.c.l.b16 %v349
        %v502 = vunpack.c.l.b16 %v350
        %v503 = vunpack.c.l.b16 %v351
        %v504 = vpack.c.b16 %v489, %v488
        %v505 = vpack.c.b16 %v491, %v490
        %v506 = vpack.c.b16 %v493, %v492
        %v507 = vpack.c.b16 %v495, %v494
        %v508 = vpack.c.b16 %v497, %v496
        %v509 = vpack.c.b16 %v499, %v498
        %v510 = vpack.c.b16 %v501, %v500
        %v511 = vpack.c.b16 %v503, %v502
        %520 = vmatprep.subr.bf16.mxu0 0
        %521 = vmatpush1.bf16.msra.mxu0 %v504
        %522 = vmatprep.subr.bf16.mxu0 0
        %523 = vmatpush1.bf16.msra.mxu0 %v505
        %524 = vmatprep.subr.bf16.mxu0 0
        %525 = vmatpush1.bf16.msra.mxu0 %v506
        %526 = vmatprep.subr.bf16.mxu0 0
        %527 = vmatpush1.bf16.msra.mxu0 %v507
        %528 = vmatprep.subr.bf16.mxu0 0
        %529 = vmatpush1.bf16.msra.mxu0 %v508
        %530 = vmatprep.subr.bf16.mxu0 0
        %531 = vmatpush1.bf16.msra.mxu0 %v509
        %532 = vmatprep.subr.bf16.mxu0 0
        %533 = vmatpush1.bf16.msra.mxu0 %v510
        %534 = vmatprep.subr.bf16.mxu0 0
        %535 = vmatpush1.bf16.msra.mxu0 %v511
        %536 = vmatprep.subr.bf16.mxu0 0
        %537 = vmatpush1.bf16.msra.mxu0 0
        %538 = vmatprep.subr.bf16.mxu0 0
        %539 = vmatpush1.bf16.msra.mxu0 0
        %540 = vmatprep.subr.bf16.mxu0 0
        %541 = vmatpush1.bf16.msra.mxu0 0
        %542 = vmatprep.subr.bf16.mxu0 0
        %543 = vmatpush1.bf16.msra.mxu0 0
        %544 = vmatprep.subr.bf16.mxu0 0
        %545 = vmatpush1.bf16.msra.mxu0 0
        %546 = vmatprep.subr.bf16.mxu0 0
        %547 = vmatpush1.bf16.msra.mxu0 0
        %548 = vmatprep.subr.bf16.mxu0 0
        %549 = vmatpush1.bf16.msra.mxu0 0
        %550 = vmatprep.subr.bf16.mxu0 0
        %551 = vmatpush1.bf16.msra.mxu0 0
        %552 = vmatprep.mubr.bf16.mxu0 0
        %553 = vmatmul.mubr.bf16.gmra.mrb[0].mxu0 %v460
        %v554 = vpop.f32.mrb[0].mxu0
        %v555 = vadd.f32 %v379, %v554
        %v556 = vpop.f32.mrb[0].mxu0
        %v557 = vpop.f32.mrb[0].mxu0
        %v558 = vadd.f32 %v384, %v557
        %v559 = vpop.f32.mrb[0].mxu0
        %560 = vmatprep.mubr.bf16.mxu0 0
        %561 = vmatmul.mubr.bf16.gmra.mrb[0].mxu0 %v461
        %v562 = vpop.f32.mrb[0].mxu0
        %v563 = vadd.f32 %v389, %v562
        %v564 = vpop.f32.mrb[0].mxu0
        %v565 = vpop.f32.mrb[0].mxu0
        %v566 = vadd.f32 %v394, %v565
        %v567 = vpop.f32.mrb[0].mxu0
        %568 = vmatprep.mubr.bf16.mxu0 0
        %569 = vmatmul.mubr.bf16.gmra.mrb[0].mxu0 %v462
        %v570 = vpop.f32.mrb[0].mxu0
        %v571 = vadd.f32 %v399, %v570
        %v572 = vpop.f32.mrb[0].mxu0
        %v573 = vpop.f32.mrb[0].mxu0
        %v574 = vadd.f32 %v404, %v573
        %v575 = vpop.f32.mrb[0].mxu0
        %576 = vmatprep.mubr.bf16.mxu0 0
        %577 = vmatmul.mubr.bf16.gmra.mrb[0].mxu0 %v463
        %v578 = vpop.f32.mrb[0].mxu0
        %v579 = vadd.f32 %v409, %v578
        %v580 = vpop.f32.mrb[0].mxu0
        %v581 = vpop.f32.mrb[0].mxu0
        %v582 = vadd.f32 %v414, %v581
        %v583 = vpop.f32.mrb[0].mxu0
        %584 = vmatprep.mubr.bf16.mxu0 0
        %585 = vmatmul.mubr.bf16.gmra.mrb[0].mxu0 %v464
        %v586 = vpop.f32.mrb[0].mxu0
        %v587 = vadd.f32 %v419, %v586
        %v588 = vpop.f32.mrb[0].mxu0
        %v589 = vpop.f32.mrb[0].mxu0
        %v590 = vadd.f32 %v424, %v589
        %v591 = vpop.f32.mrb[0].mxu0
        %592 = vmatprep.mubr.bf16.mxu0 0
        %593 = vmatmul.mubr.bf16.gmra.mrb[0].mxu0 %v465
        %v594 = vpop.f32.mrb[0].mxu0
        %v595 = vadd.f32 %v429, %v594
        %v596 = vpop.f32.mrb[0].mxu0
        %v597 = vpop.f32.mrb[0].mxu0
        %v598 = vadd.f32 %v434, %v597
        %v599 = vpop.f32.mrb[0].mxu0
        %600 = vdwg.mxu0
        %v601 = vlaneseq
        %v602 = vand.u32 %v601, 127
        %vm603 = vcmp.lt.s32.totalorder %v602, 8
        %v604 = vpack.c.bf16 %v555, %v555
        %v605 = vpack.c.bf16 %v571, %v571
        %v606 = vpack.c.bf16 %v587, %v587
        %607 = vxpose.xlu0.c.b16.start [1/8] %v604, 128
        %608 = vxpose.xlu0.c.b16.cont [2/8] 0, 128
        %609 = vxpose.xlu0.c.b16.cont [3/8] 0, 128
        %610 = vxpose.xlu0.c.b16.cont [4/8] 0, 128
        %611 = vxpose.xlu0.c.b16.cont [5/8] 0, 128
        %612 = vxpose.xlu0.c.b16.cont [6/8] 0, 128
        %613 = vxpose.xlu0.c.b16.cont [7/8] 0, 128
        %614 = vxpose.xlu0.c.b16.end [8/8] 0, 128
        %v615 = vpop.trf.xlu0
        %v616 = vpop.trf.xlu0
        %v617 = vpop.trf.xlu0
        %v618 = vpop.trf.xlu0
        %v619 = vpop.trf.xlu0
        %v620 = vpop.trf.xlu0
        %v621 = vpop.trf.xlu0
        %v622 = vpop.trf.xlu0
        %vm623 = vcmask 31744
        %v625 = vsel %vm623, %v615, 0
        %v628 = vsel %vm623, %v616, 0
        %v631 = vsel %vm623, %v617, 0
        %v634 = vsel %vm623, %v618, 0
        %v637 = vsel %vm623, %v619, 0
        %v640 = vsel %vm623, %v620, 0
        %v643 = vsel %vm623, %v621, 0
        %v646 = vsel %vm623, %v622, 0
        %vm648 = vcmask 1041408
        %v650 = vsel %vm648, %v605, 0
        %652 = vmatprep.subr.bf16.mxu0 0
        %653 = vmatpush1.bf16.msra.mxu0 %v650
        %654 = vmatprep.subr.bf16.mxu0 0
        %655 = vmatpush1.bf16.msra.mxu0 0
        %656 = vmatprep.subr.bf16.mxu0 0
        %657 = vmatpush1.bf16.msra.mxu0 0
        %658 = vmatprep.subr.bf16.mxu0 0
        %659 = vmatpush1.bf16.msra.mxu0 0
        %660 = vmatprep.subr.bf16.mxu0 0
        %661 = vmatpush1.bf16.msra.mxu0 0
        %662 = vmatprep.subr.bf16.mxu0 0
        %663 = vmatpush1.bf16.msra.mxu0 0
        %664 = vmatprep.subr.bf16.mxu0 0
        %665 = vmatpush1.bf16.msra.mxu0 0
        %666 = vmatprep.subr.bf16.mxu0 0
        %667 = vmatpush1.bf16.msra.mxu0 0
        %668 = vmatprep.subr.bf16.mxu0 0
        %669 = vmatpush1.bf16.msra.mxu0 0
        %670 = vmatprep.subr.bf16.mxu0 0
        %671 = vmatpush1.bf16.msra.mxu0 0
        %672 = vmatprep.subr.bf16.mxu0 0
        %673 = vmatpush1.bf16.msra.mxu0 0
        %674 = vmatprep.subr.bf16.mxu0 0
        %675 = vmatpush1.bf16.msra.mxu0 0
        %676 = vmatprep.subr.bf16.mxu0 0
        %677 = vmatpush1.bf16.msra.mxu0 0
        %678 = vmatprep.subr.bf16.mxu0 0
        %679 = vmatpush1.bf16.msra.mxu0 0
        %680 = vmatprep.subr.bf16.mxu0 0
        %681 = vmatpush1.bf16.msra.mxu0 0
        %682 = vmatprep.subr.bf16.mxu0 0
        %683 = vmatpush1.bf16.msra.mxu0 0
        %684 = vmatprep.mubr.bf16.mxu0 0
        %685 = vmatmul.mubr.bf16.gmra.mrb[0].mxu0 %v625
        %v686 = vpop.f32.mrb[0].mxu0
        %v687 = vadd.f32 0.0, %v686
        %v688 = vpop.f32.mrb[0].mxu0
        %v689 = vpop.f32.mrb[0].mxu0
        %v690 = vadd.f32 0.0, %v689
        %v691 = vpop.f32.mrb[0].mxu0
        %692 = vmatprep.mubr.bf16.mxu0 0
        %693 = vmatmul.mubr.bf16.gmra.mrb[0].mxu0 %v628
        %v694 = vpop.f32.mrb[0].mxu0
        %v695 = vadd.f32 0.0, %v694
        %v696 = vpop.f32.mrb[0].mxu0
        %v697 = vpop.f32.mrb[0].mxu0
        %v698 = vadd.f32 0.0, %v697
        %v699 = vpop.f32.mrb[0].mxu0
        %700 = vmatprep.mubr.bf16.mxu0 0
        %701 = vmatmul.mubr.bf16.gmra.mrb[0].mxu0 %v631
        %v702 = vpop.f32.mrb[0].mxu0
        %v703 = vadd.f32 0.0, %v702
        %v704 = vpop.f32.mrb[0].mxu0
        %v705 = vpop.f32.mrb[0].mxu0
        %v706 = vadd.f32 0.0, %v705
        %v707 = vpop.f32.mrb[0].mxu0
        %708 = vmatprep.mubr.bf16.mxu0 0
        %709 = vmatmul.mubr.bf16.gmra.mrb[0].mxu0 %v634
        %v710 = vpop.f32.mrb[0].mxu0
        %v711 = vadd.f32 0.0, %v710
        %v712 = vpop.f32.mrb[0].mxu0
        %v713 = vpop.f32.mrb[0].mxu0
        %v714 = vadd.f32 0.0, %v713
        %v715 = vpop.f32.mrb[0].mxu0
        %716 = vmatprep.mubr.bf16.mxu0 0
        %717 = vmatmul.mubr.bf16.gmra.mrb[0].mxu0 %v637
        %v718 = vpop.f32.mrb[0].mxu0
        %v719 = vadd.f32 0.0, %v718
        %v720 = vpop.f32.mrb[0].mxu0
        %v721 = vpop.f32.mrb[0].mxu0
        %v722 = vadd.f32 0.0, %v721
        %v723 = vpop.f32.mrb[0].mxu0
        %724 = vmatprep.mubr.bf16.mxu0 0
        %725 = vmatmul.mubr.bf16.gmra.mrb[0].mxu0 %v640
        %v726 = vpop.f32.mrb[0].mxu0
        %v727 = vadd.f32 0.0, %v726
        %v728 = vpop.f32.mrb[0].mxu0
        %v729 = vpop.f32.mrb[0].mxu0
        %v730 = vadd.f32 0.0, %v729
        %v731 = vpop.f32.mrb[0].mxu0
        %732 = vmatprep.mubr.bf16.mxu0 0
        %733 = vmatmul.mubr.bf16.gmra.mrb[0].mxu0 %v643
        %v734 = vpop.f32.mrb[0].mxu0
        %v735 = vadd.f32 0.0, %v734
        %v736 = vpop.f32.mrb[0].mxu0
        %v737 = vpop.f32.mrb[0].mxu0
        %v738 = vadd.f32 0.0, %v737
        %v739 = vpop.f32.mrb[0].mxu0
        %740 = vmatprep.mubr.bf16.mxu0 0
        %741 = vmatmul.mubr.bf16.gmra.mrb[0].mxu0 %v646
        %v742 = vpop.f32.mrb[0].mxu0
        %v743 = vadd.f32 0.0, %v742
        %v744 = vpop.f32.mrb[0].mxu0
        %v745 = vpop.f32.mrb[0].mxu0
        %v746 = vadd.f32 0.0, %v745
        %v747 = vpop.f32.mrb[0].mxu0
        %748 = vdwg.mxu0
        %v749 = vsel %vm603, 1, 0
        %vm750 = vcmp.eq.s32.totalorder %v749, 1
        %v751 = vsel %vm750, %v687, -3.4028235e+38
        %v752 = vsel %vm750, %v690, -3.4028235e+38
        %v753 = vsel %vm750, %v695, -3.4028235e+38
        %v754 = vsel %vm750, %v698, -3.4028235e+38
        %v755 = vsel %vm750, %v703, -3.4028235e+38
        %v756 = vsel %vm750, %v706, -3.4028235e+38
        %v757 = vsel %vm750, %v711, -3.4028235e+38
        %v758 = vsel %vm750, %v714, -3.4028235e+38
        %v759 = vsel %vm750, %v719, -3.4028235e+38
        %v760 = vsel %vm750, %v722, -3.4028235e+38
        %v761 = vsel %vm750, %v727, -3.4028235e+38
        %v762 = vsel %vm750, %v730, -3.4028235e+38
        %v763 = vsel %vm750, %v735, -3.4028235e+38
        %v764 = vsel %vm750, %v738, -3.4028235e+38
        %v765 = vsel %vm750, %v743, -3.4028235e+38
        %v766 = vsel %vm750, %v746, -3.4028235e+38
        %767 = vmax.xlane.f32.xlu0 %v751
        %v768 = vpop.xlane.xlu0 %767
        %769 = vmax.xlane.f32.xlu0 %v752
        %v770 = vpop.xlane.xlu0 %769
        %771 = vmax.xlane.f32.xlu0 %v753
        %v772 = vpop.xlane.xlu0 %771
        %773 = vmax.xlane.f32.xlu0 %v754
        %v774 = vpop.xlane.xlu0 %773
        %775 = vmax.xlane.f32.xlu0 %v755
        %v776 = vpop.xlane.xlu0 %775
        %777 = vmax.xlane.f32.xlu0 %v756
        %v778 = vpop.xlane.xlu0 %777
        %779 = vmax.xlane.f32.xlu0 %v757
        %v780 = vpop.xlane.xlu0 %779
        %781 = vmax.xlane.f32.xlu0 %v758
        %v782 = vpop.xlane.xlu0 %781
        %783 = vmax.xlane.f32.xlu0 %v759
        %v784 = vpop.xlane.xlu0 %783
        %785 = vmax.xlane.f32.xlu0 %v760
        %v786 = vpop.xlane.xlu0 %785
        %787 = vmax.xlane.f32.xlu0 %v761
        %v788 = vpop.xlane.xlu0 %787
        %789 = vmax.xlane.f32.xlu0 %v762
        %v790 = vpop.xlane.xlu0 %789
        %791 = vmax.xlane.f32.xlu0 %v763
        %v792 = vpop.xlane.xlu0 %791
        %793 = vmax.xlane.f32.xlu0 %v764
        %v794 = vpop.xlane.xlu0 %793
        %795 = vmax.xlane.f32.xlu0 %v765
        %v796 = vpop.xlane.xlu0 %795
        %797 = vmax.xlane.f32.xlu0 %v766
        %v798 = vpop.xlane.xlu0 %797
        %v799 = vsub.f32 %v751, %v768
        %v800 = vsub.f32 %v752, %v770
        %v801 = vsub.f32 %v753, %v772
        %v802 = vsub.f32 %v754, %v774
        %v803 = vsub.f32 %v755, %v776
        %v804 = vsub.f32 %v756, %v778
        %v805 = vsub.f32 %v757, %v780
        %v806 = vsub.f32 %v758, %v782
        %v807 = vsub.f32 %v759, %v784
        %v808 = vsub.f32 %v760, %v786
        %v809 = vsub.f32 %v761, %v788
        %v810 = vsub.f32 %v762, %v790
        %v811 = vsub.f32 %v763, %v792
        %v812 = vsub.f32 %v764, %v794
        %v813 = vsub.f32 %v765, %v796
        %v814 = vsub.f32 %v766, %v798
        %v815 = vmul.f32 %v799, 1.442695
        %v816 = vpow.pop %v815
        %v817 = vmul.f32 %v800, 1.442695
        %v818 = vpow.pop %v817
        %v819 = vmul.f32 %v801, 1.442695
        %v820 = vpow.pop %v819
        %v821 = vmul.f32 %v802, 1.442695
        %v822 = vpow.pop %v821
        %v823 = vmul.f32 %v803, 1.442695
        %v824 = vpow.pop %v823
        %v825 = vmul.f32 %v804, 1.442695
        %v826 = vpow.pop %v825
        %v827 = vmul.f32 %v805, 1.442695
        %v828 = vpow.pop %v827
        %v829 = vmul.f32 %v806, 1.442695
        %v830 = vpow.pop %v829
        %v831 = vmul.f32 %v807, 1.442695
        %v832 = vpow.pop %v831
        %v833 = vmul.f32 %v808, 1.442695
        %v834 = vpow.pop %v833
        %v835 = vmul.f32 %v809, 1.442695
        %v836 = vpow.pop %v835
        %v837 = vmul.f32 %v810, 1.442695
        %v838 = vpow.pop %v837
        %v839 = vmul.f32 %v811, 1.442695
        %v840 = vpow.pop %v839
        %v841 = vmul.f32 %v812, 1.442695
        %v842 = vpow.pop %v841
        %v843 = vmul.f32 %v813, 1.442695
        %v844 = vpow.pop %v843
        %v845 = vmul.f32 %v814, 1.442695
        %v846 = vpow.pop %v845
        %847 = vadd.xlane.f32.xlu0 %v816
        %v848 = vpop.xlane.xlu0 %847
        %849 = vadd.xlane.f32.xlu0 %v818
        %v850 = vpop.xlane.xlu0 %849
        %851 = vadd.xlane.f32.xlu0 %v820
        %v852 = vpop.xlane.xlu0 %851
        %853 = vadd.xlane.f32.xlu0 %v822
        %v854 = vpop.xlane.xlu0 %853
        %855 = vadd.xlane.f32.xlu0 %v824
        %v856 = vpop.xlane.xlu0 %855
        %857 = vadd.xlane.f32.xlu0 %v826
        %v858 = vpop.xlane.xlu0 %857
        %859 = vadd.xlane.f32.xlu0 %v828
        %v860 = vpop.xlane.xlu0 %859
        %861 = vadd.xlane.f32.xlu0 %v830
        %v862 = vpop.xlane.xlu0 %861
        %863 = vadd.xlane.f32.xlu0 %v832
        %v864 = vpop.xlane.xlu0 %863
        %865 = vadd.xlane.f32.xlu0 %v834
        %v866 = vpop.xlane.xlu0 %865
        %867 = vadd.xlane.f32.xlu0 %v836
        %v868 = vpop.xlane.xlu0 %867
        %869 = vadd.xlane.f32.xlu0 %v838
        %v870 = vpop.xlane.xlu0 %869
        %871 = vadd.xlane.f32.xlu0 %v840
        %v872 = vpop.xlane.xlu0 %871
        %873 = vadd.xlane.f32.xlu0 %v842
        %v874 = vpop.xlane.xlu0 %873
        %875 = vadd.xlane.f32.xlu0 %v844
        %v876 = vpop.xlane.xlu0 %875
        %877 = vadd.xlane.f32.xlu0 %v846
        %v878 = vpop.xlane.xlu0 %877
        %v879 = vmul.f32 %v848, 5.656854
        %v880 = vmul.f32 %v850, 5.656854
        %v881 = vmul.f32 %v852, 5.656854
        %v882 = vmul.f32 %v854, 5.656854
        %v883 = vmul.f32 %v856, 5.656854
        %v884 = vmul.f32 %v858, 5.656854
        %v885 = vmul.f32 %v860, 5.656854
        %v886 = vmul.f32 %v862, 5.656854
        %v887 = vmul.f32 %v864, 5.656854
        %v888 = vmul.f32 %v866, 5.656854
        %v889 = vmul.f32 %v868, 5.656854
        %v890 = vmul.f32 %v870, 5.656854
        %v891 = vmul.f32 %v872, 5.656854
        %v892 = vmul.f32 %v874, 5.656854
        %v893 = vmul.f32 %v876, 5.656854
        %v894 = vmul.f32 %v878, 5.656854
        %v895 = vrcp.pop %v879
        %v896 = vrcp.pop %v880
        %v897 = vrcp.pop %v881
        %v898 = vrcp.pop %v882
        %v899 = vrcp.pop %v883
        %v900 = vrcp.pop %v884
        %v901 = vrcp.pop %v885
        %v902 = vrcp.pop %v886
        %v903 = vrcp.pop %v887
        %v904 = vrcp.pop %v888
        %v905 = vrcp.pop %v889
        %v906 = vrcp.pop %v890
        %v907 = vrcp.pop %v891
        %v908 = vrcp.pop %v892
        %v909 = vrcp.pop %v893
        %v910 = vrcp.pop %v894
        %v911 = vmul.f32 %v816, %v895
        %v912 = vmul.f32 %v818, %v896
        %v913 = vmul.f32 %v820, %v897
        %v914 = vmul.f32 %v822, %v898
        %v915 = vmul.f32 %v824, %v899
        %v916 = vmul.f32 %v826, %v900
        %v917 = vmul.f32 %v828, %v901
        %v918 = vmul.f32 %v830, %v902
        %v919 = vmul.f32 %v832, %v903
        %v920 = vmul.f32 %v834, %v904
        %v921 = vmul.f32 %v836, %v905
        %v922 = vmul.f32 %v838, %v906
        %v923 = vmul.f32 %v840, %v907
        %v924 = vmul.f32 %v842, %v908
        %v925 = vmul.f32 %v844, %v909
        %v926 = vmul.f32 %v846, %v910
        %v927 = vpack.c.bf16 %v912, %v911
        %v928 = vpack.c.bf16 %v914, %v913
        %v929 = vpack.c.bf16 %v916, %v915
        %v930 = vpack.c.bf16 %v918, %v917
        %v931 = vpack.c.bf16 %v920, %v919
        %v932 = vpack.c.bf16 %v922, %v921
        %v933 = vpack.c.bf16 %v924, %v923
        %v934 = vpack.c.bf16 %v926, %v925
        %935 = vmatprep.subr.bf16.mxu0 0
        %936 = vmatpush1.bf16.xpose.msra.mxu0 %v927
        %937 = vmatprep.subr.bf16.mxu0 0
        %938 = vmatpush1.bf16.xpose.msra.mxu0 %v928
        %939 = vmatprep.subr.bf16.mxu0 0
        %940 = vmatpush1.bf16.xpose.msra.mxu0 %v929
        %941 = vmatprep.subr.bf16.mxu0 0
        %942 = vmatpush1.bf16.xpose.msra.mxu0 %v930
        %943 = vmatprep.subr.bf16.mxu0 0
        %944 = vmatpush1.bf16.xpose.msra.mxu0 %v931
        %945 = vmatprep.subr.bf16.mxu0 0
        %946 = vmatpush1.bf16.xpose.msra.mxu0 %v932
        %947 = vmatprep.subr.bf16.mxu0 0
        %948 = vmatpush1.bf16.xpose.msra.mxu0 %v933
        %949 = vmatprep.subr.bf16.mxu0 0
        %950 = vmatpush1.bf16.xpose.msra.mxu0 %v934
        %951 = vmatprep.subr.bf16.mxu0 0
        %952 = vmatpush1.bf16.xpose.msra.mxu0 0
        %953 = vmatprep.subr.bf16.mxu0 0
        %954 = vmatpush1.bf16.xpose.msra.mxu0 0
        %955 = vmatprep.subr.bf16.mxu0 0
        %956 = vmatpush1.bf16.xpose.msra.mxu0 0
        %957 = vmatprep.subr.bf16.mxu0 0
        %958 = vmatpush1.bf16.xpose.msra.mxu0 0
        %959 = vmatprep.subr.bf16.mxu0 0
        %960 = vmatpush1.bf16.xpose.msra.mxu0 0
        %961 = vmatprep.subr.bf16.mxu0 0
        %962 = vmatpush1.bf16.xpose.msra.mxu0 0
        %963 = vmatprep.subr.bf16.mxu0 0
        %964 = vmatpush1.bf16.xpose.msra.mxu0 0
        %965 = vmatprep.subr.bf16.mxu0 0
        %966 = vmatpush1.bf16.xpose.msra.mxu0 0
        %967 = vmatprep.mubr.bf16.mxu0 0
        %968 = vmatmul.mubr.bf16.gmra.mrb[0].mxu0 %v606
        %v969 = vpop.f32.mrb[0].mxu0
        %v970 = vadd.f32 0.0, %v969
        %v971 = vpop.f32.mrb[0].mxu0
        %v972 = vpop.f32.mrb[0].mxu0
        %v973 = vpop.f32.mrb[0].mxu0
        %974 = vdwg.mxu0
        %v975 = vpack.c.bf16 %v970, %v970
        %v977 = vrot.slane %v604, 2
        %979 = vxpose.xlu0.c.b16.start [1/8] %v977, 128
        %980 = vxpose.xlu0.c.b16.cont [2/8] 0, 128
        %981 = vxpose.xlu0.c.b16.cont [3/8] 0, 128
        %982 = vxpose.xlu0.c.b16.cont [4/8] 0, 128
        %983 = vxpose.xlu0.c.b16.cont [5/8] 0, 128
        %984 = vxpose.xlu0.c.b16.cont [6/8] 0, 128
        %985 = vxpose.xlu0.c.b16.cont [7/8] 0, 128
        %986 = vxpose.xlu0.c.b16.end [8/8] 0, 128
        %v987 = vpop.trf.xlu0
        %v988 = vpop.trf.xlu0
        %v989 = vpop.trf.xlu0
        %v990 = vpop.trf.xlu0
        %v991 = vpop.trf.xlu0
        %v992 = vpop.trf.xlu0
        %v993 = vpop.trf.xlu0
        %v994 = vpop.trf.xlu0
        %v996 = vrot.slane %v605, 2
        %v998 = vsel %vm623, %v987, 0
        %v1001 = vsel %vm623, %v988, 0
        %v1004 = vsel %vm623, %v989, 0
        %v1007 = vsel %vm623, %v990, 0
        %v1010 = vsel %vm623, %v991, 0
        %v1013 = vsel %vm623, %v992, 0
        %v1016 = vsel %vm623, %v993, 0
        %v1019 = vsel %vm623, %v994, 0
        %v1022 = vsel %vm648, %v996, 0
        %1024 = vmatprep.subr.bf16.mxu0 0
        %1025 = vmatpush1.bf16.msra.mxu0 %v1022
        %1026 = vmatprep.subr.bf16.mxu0 0
        %1027 = vmatpush1.bf16.msra.mxu0 0
        %1028 = vmatprep.subr.bf16.mxu0 0
        %1029 = vmatpush1.bf16.msra.mxu0 0
        %1030 = vmatprep.subr.bf16.mxu0 0
        %1031 = vmatpush1.bf16.msra.mxu0 0
        %1032 = vmatprep.subr.bf16.mxu0 0
        %1033 = vmatpush1.bf16.msra.mxu0 0
        %1034 = vmatprep.subr.bf16.mxu0 0
        %1035 = vmatpush1.bf16.msra.mxu0 0
        %1036 = vmatprep.subr.bf16.mxu0 0
        %1037 = vmatpush1.bf16.msra.mxu0 0
        %1038 = vmatprep.subr.bf16.mxu0 0
        %1039 = vmatpush1.bf16.msra.mxu0 0
        %1040 = vmatprep.subr.bf16.mxu0 0
        %1041 = vmatpush1.bf16.msra.mxu0 0
        %1042 = vmatprep.subr.bf16.mxu0 0
        %1043 = vmatpush1.bf16.msra.mxu0 0
        %1044 = vmatprep.subr.bf16.mxu0 0
        %1045 = vmatpush1.bf16.msra.mxu0 0
        %1046 = vmatprep.subr.bf16.mxu0 0
        %1047 = vmatpush1.bf16.msra.mxu0 0
        %1048 = vmatprep.subr.bf16.mxu0 0
        %1049 = vmatpush1.bf16.msra.mxu0 0
        %1050 = vmatprep.subr.bf16.mxu0 0
        %1051 = vmatpush1.bf16.msra.mxu0 0
        %1052 = vmatprep.subr.bf16.mxu0 0
        %1053 = vmatpush1.bf16.msra.mxu0 0
        %1054 = vmatprep.subr.bf16.mxu0 0
        %1055 = vmatpush1.bf16.msra.mxu0 0
        %1056 = vmatprep.mubr.bf16.mxu0 0
        %1057 = vmatmul.mubr.bf16.gmra.mrb[0].mxu0 %v998
        %v1058 = vpop.f32.mrb[0].mxu0
        %v1059 = vadd.f32 0.0, %v1058
        %v1060 = vpop.f32.mrb[0].mxu0
        %v1061 = vpop.f32.mrb[0].mxu0
        %v1062 = vadd.f32 0.0, %v1061
        %v1063 = vpop.f32.mrb[0].mxu0
        %1064 = vmatprep.mubr.bf16.mxu0 0
        %1065 = vmatmul.mubr.bf16.gmra.mrb[0].mxu0 %v1001
        %v1066 = vpop.f32.mrb[0].mxu0
        %v1067 = vadd.f32 0.0, %v1066
        %v1068 = vpop.f32.mrb[0].mxu0
        %v1069 = vpop.f32.mrb[0].mxu0
        %v1070 = vadd.f32 0.0, %v1069
        %v1071 = vpop.f32.mrb[0].mxu0
        %1072 = vmatprep.mubr.bf16.mxu0 0
        %1073 = vmatmul.mubr.bf16.gmra.mrb[0].mxu0 %v1004
        %v1074 = vpop.f32.mrb[0].mxu0
        %v1075 = vadd.f32 0.0, %v1074
        %v1076 = vpop.f32.mrb[0].mxu0
        %v1077 = vpop.f32.mrb[0].mxu0
        %v1078 = vadd.f32 0.0, %v1077
        %v1079 = vpop.f32.mrb[0].mxu0
        %1080 = vmatprep.mubr.bf16.mxu0 0
        %1081 = vmatmul.mubr.bf16.gmra.mrb[0].mxu0 %v1007
        %v1082 = vpop.f32.mrb[0].mxu0
        %v1083 = vadd.f32 0.0, %v1082
        %v1084 = vpop.f32.mrb[0].mxu0
        %v1085 = vpop.f32.mrb[0].mxu0
        %v1086 = vadd.f32 0.0, %v1085
        %v1087 = vpop.f32.mrb[0].mxu0
        %1088 = vmatprep.mubr.bf16.mxu0 0
        %1089 = vmatmul.mubr.bf16.gmra.mrb[0].mxu0 %v1010
        %v1090 = vpop.f32.mrb[0].mxu0
        %v1091 = vadd.f32 0.0, %v1090
        %v1092 = vpop.f32.mrb[0].mxu0
        %v1093 = vpop.f32.mrb[0].mxu0
        %v1094 = vadd.f32 0.0, %v1093
        %v1095 = vpop.f32.mrb[0].mxu0
        %1096 = vmatprep.mubr.bf16.mxu0 0
        %1097 = vmatmul.mubr.bf16.gmra.mrb[0].mxu0 %v1013
        %v1098 = vpop.f32.mrb[0].mxu0
        %v1099 = vadd.f32 0.0, %v1098
        %v1100 = vpop.f32.mrb[0].mxu0
        %v1101 = vpop.f32.mrb[0].mxu0
        %v1102 = vadd.f32 0.0, %v1101
        %v1103 = vpop.f32.mrb[0].mxu0
        %1104 = vmatprep.mubr.bf16.mxu0 0
        %1105 = vmatmul.mubr.bf16.gmra.mrb[0].mxu0 %v1016
        %v1106 = vpop.f32.mrb[0].mxu0
        %v1107 = vadd.f32 0.0, %v1106
        %v1108 = vpop.f32.mrb[0].mxu0
        %v1109 = vpop.f32.mrb[0].mxu0
        %v1110 = vadd.f32 0.0, %v1109
        %v1111 = vpop.f32.mrb[0].mxu0
        %1112 = vmatprep.mubr.bf16.mxu0 0
        %1113 = vmatmul.mubr.bf16.gmra.mrb[0].mxu0 %v1019
        %v1114 = vpop.f32.mrb[0].mxu0
        %v1115 = vadd.f32 0.0, %v1114
        %v1116 = vpop.f32.mrb[0].mxu0
        %v1117 = vpop.f32.mrb[0].mxu0
        %v1118 = vadd.f32 0.0, %v1117
        %v1119 = vpop.f32.mrb[0].mxu0
        %1120 = vdwg.mxu0
        %v1121 = vsel %vm750, %v1059, -3.4028235e+38
        %v1122 = vsel %vm750, %v1062, -3.4028235e+38
        %v1123 = vsel %vm750, %v1067, -3.4028235e+38
        %v1124 = vsel %vm750, %v1070, -3.4028235e+38
        %v1125 = vsel %vm750, %v1075, -3.4028235e+38
        %v1126 = vsel %vm750, %v1078, -3.4028235e+38
        %v1127 = vsel %vm750, %v1083, -3.4028235e+38
        %v1128 = vsel %vm750, %v1086, -3.4028235e+38
        %v1129 = vsel %vm750, %v1091, -3.4028235e+38
        %v1130 = vsel %vm750, %v1094, -3.4028235e+38
        %v1131 = vsel %vm750, %v1099, -3.4028235e+38
        %v1132 = vsel %vm750, %v1102, -3.4028235e+38
        %v1133 = vsel %vm750, %v1107, -3.4028235e+38
        %v1134 = vsel %vm750, %v1110, -3.4028235e+38
        %v1135 = vsel %vm750, %v1115, -3.4028235e+38
        %v1136 = vsel %vm750, %v1118, -3.4028235e+38
        %1137 = vmax.xlane.f32.xlu0 %v1121
        %v1138 = vpop.xlane.xlu0 %1137
        %1139 = vmax.xlane.f32.xlu0 %v1122
        %v1140 = vpop.xlane.xlu0 %1139
        %1141 = vmax.xlane.f32.xlu0 %v1123
        %v1142 = vpop.xlane.xlu0 %1141
        %1143 = vmax.xlane.f32.xlu0 %v1124
        %v1144 = vpop.xlane.xlu0 %1143
        %1145 = vmax.xlane.f32.xlu0 %v1125
        %v1146 = vpop.xlane.xlu0 %1145
        %1147 = vmax.xlane.f32.xlu0 %v1126
        %v1148 = vpop.xlane.xlu0 %1147
        %1149 = vmax.xlane.f32.xlu0 %v1127
        %v1150 = vpop.xlane.xlu0 %1149
        %1151 = vmax.xlane.f32.xlu0 %v1128
        %v1152 = vpop.xlane.xlu0 %1151
        %1153 = vmax.xlane.f32.xlu0 %v1129
        %v1154 = vpop.xlane.xlu0 %1153
        %1155 = vmax.xlane.f32.xlu0 %v1130
        %v1156 = vpop.xlane.xlu0 %1155
        %1157 = vmax.xlane.f32.xlu0 %v1131
        %v1158 = vpop.xlane.xlu0 %1157
        %1159 = vmax.xlane.f32.xlu0 %v1132
        %v1160 = vpop.xlane.xlu0 %1159
        %1161 = vmax.xlane.f32.xlu0 %v1133
        %v1162 = vpop.xlane.xlu0 %1161
        %1163 = vmax.xlane.f32.xlu0 %v1134
        %v1164 = vpop.xlane.xlu0 %1163
        %1165 = vmax.xlane.f32.xlu0 %v1135
        %v1166 = vpop.xlane.xlu0 %1165
        %1167 = vmax.xlane.f32.xlu0 %v1136
        %v1168 = vpop.xlane.xlu0 %1167
        %v1169 = vsub.f32 %v1121, %v1138
        %v1170 = vsub.f32 %v1122, %v1140
        %v1171 = vsub.f32 %v1123, %v1142
        %v1172 = vsub.f32 %v1124, %v1144
        %v1173 = vsub.f32 %v1125, %v1146
        %v1174 = vsub.f32 %v1126, %v1148
        %v1175 = vsub.f32 %v1127, %v1150
        %v1176 = vsub.f32 %v1128, %v1152
        %v1177 = vsub.f32 %v1129, %v1154
        %v1178 = vsub.f32 %v1130, %v1156
        %v1179 = vsub.f32 %v1131, %v1158
        %v1180 = vsub.f32 %v1132, %v1160
        %v1181 = vsub.f32 %v1133, %v1162
        %v1182 = vsub.f32 %v1134, %v1164
        %v1183 = vsub.f32 %v1135, %v1166
        %v1184 = vsub.f32 %v1136, %v1168
        %v1185 = vmul.f32 %v1169, 1.442695
        %v1186 = vpow.pop %v1185
        %v1187 = vmul.f32 %v1170, 1.442695
        %v1188 = vpow.pop %v1187
        %v1189 = vmul.f32 %v1171, 1.442695
        %v1190 = vpow.pop %v1189
        %v1191 = vmul.f32 %v1172, 1.442695
        %v1192 = vpow.pop %v1191
        %v1193 = vmul.f32 %v1173, 1.442695
        %v1194 = vpow.pop %v1193
        %v1195 = vmul.f32 %v1174, 1.442695
        %v1196 = vpow.pop %v1195
        %v1197 = vmul.f32 %v1175, 1.442695
        %v1198 = vpow.pop %v1197
        %v1199 = vmul.f32 %v1176, 1.442695
        %v1200 = vpow.pop %v1199
        %v1201 = vmul.f32 %v1177, 1.442695
        %v1202 = vpow.pop %v1201
        %v1203 = vmul.f32 %v1178, 1.442695
        %v1204 = vpow.pop %v1203
        %v1205 = vmul.f32 %v1179, 1.442695
        %v1206 = vpow.pop %v1205
        %v1207 = vmul.f32 %v1180, 1.442695
        %v1208 = vpow.pop %v1207
        %v1209 = vmul.f32 %v1181, 1.442695
        %v1210 = vpow.pop %v1209
        %v1211 = vmul.f32 %v1182, 1.442695
        %v1212 = vpow.pop %v1211
        %v1213 = vmul.f32 %v1183, 1.442695
        %v1214 = vpow.pop %v1213
        %v1215 = vmul.f32 %v1184, 1.442695
        %v1216 = vpow.pop %v1215
        %1217 = vadd.xlane.f32.xlu0 %v1186
        %v1218 = vpop.xlane.xlu0 %1217
        %1219 = vadd.xlane.f32.xlu0 %v1188
        %v1220 = vpop.xlane.xlu0 %1219
        %1221 = vadd.xlane.f32.xlu0 %v1190
        %v1222 = vpop.xlane.xlu0 %1221
        %1223 = vadd.xlane.f32.xlu0 %v1192
        %v1224 = vpop.xlane.xlu0 %1223
        %1225 = vadd.xlane.f32.xlu0 %v1194
        %v1226 = vpop.xlane.xlu0 %1225
        %1227 = vadd.xlane.f32.xlu0 %v1196
        %v1228 = vpop.xlane.xlu0 %1227
        %1229 = vadd.xlane.f32.xlu0 %v1198
        %v1230 = vpop.xlane.xlu0 %1229
        %1231 = vadd.xlane.f32.xlu0 %v1200
        %v1232 = vpop.xlane.xlu0 %1231
        %1233 = vadd.xlane.f32.xlu0 %v1202
        %v1234 = vpop.xlane.xlu0 %1233
        %1235 = vadd.xlane.f32.xlu0 %v1204
        %v1236 = vpop.xlane.xlu0 %1235
        %1237 = vadd.xlane.f32.xlu0 %v1206
        %v1238 = vpop.xlane.xlu0 %1237
        %1239 = vadd.xlane.f32.xlu0 %v1208
        %v1240 = vpop.xlane.xlu0 %1239
        %1241 = vadd.xlane.f32.xlu0 %v1210
        %v1242 = vpop.xlane.xlu0 %1241
        %1243 = vadd.xlane.f32.xlu0 %v1212
        %v1244 = vpop.xlane.xlu0 %1243
        %1245 = vadd.xlane.f32.xlu0 %v1214
        %v1246 = vpop.xlane.xlu0 %1245
        %1247 = vadd.xlane.f32.xlu0 %v1216
        %v1248 = vpop.xlane.xlu0 %1247
        %v1249 = vmul.f32 %v1218, 5.656854
        %v1250 = vmul.f32 %v1220, 5.656854
        %v1251 = vmul.f32 %v1222, 5.656854
        %v1252 = vmul.f32 %v1224, 5.656854
        %v1253 = vmul.f32 %v1226, 5.656854
        %v1254 = vmul.f32 %v1228, 5.656854
        %v1255 = vmul.f32 %v1230, 5.656854
        %v1256 = vmul.f32 %v1232, 5.656854
        %v1257 = vmul.f32 %v1234, 5.656854
        %v1258 = vmul.f32 %v1236, 5.656854
        %v1259 = vmul.f32 %v1238, 5.656854
        %v1260 = vmul.f32 %v1240, 5.656854
        %v1261 = vmul.f32 %v1242, 5.656854
        %v1262 = vmul.f32 %v1244, 5.656854
        %v1263 = vmul.f32 %v1246, 5.656854
        %v1264 = vmul.f32 %v1248, 5.656854
        %v1265 = vrcp.pop %v1249
        %v1266 = vrcp.pop %v1250
        %v1267 = vrcp.pop %v1251
        %v1268 = vrcp.pop %v1252
        %v1269 = vrcp.pop %v1253
        %v1270 = vrcp.pop %v1254
        %v1271 = vrcp.pop %v1255
        %v1272 = vrcp.pop %v1256
        %v1273 = vrcp.pop %v1257
        %v1274 = vrcp.pop %v1258
        %v1275 = vrcp.pop %v1259
        %v1276 = vrcp.pop %v1260
        %v1277 = vrcp.pop %v1261
        %v1278 = vrcp.pop %v1262
        %v1279 = vrcp.pop %v1263
        %v1280 = vrcp.pop %v1264
        %v1281 = vmul.f32 %v1186, %v1265
        %v1282 = vmul.f32 %v1188, %v1266
        %v1283 = vmul.f32 %v1190, %v1267
        %v1284 = vmul.f32 %v1192, %v1268
        %v1285 = vmul.f32 %v1194, %v1269
        %v1286 = vmul.f32 %v1196, %v1270
        %v1287 = vmul.f32 %v1198, %v1271
        %v1288 = vmul.f32 %v1200, %v1272
        %v1289 = vmul.f32 %v1202, %v1273
        %v1290 = vmul.f32 %v1204, %v1274
        %v1291 = vmul.f32 %v1206, %v1275
        %v1292 = vmul.f32 %v1208, %v1276
        %v1293 = vmul.f32 %v1210, %v1277
        %v1294 = vmul.f32 %v1212, %v1278
        %v1295 = vmul.f32 %v1214, %v1279
        %v1296 = vmul.f32 %v1216, %v1280
        %v1297 = vpack.c.bf16 %v1282, %v1281
        %v1298 = vpack.c.bf16 %v1284, %v1283
        %v1299 = vpack.c.bf16 %v1286, %v1285
        %v1300 = vpack.c.bf16 %v1288, %v1287
        %v1301 = vpack.c.bf16 %v1290, %v1289
        %v1302 = vpack.c.bf16 %v1292, %v1291
        %v1303 = vpack.c.bf16 %v1294, %v1293
        %v1304 = vpack.c.bf16 %v1296, %v1295
        %v1306 = vrot.slane %v606, 2
        %1308 = vmatprep.subr.bf16.mxu0 0
        %1309 = vmatpush1.bf16.xpose.msra.mxu0 %v1297
        %1310 = vmatprep.subr.bf16.mxu0 0
        %1311 = vmatpush1.bf16.xpose.msra.mxu0 %v1298
        %1312 = vmatprep.subr.bf16.mxu0 0
        %1313 = vmatpush1.bf16.xpose.msra.mxu0 %v1299
        %1314 = vmatprep.subr.bf16.mxu0 0
        %1315 = vmatpush1.bf16.xpose.msra.mxu0 %v1300
        %1316 = vmatprep.subr.bf16.mxu0 0
        %1317 = vmatpush1.bf16.xpose.msra.mxu0 %v1301
        %1318 = vmatprep.subr.bf16.mxu0 0
        %1319 = vmatpush1.bf16.xpose.msra.mxu0 %v1302
        %1320 = vmatprep.subr.bf16.mxu0 0
        %1321 = vmatpush1.bf16.xpose.msra.mxu0 %v1303
        %1322 = vmatprep.subr.bf16.mxu0 0
        %1323 = vmatpush1.bf16.xpose.msra.mxu0 %v1304
        %1324 = vmatprep.subr.bf16.mxu0 0
        %1325 = vmatpush1.bf16.xpose.msra.mxu0 0
        %1326 = vmatprep.subr.bf16.mxu0 0
        %1327 = vmatpush1.bf16.xpose.msra.mxu0 0
        %1328 = vmatprep.subr.bf16.mxu0 0
        %1329 = vmatpush1.bf16.xpose.msra.mxu0 0
        %1330 = vmatprep.subr.bf16.mxu0 0
        %1331 = vmatpush1.bf16.xpose.msra.mxu0 0
        %1332 = vmatprep.subr.bf16.mxu0 0
        %1333 = vmatpush1.bf16.xpose.msra.mxu0 0
        %1334 = vmatprep.subr.bf16.mxu0 0
        %1335 = vmatpush1.bf16.xpose.msra.mxu0 0
        %1336 = vmatprep.subr.bf16.mxu0 0
        %1337 = vmatpush1.bf16.xpose.msra.mxu0 0
        %1338 = vmatprep.subr.bf16.mxu0 0
        %1339 = vmatpush1.bf16.xpose.msra.mxu0 0
        %1340 = vmatprep.mubr.bf16.mxu0 0
        %1341 = vmatmul.mubr.bf16.gmra.mrb[0].mxu0 %v1306
        %v1342 = vpop.f32.mrb[0].mxu0
        %v1343 = vadd.f32 0.0, %v1342
        %v1344 = vpop.f32.mrb[0].mxu0
        %v1345 = vpop.f32.mrb[0].mxu0
        %v1346 = vpop.f32.mrb[0].mxu0
        %1347 = vdwg.mxu0
        %v1348 = vpack.c.bf16 %v1343, %v1343
        %v1349 = vpack.c.bf16 %v558, %v558
        %v1350 = vpack.c.bf16 %v574, %v574
        %v1351 = vpack.c.bf16 %v590, %v590
        %1352 = vxpose.xlu0.c.b16.start [1/8] %v1349, 128
        %1353 = vxpose.xlu0.c.b16.cont [2/8] 0, 128
        %1354 = vxpose.xlu0.c.b16.cont [3/8] 0, 128
        %1355 = vxpose.xlu0.c.b16.cont [4/8] 0, 128
        %1356 = vxpose.xlu0.c.b16.cont [5/8] 0, 128
        %1357 = vxpose.xlu0.c.b16.cont [6/8] 0, 128
        %1358 = vxpose.xlu0.c.b16.cont [7/8] 0, 128
        %1359 = vxpose.xlu0.c.b16.end [8/8] 0, 128
        %v1360 = vpop.trf.xlu0
        %v1361 = vpop.trf.xlu0
        %v1362 = vpop.trf.xlu0
        %v1363 = vpop.trf.xlu0
        %v1364 = vpop.trf.xlu0
        %v1365 = vpop.trf.xlu0
        %v1366 = vpop.trf.xlu0
        %v1367 = vpop.trf.xlu0
        %v1369 = vsel %vm623, %v1360, 0
        %v1372 = vsel %vm623, %v1361, 0
        %v1375 = vsel %vm623, %v1362, 0
        %v1378 = vsel %vm623, %v1363, 0
        %v1381 = vsel %vm623, %v1364, 0
        %v1384 = vsel %vm623, %v1365, 0
        %v1387 = vsel %vm623, %v1366, 0
        %v1390 = vsel %vm623, %v1367, 0
        %v1393 = vsel %vm648, %v1350, 0
        %1395 = vmatprep.subr.bf16.mxu0 0
        %1396 = vmatpush1.bf16.msra.mxu0 %v1393
        %1397 = vmatprep.subr.bf16.mxu0 0
        %1398 = vmatpush1.bf16.msra.mxu0 0
        %1399 = vmatprep.subr.bf16.mxu0 0
        %1400 = vmatpush1.bf16.msra.mxu0 0
        %1401 = vmatprep.subr.bf16.mxu0 0
        %1402 = vmatpush1.bf16.msra.mxu0 0
        %1403 = vmatprep.subr.bf16.mxu0 0
        %1404 = vmatpush1.bf16.msra.mxu0 0
        %1405 = vmatprep.subr.bf16.mxu0 0
        %1406 = vmatpush1.bf16.msra.mxu0 0
        %1407 = vmatprep.subr.bf16.mxu0 0
        %1408 = vmatpush1.bf16.msra.mxu0 0
        %1409 = vmatprep.subr.bf16.mxu0 0
        %1410 = vmatpush1.bf16.msra.mxu0 0
        %1411 = vmatprep.subr.bf16.mxu0 0
        %1412 = vmatpush1.bf16.msra.mxu0 0
        %1413 = vmatprep.subr.bf16.mxu0 0
        %1414 = vmatpush1.bf16.msra.mxu0 0
        %1415 = vmatprep.subr.bf16.mxu0 0
        %1416 = vmatpush1.bf16.msra.mxu0 0
        %1417 = vmatprep.subr.bf16.mxu0 0
        %1418 = vmatpush1.bf16.msra.mxu0 0
        %1419 = vmatprep.subr.bf16.mxu0 0
        %1420 = vmatpush1.bf16.msra.mxu0 0
        %1421 = vmatprep.subr.bf16.mxu0 0
        %1422 = vmatpush1.bf16.msra.mxu0 0
        %1423 = vmatprep.subr.bf16.mxu0 0
        %1424 = vmatpush1.bf16.msra.mxu0 0
        %1425 = vmatprep.subr.bf16.mxu0 0
        %1426 = vmatpush1.bf16.msra.mxu0 0
        %1427 = vmatprep.mubr.bf16.mxu0 0
        %1428 = vmatmul.mubr.bf16.gmra.mrb[0].mxu0 %v1369
        %v1429 = vpop.f32.mrb[0].mxu0
        %v1430 = vadd.f32 0.0, %v1429
        %v1431 = vpop.f32.mrb[0].mxu0
        %v1432 = vpop.f32.mrb[0].mxu0
        %v1433 = vadd.f32 0.0, %v1432
        %v1434 = vpop.f32.mrb[0].mxu0
        %1435 = vmatprep.mubr.bf16.mxu0 0
        %1436 = vmatmul.mubr.bf16.gmra.mrb[0].mxu0 %v1372
        %v1437 = vpop.f32.mrb[0].mxu0
        %v1438 = vadd.f32 0.0, %v1437
        %v1439 = vpop.f32.mrb[0].mxu0
        %v1440 = vpop.f32.mrb[0].mxu0
        %v1441 = vadd.f32 0.0, %v1440
        %v1442 = vpop.f32.mrb[0].mxu0
        %1443 = vmatprep.mubr.bf16.mxu0 0
        %1444 = vmatmul.mubr.bf16.gmra.mrb[0].mxu0 %v1375
        %v1445 = vpop.f32.mrb[0].mxu0
        %v1446 = vadd.f32 0.0, %v1445
        %v1447 = vpop.f32.mrb[0].mxu0
        %v1448 = vpop.f32.mrb[0].mxu0
        %v1449 = vadd.f32 0.0, %v1448
        %v1450 = vpop.f32.mrb[0].mxu0
        %1451 = vmatprep.mubr.bf16.mxu0 0
        %1452 = vmatmul.mubr.bf16.gmra.mrb[0].mxu0 %v1378
        %v1453 = vpop.f32.mrb[0].mxu0
        %v1454 = vadd.f32 0.0, %v1453
        %v1455 = vpop.f32.mrb[0].mxu0
        %v1456 = vpop.f32.mrb[0].mxu0
        %v1457 = vadd.f32 0.0, %v1456
        %v1458 = vpop.f32.mrb[0].mxu0
        %1459 = vmatprep.mubr.bf16.mxu0 0
        %1460 = vmatmul.mubr.bf16.gmra.mrb[0].mxu0 %v1381
        %v1461 = vpop.f32.mrb[0].mxu0
        %v1462 = vadd.f32 0.0, %v1461
        %v1463 = vpop.f32.mrb[0].mxu0
        %v1464 = vpop.f32.mrb[0].mxu0
        %v1465 = vadd.f32 0.0, %v1464
        %v1466 = vpop.f32.mrb[0].mxu0
        %1467 = vmatprep.mubr.bf16.mxu0 0
        %1468 = vmatmul.mubr.bf16.gmra.mrb[0].mxu0 %v1384
        %v1469 = vpop.f32.mrb[0].mxu0
        %v1470 = vadd.f32 0.0, %v1469
        %v1471 = vpop.f32.mrb[0].mxu0
        %v1472 = vpop.f32.mrb[0].mxu0
        %v1473 = vadd.f32 0.0, %v1472
        %v1474 = vpop.f32.mrb[0].mxu0
        %1475 = vmatprep.mubr.bf16.mxu0 0
        %1476 = vmatmul.mubr.bf16.gmra.mrb[0].mxu0 %v1387
        %v1477 = vpop.f32.mrb[0].mxu0
        %v1478 = vadd.f32 0.0, %v1477
        %v1479 = vpop.f32.mrb[0].mxu0
        %v1480 = vpop.f32.mrb[0].mxu0
        %v1481 = vadd.f32 0.0, %v1480
        %v1482 = vpop.f32.mrb[0].mxu0
        %1483 = vmatprep.mubr.bf16.mxu0 0
        %1484 = vmatmul.mubr.bf16.gmra.mrb[0].mxu0 %v1390
        %v1485 = vpop.f32.mrb[0].mxu0
        %v1486 = vadd.f32 0.0, %v1485
        %v1487 = vpop.f32.mrb[0].mxu0
        %v1488 = vpop.f32.mrb[0].mxu0
        %v1489 = vadd.f32 0.0, %v1488
        %v1490 = vpop.f32.mrb[0].mxu0
        %1491 = vdwg.mxu0
        %v1492 = vsel %vm750, %v1430, -3.4028235e+38
        %v1493 = vsel %vm750, %v1433, -3.4028235e+38
        %v1494 = vsel %vm750, %v1438, -3.4028235e+38
        %v1495 = vsel %vm750, %v1441, -3.4028235e+38
        %v1496 = vsel %vm750, %v1446, -3.4028235e+38
        %v1497 = vsel %vm750, %v1449, -3.4028235e+38
        %v1498 = vsel %vm750, %v1454, -3.4028235e+38
        %v1499 = vsel %vm750, %v1457, -3.4028235e+38
        %v1500 = vsel %vm750, %v1462, -3.4028235e+38
        %v1501 = vsel %vm750, %v1465, -3.4028235e+38
        %v1502 = vsel %vm750, %v1470, -3.4028235e+38
        %v1503 = vsel %vm750, %v1473, -3.4028235e+38
        %v1504 = vsel %vm750, %v1478, -3.4028235e+38
        %v1505 = vsel %vm750, %v1481, -3.4028235e+38
        %v1506 = vsel %vm750, %v1486, -3.4028235e+38
        %v1507 = vsel %vm750, %v1489, -3.4028235e+38
        %1508 = vmax.xlane.f32.xlu0 %v1492
        %v1509 = vpop.xlane.xlu0 %1508
        %1510 = vmax.xlane.f32.xlu0 %v1493
        %v1511 = vpop.xlane.xlu0 %1510
        %1512 = vmax.xlane.f32.xlu0 %v1494
        %v1513 = vpop.xlane.xlu0 %1512
        %1514 = vmax.xlane.f32.xlu0 %v1495
        %v1515 = vpop.xlane.xlu0 %1514
        %1516 = vmax.xlane.f32.xlu0 %v1496
        %v1517 = vpop.xlane.xlu0 %1516
        %1518 = vmax.xlane.f32.xlu0 %v1497
        %v1519 = vpop.xlane.xlu0 %1518
        %1520 = vmax.xlane.f32.xlu0 %v1498
        %v1521 = vpop.xlane.xlu0 %1520
        %1522 = vmax.xlane.f32.xlu0 %v1499
        %v1523 = vpop.xlane.xlu0 %1522
        %1524 = vmax.xlane.f32.xlu0 %v1500
        %v1525 = vpop.xlane.xlu0 %1524
        %1526 = vmax.xlane.f32.xlu0 %v1501
        %v1527 = vpop.xlane.xlu0 %1526
        %1528 = vmax.xlane.f32.xlu0 %v1502
        %v1529 = vpop.xlane.xlu0 %1528
        %1530 = vmax.xlane.f32.xlu0 %v1503
        %v1531 = vpop.xlane.xlu0 %1530
        %1532 = vmax.xlane.f32.xlu0 %v1504
        %v1533 = vpop.xlane.xlu0 %1532
        %1534 = vmax.xlane.f32.xlu0 %v1505
        %v1535 = vpop.xlane.xlu0 %1534
        %1536 = vmax.xlane.f32.xlu0 %v1506
        %v1537 = vpop.xlane.xlu0 %1536
        %1538 = vmax.xlane.f32.xlu0 %v1507
        %v1539 = vpop.xlane.xlu0 %1538
        %v1540 = vsub.f32 %v1492, %v1509
        %v1541 = vsub.f32 %v1493, %v1511
        %v1542 = vsub.f32 %v1494, %v1513
        %v1543 = vsub.f32 %v1495, %v1515
        %v1544 = vsub.f32 %v1496, %v1517
        %v1545 = vsub.f32 %v1497, %v1519
        %v1546 = vsub.f32 %v1498, %v1521
        %v1547 = vsub.f32 %v1499, %v1523
        %v1548 = vsub.f32 %v1500, %v1525
        %v1549 = vsub.f32 %v1501, %v1527
        %v1550 = vsub.f32 %v1502, %v1529
        %v1551 = vsub.f32 %v1503, %v1531
        %v1552 = vsub.f32 %v1504, %v1533
        %v1553 = vsub.f32 %v1505, %v1535
        %v1554 = vsub.f32 %v1506, %v1537
        %v1555 = vsub.f32 %v1507, %v1539
        %v1556 = vmul.f32 %v1540, 1.442695
        %v1557 = vpow.pop %v1556
        %v1558 = vmul.f32 %v1541, 1.442695
        %v1559 = vpow.pop %v1558
        %v1560 = vmul.f32 %v1542, 1.442695
        %v1561 = vpow.pop %v1560
        %v1562 = vmul.f32 %v1543, 1.442695
        %v1563 = vpow.pop %v1562
        %v1564 = vmul.f32 %v1544, 1.442695
        %v1565 = vpow.pop %v1564
        %v1566 = vmul.f32 %v1545, 1.442695
        %v1567 = vpow.pop %v1566
        %v1568 = vmul.f32 %v1546, 1.442695
        %v1569 = vpow.pop %v1568
        %v1570 = vmul.f32 %v1547, 1.442695
        %v1571 = vpow.pop %v1570
        %v1572 = vmul.f32 %v1548, 1.442695
        %v1573 = vpow.pop %v1572
        %v1574 = vmul.f32 %v1549, 1.442695
        %v1575 = vpow.pop %v1574
        %v1576 = vmul.f32 %v1550, 1.442695
        %v1577 = vpow.pop %v1576
        %v1578 = vmul.f32 %v1551, 1.442695
        %v1579 = vpow.pop %v1578
        %v1580 = vmul.f32 %v1552, 1.442695
        %v1581 = vpow.pop %v1580
        %v1582 = vmul.f32 %v1553, 1.442695
        %v1583 = vpow.pop %v1582
        %v1584 = vmul.f32 %v1554, 1.442695
        %v1585 = vpow.pop %v1584
        %v1586 = vmul.f32 %v1555, 1.442695
        %v1587 = vpow.pop %v1586
        %1588 = vadd.xlane.f32.xlu0 %v1557
        %v1589 = vpop.xlane.xlu0 %1588
        %1590 = vadd.xlane.f32.xlu0 %v1559
        %v1591 = vpop.xlane.xlu0 %1590
        %1592 = vadd.xlane.f32.xlu0 %v1561
        %v1593 = vpop.xlane.xlu0 %1592
        %1594 = vadd.xlane.f32.xlu0 %v1563
        %v1595 = vpop.xlane.xlu0 %1594
        %1596 = vadd.xlane.f32.xlu0 %v1565
        %v1597 = vpop.xlane.xlu0 %1596
        %1598 = vadd.xlane.f32.xlu0 %v1567
        %v1599 = vpop.xlane.xlu0 %1598
        %1600 = vadd.xlane.f32.xlu0 %v1569
        %v1601 = vpop.xlane.xlu0 %1600
        %1602 = vadd.xlane.f32.xlu0 %v1571
        %v1603 = vpop.xlane.xlu0 %1602
        %1604 = vadd.xlane.f32.xlu0 %v1573
        %v1605 = vpop.xlane.xlu0 %1604
        %1606 = vadd.xlane.f32.xlu0 %v1575
        %v1607 = vpop.xlane.xlu0 %1606
        %1608 = vadd.xlane.f32.xlu0 %v1577
        %v1609 = vpop.xlane.xlu0 %1608
        %1610 = vadd.xlane.f32.xlu0 %v1579
        %v1611 = vpop.xlane.xlu0 %1610
        %1612 = vadd.xlane.f32.xlu0 %v1581
        %v1613 = vpop.xlane.xlu0 %1612
        %1614 = vadd.xlane.f32.xlu0 %v1583
        %v1615 = vpop.xlane.xlu0 %1614
        %1616 = vadd.xlane.f32.xlu0 %v1585
        %v1617 = vpop.xlane.xlu0 %1616
        %1618 = vadd.xlane.f32.xlu0 %v1587
        %v1619 = vpop.xlane.xlu0 %1618
        %v1620 = vmul.f32 %v1589, 5.656854
        %v1621 = vmul.f32 %v1591, 5.656854
        %v1622 = vmul.f32 %v1593, 5.656854
        %v1623 = vmul.f32 %v1595, 5.656854
        %v1624 = vmul.f32 %v1597, 5.656854
        %v1625 = vmul.f32 %v1599, 5.656854
        %v1626 = vmul.f32 %v1601, 5.656854
        %v1627 = vmul.f32 %v1603, 5.656854
        %v1628 = vmul.f32 %v1605, 5.656854
        %v1629 = vmul.f32 %v1607, 5.656854
        %v1630 = vmul.f32 %v1609, 5.656854
        %v1631 = vmul.f32 %v1611, 5.656854
        %v1632 = vmul.f32 %v1613, 5.656854
        %v1633 = vmul.f32 %v1615, 5.656854
        %v1634 = vmul.f32 %v1617, 5.656854
        %v1635 = vmul.f32 %v1619, 5.656854
        %v1636 = vrcp.pop %v1620
        %v1637 = vrcp.pop %v1621
        %v1638 = vrcp.pop %v1622
        %v1639 = vrcp.pop %v1623
        %v1640 = vrcp.pop %v1624
        %v1641 = vrcp.pop %v1625
        %v1642 = vrcp.pop %v1626
        %v1643 = vrcp.pop %v1627
        %v1644 = vrcp.pop %v1628
        %v1645 = vrcp.pop %v1629
        %v1646 = vrcp.pop %v1630
        %v1647 = vrcp.pop %v1631
        %v1648 = vrcp.pop %v1632
        %v1649 = vrcp.pop %v1633
        %v1650 = vrcp.pop %v1634
        %v1651 = vrcp.pop %v1635
        %v1652 = vmul.f32 %v1557, %v1636
        %v1653 = vmul.f32 %v1559, %v1637
        %v1654 = vmul.f32 %v1561, %v1638
        %v1655 = vmul.f32 %v1563, %v1639
        %v1656 = vmul.f32 %v1565, %v1640
        %v1657 = vmul.f32 %v1567, %v1641
        %v1658 = vmul.f32 %v1569, %v1642
        %v1659 = vmul.f32 %v1571, %v1643
        %v1660 = vmul.f32 %v1573, %v1644
        %v1661 = vmul.f32 %v1575, %v1645
        %v1662 = vmul.f32 %v1577, %v1646
        %v1663 = vmul.f32 %v1579, %v1647
        %v1664 = vmul.f32 %v1581, %v1648
        %v1665 = vmul.f32 %v1583, %v1649
        %v1666 = vmul.f32 %v1585, %v1650
        %v1667 = vmul.f32 %v1587, %v1651
        %v1668 = vpack.c.bf16 %v1653, %v1652
        %v1669 = vpack.c.bf16 %v1655, %v1654
        %v1670 = vpack.c.bf16 %v1657, %v1656
        %v1671 = vpack.c.bf16 %v1659, %v1658
        %v1672 = vpack.c.bf16 %v1661, %v1660
        %v1673 = vpack.c.bf16 %v1663, %v1662
        %v1674 = vpack.c.bf16 %v1665, %v1664
        %v1675 = vpack.c.bf16 %v1667, %v1666
        %1676 = vmatprep.subr.bf16.mxu0 0
        %1677 = vmatpush1.bf16.xpose.msra.mxu0 %v1668
        %1678 = vmatprep.subr.bf16.mxu0 0
        %1679 = vmatpush1.bf16.xpose.msra.mxu0 %v1669
        %1680 = vmatprep.subr.bf16.mxu0 0
        %1681 = vmatpush1.bf16.xpose.msra.mxu0 %v1670
        %1682 = vmatprep.subr.bf16.mxu0 0
        %1683 = vmatpush1.bf16.xpose.msra.mxu0 %v1671
        %1684 = vmatprep.subr.bf16.mxu0 0
        %1685 = vmatpush1.bf16.xpose.msra.mxu0 %v1672
        %1686 = vmatprep.subr.bf16.mxu0 0
        %1687 = vmatpush1.bf16.xpose.msra.mxu0 %v1673
        %1688 = vmatprep.subr.bf16.mxu0 0
        %1689 = vmatpush1.bf16.xpose.msra.mxu0 %v1674
        %1690 = vmatprep.subr.bf16.mxu0 0
        %1691 = vmatpush1.bf16.xpose.msra.mxu0 %v1675
        %1692 = vmatprep.subr.bf16.mxu0 0
        %1693 = vmatpush1.bf16.xpose.msra.mxu0 0
        %1694 = vmatprep.subr.bf16.mxu0 0
        %1695 = vmatpush1.bf16.xpose.msra.mxu0 0
        %1696 = vmatprep.subr.bf16.mxu0 0
        %1697 = vmatpush1.bf16.xpose.msra.mxu0 0
        %1698 = vmatprep.subr.bf16.mxu0 0
        %1699 = vmatpush1.bf16.xpose.msra.mxu0 0
        %1700 = vmatprep.subr.bf16.mxu0 0
        %1701 = vmatpush1.bf16.xpose.msra.mxu0 0
        %1702 = vmatprep.subr.bf16.mxu0 0
        %1703 = vmatpush1.bf16.xpose.msra.mxu0 0
        %1704 = vmatprep.subr.bf16.mxu0 0
        %1705 = vmatpush1.bf16.xpose.msra.mxu0 0
        %1706 = vmatprep.subr.bf16.mxu0 0
        %1707 = vmatpush1.bf16.xpose.msra.mxu0 0
        %1708 = vmatprep.mubr.bf16.mxu0 0
        %1709 = vmatmul.mubr.bf16.gmra.mrb[0].mxu0 %v1351
        %v1710 = vpop.f32.mrb[0].mxu0
        %v1711 = vadd.f32 0.0, %v1710
        %v1712 = vpop.f32.mrb[0].mxu0
        %v1713 = vpop.f32.mrb[0].mxu0
        %v1714 = vpop.f32.mrb[0].mxu0
        %1715 = vdwg.mxu0
        %v1716 = vpack.c.bf16 %v1711, %v1711
        %v1718 = vrot.slane %v1349, 2
        %1720 = vxpose.xlu0.c.b16.start [1/8] %v1718, 128
        %1721 = vxpose.xlu0.c.b16.cont [2/8] 0, 128
        %1722 = vxpose.xlu0.c.b16.cont [3/8] 0, 128
        %1723 = vxpose.xlu0.c.b16.cont [4/8] 0, 128
        %1724 = vxpose.xlu0.c.b16.cont [5/8] 0, 128
        %1725 = vxpose.xlu0.c.b16.cont [6/8] 0, 128
        %1726 = vxpose.xlu0.c.b16.cont [7/8] 0, 128
        %1727 = vxpose.xlu0.c.b16.end [8/8] 0, 128
        %v1728 = vpop.trf.xlu0
        %v1729 = vpop.trf.xlu0
        %v1730 = vpop.trf.xlu0
        %v1731 = vpop.trf.xlu0
        %v1732 = vpop.trf.xlu0
        %v1733 = vpop.trf.xlu0
        %v1734 = vpop.trf.xlu0
        %v1735 = vpop.trf.xlu0
        %v1737 = vrot.slane %v1350, 2
        %v1739 = vsel %vm623, %v1728, 0
        %v1742 = vsel %vm623, %v1729, 0
        %v1745 = vsel %vm623, %v1730, 0
        %v1748 = vsel %vm623, %v1731, 0
        %v1751 = vsel %vm623, %v1732, 0
        %v1754 = vsel %vm623, %v1733, 0
        %v1757 = vsel %vm623, %v1734, 0
        %v1760 = vsel %vm623, %v1735, 0
        %v1763 = vsel %vm648, %v1737, 0
        %1765 = vmatprep.subr.bf16.mxu0 0
        %1766 = vmatpush1.bf16.msra.mxu0 %v1763
        %1767 = vmatprep.subr.bf16.mxu0 0
        %1768 = vmatpush1.bf16.msra.mxu0 0
        %1769 = vmatprep.subr.bf16.mxu0 0
        %1770 = vmatpush1.bf16.msra.mxu0 0
        %1771 = vmatprep.subr.bf16.mxu0 0
        %1772 = vmatpush1.bf16.msra.mxu0 0
        %1773 = vmatprep.subr.bf16.mxu0 0
        %1774 = vmatpush1.bf16.msra.mxu0 0
        %1775 = vmatprep.subr.bf16.mxu0 0
        %1776 = vmatpush1.bf16.msra.mxu0 0
        %1777 = vmatprep.subr.bf16.mxu0 0
        %1778 = vmatpush1.bf16.msra.mxu0 0
        %1779 = vmatprep.subr.bf16.mxu0 0
        %1780 = vmatpush1.bf16.msra.mxu0 0
        %1781 = vmatprep.subr.bf16.mxu0 0
        %1782 = vmatpush1.bf16.msra.mxu0 0
        %1783 = vmatprep.subr.bf16.mxu0 0
        %1784 = vmatpush1.bf16.msra.mxu0 0
        %1785 = vmatprep.subr.bf16.mxu0 0
        %1786 = vmatpush1.bf16.msra.mxu0 0
        %1787 = vmatprep.subr.bf16.mxu0 0
        %1788 = vmatpush1.bf16.msra.mxu0 0
        %1789 = vmatprep.subr.bf16.mxu0 0
        %1790 = vmatpush1.bf16.msra.mxu0 0
        %1791 = vmatprep.subr.bf16.mxu0 0
        %1792 = vmatpush1.bf16.msra.mxu0 0
        %1793 = vmatprep.subr.bf16.mxu0 0
        %1794 = vmatpush1.bf16.msra.mxu0 0
        %1795 = vmatprep.subr.bf16.mxu0 0
        %1796 = vmatpush1.bf16.msra.mxu0 0
        %1797 = vmatprep.mubr.bf16.mxu0 0
        %1798 = vmatmul.mubr.bf16.gmra.mrb[0].mxu0 %v1739
        %v1799 = vpop.f32.mrb[0].mxu0
        %v1800 = vadd.f32 0.0, %v1799
        %v1801 = vpop.f32.mrb[0].mxu0
        %v1802 = vpop.f32.mrb[0].mxu0
        %v1803 = vadd.f32 0.0, %v1802
        %v1804 = vpop.f32.mrb[0].mxu0
        %1805 = vmatprep.mubr.bf16.mxu0 0
        %1806 = vmatmul.mubr.bf16.gmra.mrb[0].mxu0 %v1742
        %v1807 = vpop.f32.mrb[0].mxu0
        %v1808 = vadd.f32 0.0, %v1807
        %v1809 = vpop.f32.mrb[0].mxu0
        %v1810 = vpop.f32.mrb[0].mxu0
        %v1811 = vadd.f32 0.0, %v1810
        %v1812 = vpop.f32.mrb[0].mxu0
        %1813 = vmatprep.mubr.bf16.mxu0 0
        %1814 = vmatmul.mubr.bf16.gmra.mrb[0].mxu0 %v1745
        %v1815 = vpop.f32.mrb[0].mxu0
        %v1816 = vadd.f32 0.0, %v1815
        %v1817 = vpop.f32.mrb[0].mxu0
        %v1818 = vpop.f32.mrb[0].mxu0
        %v1819 = vadd.f32 0.0, %v1818
        %v1820 = vpop.f32.mrb[0].mxu0
        %1821 = vmatprep.mubr.bf16.mxu0 0
        %1822 = vmatmul.mubr.bf16.gmra.mrb[0].mxu0 %v1748
        %v1823 = vpop.f32.mrb[0].mxu0
        %v1824 = vadd.f32 0.0, %v1823
        %v1825 = vpop.f32.mrb[0].mxu0
        %v1826 = vpop.f32.mrb[0].mxu0
        %v1827 = vadd.f32 0.0, %v1826
        %v1828 = vpop.f32.mrb[0].mxu0
        %1829 = vmatprep.mubr.bf16.mxu0 0
        %1830 = vmatmul.mubr.bf16.gmra.mrb[0].mxu0 %v1751
        %v1831 = vpop.f32.mrb[0].mxu0
        %v1832 = vadd.f32 0.0, %v1831
        %v1833 = vpop.f32.mrb[0].mxu0
        %v1834 = vpop.f32.mrb[0].mxu0
        %v1835 = vadd.f32 0.0, %v1834
        %v1836 = vpop.f32.mrb[0].mxu0
        %1837 = vmatprep.mubr.bf16.mxu0 0
        %1838 = vmatmul.mubr.bf16.gmra.mrb[0].mxu0 %v1754
        %v1839 = vpop.f32.mrb[0].mxu0
        %v1840 = vadd.f32 0.0, %v1839
        %v1841 = vpop.f32.mrb[0].mxu0
        %v1842 = vpop.f32.mrb[0].mxu0
        %v1843 = vadd.f32 0.0, %v1842
        %v1844 = vpop.f32.mrb[0].mxu0
        %1845 = vmatprep.mubr.bf16.mxu0 0
        %1846 = vmatmul.mubr.bf16.gmra.mrb[0].mxu0 %v1757
        %v1847 = vpop.f32.mrb[0].mxu0
        %v1848 = vadd.f32 0.0, %v1847
        %v1849 = vpop.f32.mrb[0].mxu0
        %v1850 = vpop.f32.mrb[0].mxu0
        %v1851 = vadd.f32 0.0, %v1850
        %v1852 = vpop.f32.mrb[0].mxu0
        %1853 = vmatprep.mubr.bf16.mxu0 0
        %1854 = vmatmul.mubr.bf16.gmra.mrb[0].mxu0 %v1760
        %v1855 = vpop.f32.mrb[0].mxu0
        %v1856 = vadd.f32 0.0, %v1855
        %v1857 = vpop.f32.mrb[0].mxu0
        %v1858 = vpop.f32.mrb[0].mxu0
        %v1859 = vadd.f32 0.0, %v1858
        %v1860 = vpop.f32.mrb[0].mxu0
        %1861 = vdwg.mxu0
        %v1862 = vsel %vm750, %v1800, -3.4028235e+38
        %v1863 = vsel %vm750, %v1803, -3.4028235e+38
        %v1864 = vsel %vm750, %v1808, -3.4028235e+38
        %v1865 = vsel %vm750, %v1811, -3.4028235e+38
        %v1866 = vsel %vm750, %v1816, -3.4028235e+38
        %v1867 = vsel %vm750, %v1819, -3.4028235e+38
        %v1868 = vsel %vm750, %v1824, -3.4028235e+38
        %v1869 = vsel %vm750, %v1827, -3.4028235e+38
        %v1870 = vsel %vm750, %v1832, -3.4028235e+38
        %v1871 = vsel %vm750, %v1835, -3.4028235e+38
        %v1872 = vsel %vm750, %v1840, -3.4028235e+38
        %v1873 = vsel %vm750, %v1843, -3.4028235e+38
        %v1874 = vsel %vm750, %v1848, -3.4028235e+38
        %v1875 = vsel %vm750, %v1851, -3.4028235e+38
        %v1876 = vsel %vm750, %v1856, -3.4028235e+38
        %v1877 = vsel %vm750, %v1859, -3.4028235e+38
        %1878 = vmax.xlane.f32.xlu0 %v1862
        %v1879 = vpop.xlane.xlu0 %1878
        %1880 = vmax.xlane.f32.xlu0 %v1863
        %v1881 = vpop.xlane.xlu0 %1880
        %1882 = vmax.xlane.f32.xlu0 %v1864
        %v1883 = vpop.xlane.xlu0 %1882
        %1884 = vmax.xlane.f32.xlu0 %v1865
        %v1885 = vpop.xlane.xlu0 %1884
        %1886 = vmax.xlane.f32.xlu0 %v1866
        %v1887 = vpop.xlane.xlu0 %1886
        %1888 = vmax.xlane.f32.xlu0 %v1867
        %v1889 = vpop.xlane.xlu0 %1888
        %1890 = vmax.xlane.f32.xlu0 %v1868
        %v1891 = vpop.xlane.xlu0 %1890
        %1892 = vmax.xlane.f32.xlu0 %v1869
        %v1893 = vpop.xlane.xlu0 %1892
        %1894 = vmax.xlane.f32.xlu0 %v1870
        %v1895 = vpop.xlane.xlu0 %1894
        %1896 = vmax.xlane.f32.xlu0 %v1871
        %v1897 = vpop.xlane.xlu0 %1896
        %1898 = vmax.xlane.f32.xlu0 %v1872
        %v1899 = vpop.xlane.xlu0 %1898
        %1900 = vmax.xlane.f32.xlu0 %v1873
        %v1901 = vpop.xlane.xlu0 %1900
        %1902 = vmax.xlane.f32.xlu0 %v1874
        %v1903 = vpop.xlane.xlu0 %1902
        %1904 = vmax.xlane.f32.xlu0 %v1875
        %v1905 = vpop.xlane.xlu0 %1904
        %1906 = vmax.xlane.f32.xlu0 %v1876
        %v1907 = vpop.xlane.xlu0 %1906
        %1908 = vmax.xlane.f32.xlu0 %v1877
        %v1909 = vpop.xlane.xlu0 %1908
        %v1910 = vsub.f32 %v1862, %v1879
        %v1911 = vsub.f32 %v1863, %v1881
        %v1912 = vsub.f32 %v1864, %v1883
        %v1913 = vsub.f32 %v1865, %v1885
        %v1914 = vsub.f32 %v1866, %v1887
        %v1915 = vsub.f32 %v1867, %v1889
        %v1916 = vsub.f32 %v1868, %v1891
        %v1917 = vsub.f32 %v1869, %v1893
        %v1918 = vsub.f32 %v1870, %v1895
        %v1919 = vsub.f32 %v1871, %v1897
        %v1920 = vsub.f32 %v1872, %v1899
        %v1921 = vsub.f32 %v1873, %v1901
        %v1922 = vsub.f32 %v1874, %v1903
        %v1923 = vsub.f32 %v1875, %v1905
        %v1924 = vsub.f32 %v1876, %v1907
        %v1925 = vsub.f32 %v1877, %v1909
        %v1926 = vmul.f32 %v1910, 1.442695
        %v1927 = vpow.pop %v1926
        %v1928 = vmul.f32 %v1911, 1.442695
        %v1929 = vpow.pop %v1928
        %v1930 = vmul.f32 %v1912, 1.442695
        %v1931 = vpow.pop %v1930
        %v1932 = vmul.f32 %v1913, 1.442695
        %v1933 = vpow.pop %v1932
        %v1934 = vmul.f32 %v1914, 1.442695
        %v1935 = vpow.pop %v1934
        %v1936 = vmul.f32 %v1915, 1.442695
        %v1937 = vpow.pop %v1936
        %v1938 = vmul.f32 %v1916, 1.442695
        %v1939 = vpow.pop %v1938
        %v1940 = vmul.f32 %v1917, 1.442695
        %v1941 = vpow.pop %v1940
        %v1942 = vmul.f32 %v1918, 1.442695
        %v1943 = vpow.pop %v1942
        %v1944 = vmul.f32 %v1919, 1.442695
        %v1945 = vpow.pop %v1944
        %v1946 = vmul.f32 %v1920, 1.442695
        %v1947 = vpow.pop %v1946
        %v1948 = vmul.f32 %v1921, 1.442695
        %v1949 = vpow.pop %v1948
        %v1950 = vmul.f32 %v1922, 1.442695
        %v1951 = vpow.pop %v1950
        %v1952 = vmul.f32 %v1923, 1.442695
        %v1953 = vpow.pop %v1952
        %v1954 = vmul.f32 %v1924, 1.442695
        %v1955 = vpow.pop %v1954
        %v1956 = vmul.f32 %v1925, 1.442695
        %v1957 = vpow.pop %v1956
        %1958 = vadd.xlane.f32.xlu0 %v1927
        %v1959 = vpop.xlane.xlu0 %1958
        %1960 = vadd.xlane.f32.xlu0 %v1929
        %v1961 = vpop.xlane.xlu0 %1960
        %1962 = vadd.xlane.f32.xlu0 %v1931
        %v1963 = vpop.xlane.xlu0 %1962
        %1964 = vadd.xlane.f32.xlu0 %v1933
        %v1965 = vpop.xlane.xlu0 %1964
        %1966 = vadd.xlane.f32.xlu0 %v1935
        %v1967 = vpop.xlane.xlu0 %1966
        %1968 = vadd.xlane.f32.xlu0 %v1937
        %v1969 = vpop.xlane.xlu0 %1968
        %1970 = vadd.xlane.f32.xlu0 %v1939
        %v1971 = vpop.xlane.xlu0 %1970
        %1972 = vadd.xlane.f32.xlu0 %v1941
        %v1973 = vpop.xlane.xlu0 %1972
        %1974 = vadd.xlane.f32.xlu0 %v1943
        %v1975 = vpop.xlane.xlu0 %1974
        %1976 = vadd.xlane.f32.xlu0 %v1945
        %v1977 = vpop.xlane.xlu0 %1976
        %1978 = vadd.xlane.f32.xlu0 %v1947
        %v1979 = vpop.xlane.xlu0 %1978
        %1980 = vadd.xlane.f32.xlu0 %v1949
        %v1981 = vpop.xlane.xlu0 %1980
        %1982 = vadd.xlane.f32.xlu0 %v1951
        %v1983 = vpop.xlane.xlu0 %1982
        %1984 = vadd.xlane.f32.xlu0 %v1953
        %v1985 = vpop.xlane.xlu0 %1984
        %1986 = vadd.xlane.f32.xlu0 %v1955
        %v1987 = vpop.xlane.xlu0 %1986
        %1988 = vadd.xlane.f32.xlu0 %v1957
        %v1989 = vpop.xlane.xlu0 %1988
        %v1990 = vmul.f32 %v1959, 5.656854
        %v1991 = vmul.f32 %v1961, 5.656854
        %v1992 = vmul.f32 %v1963, 5.656854
        %v1993 = vmul.f32 %v1965, 5.656854
        %v1994 = vmul.f32 %v1967, 5.656854
        %v1995 = vmul.f32 %v1969, 5.656854
        %v1996 = vmul.f32 %v1971, 5.656854
        %v1997 = vmul.f32 %v1973, 5.656854
        %v1998 = vmul.f32 %v1975, 5.656854
        %v1999 = vmul.f32 %v1977, 5.656854
        %v2000 = vmul.f32 %v1979, 5.656854
        %v2001 = vmul.f32 %v1981, 5.656854
        %v2002 = vmul.f32 %v1983, 5.656854
        %v2003 = vmul.f32 %v1985, 5.656854
        %v2004 = vmul.f32 %v1987, 5.656854
        %v2005 = vmul.f32 %v1989, 5.656854
        %v2006 = vrcp.pop %v1990
        %v2007 = vrcp.pop %v1991
        %v2008 = vrcp.pop %v1992
        %v2009 = vrcp.pop %v1993
        %v2010 = vrcp.pop %v1994
        %v2011 = vrcp.pop %v1995
        %v2012 = vrcp.pop %v1996
        %v2013 = vrcp.pop %v1997
        %v2014 = vrcp.pop %v1998
        %v2015 = vrcp.pop %v1999
        %v2016 = vrcp.pop %v2000
        %v2017 = vrcp.pop %v2001
        %v2018 = vrcp.pop %v2002
        %v2019 = vrcp.pop %v2003
        %v2020 = vrcp.pop %v2004
        %v2021 = vrcp.pop %v2005
        %v2022 = vmul.f32 %v1927, %v2006
        %v2023 = vmul.f32 %v1929, %v2007
        %v2024 = vmul.f32 %v1931, %v2008
        %v2025 = vmul.f32 %v1933, %v2009
        %v2026 = vmul.f32 %v1935, %v2010
        %v2027 = vmul.f32 %v1937, %v2011
        %v2028 = vmul.f32 %v1939, %v2012
        %v2029 = vmul.f32 %v1941, %v2013
        %v2030 = vmul.f32 %v1943, %v2014
        %v2031 = vmul.f32 %v1945, %v2015
        %v2032 = vmul.f32 %v1947, %v2016
        %v2033 = vmul.f32 %v1949, %v2017
        %v2034 = vmul.f32 %v1951, %v2018
        %v2035 = vmul.f32 %v1953, %v2019
        %v2036 = vmul.f32 %v1955, %v2020
        %v2037 = vmul.f32 %v1957, %v2021
        %v2038 = vpack.c.bf16 %v2023, %v2022
        %v2039 = vpack.c.bf16 %v2025, %v2024
        %v2040 = vpack.c.bf16 %v2027, %v2026
        %v2041 = vpack.c.bf16 %v2029, %v2028
        %v2042 = vpack.c.bf16 %v2031, %v2030
        %v2043 = vpack.c.bf16 %v2033, %v2032
        %v2044 = vpack.c.bf16 %v2035, %v2034
        %v2045 = vpack.c.bf16 %v2037, %v2036
        %v2047 = vrot.slane %v1351, 2
        %2049 = vmatprep.subr.bf16.mxu0 0
        %2050 = vmatpush1.bf16.xpose.msra.mxu0 %v2038
        %2051 = vmatprep.subr.bf16.mxu0 0
        %2052 = vmatpush1.bf16.xpose.msra.mxu0 %v2039
        %2053 = vmatprep.subr.bf16.mxu0 0
        %2054 = vmatpush1.bf16.xpose.msra.mxu0 %v2040
        %2055 = vmatprep.subr.bf16.mxu0 0
        %2056 = vmatpush1.bf16.xpose.msra.mxu0 %v2041
        %2057 = vmatprep.subr.bf16.mxu0 0
        %2058 = vmatpush1.bf16.xpose.msra.mxu0 %v2042
        %2059 = vmatprep.subr.bf16.mxu0 0
        %2060 = vmatpush1.bf16.xpose.msra.mxu0 %v2043
        %2061 = vmatprep.subr.bf16.mxu0 0
        %2062 = vmatpush1.bf16.xpose.msra.mxu0 %v2044
        %2063 = vmatprep.subr.bf16.mxu0 0
        %2064 = vmatpush1.bf16.xpose.msra.mxu0 %v2045
        %2065 = vmatprep.subr.bf16.mxu0 0
        %2066 = vmatpush1.bf16.xpose.msra.mxu0 0
        %2067 = vmatprep.subr.bf16.mxu0 0
        %2068 = vmatpush1.bf16.xpose.msra.mxu0 0
        %2069 = vmatprep.subr.bf16.mxu0 0
        %2070 = vmatpush1.bf16.xpose.msra.mxu0 0
        %2071 = vmatprep.subr.bf16.mxu0 0
        %2072 = vmatpush1.bf16.xpose.msra.mxu0 0
        %2073 = vmatprep.subr.bf16.mxu0 0
        %2074 = vmatpush1.bf16.xpose.msra.mxu0 0
        %2075 = vmatprep.subr.bf16.mxu0 0
        %2076 = vmatpush1.bf16.xpose.msra.mxu0 0
        %2077 = vmatprep.subr.bf16.mxu0 0
        %2078 = vmatpush1.bf16.xpose.msra.mxu0 0
        %2079 = vmatprep.subr.bf16.mxu0 0
        %2080 = vmatpush1.bf16.xpose.msra.mxu0 0
        %2081 = vmatprep.mubr.bf16.mxu0 0
        %2082 = vmatmul.mubr.bf16.gmra.mrb[0].mxu0 %v2047
        %v2083 = vpop.f32.mrb[0].mxu0
        %v2084 = vadd.f32 0.0, %v2083
        %v2085 = vpop.f32.mrb[0].mxu0
        %v2086 = vpop.f32.mrb[0].mxu0
        %v2087 = vpop.f32.mrb[0].mxu0
        %2088 = vdwg.mxu0
        %v2089 = vpack.c.bf16 %v2084, %v2084
        %v2090 = vpack.c.bf16 %v563, %v563
        %v2091 = vpack.c.bf16 %v579, %v579
        %v2092 = vpack.c.bf16 %v595, %v595
        %2093 = vxpose.xlu0.c.b16.start [1/8] %v2090, 128
        %2094 = vxpose.xlu0.c.b16.cont [2/8] 0, 128
        %2095 = vxpose.xlu0.c.b16.cont [3/8] 0, 128
        %2096 = vxpose.xlu0.c.b16.cont [4/8] 0, 128
        %2097 = vxpose.xlu0.c.b16.cont [5/8] 0, 128
        %2098 = vxpose.xlu0.c.b16.cont [6/8] 0, 128
        %2099 = vxpose.xlu0.c.b16.cont [7/8] 0, 128
        %2100 = vxpose.xlu0.c.b16.end [8/8] 0, 128
        %v2101 = vpop.trf.xlu0
        %v2102 = vpop.trf.xlu0
        %v2103 = vpop.trf.xlu0
        %v2104 = vpop.trf.xlu0
        %v2105 = vpop.trf.xlu0
        %v2106 = vpop.trf.xlu0
        %v2107 = vpop.trf.xlu0
        %v2108 = vpop.trf.xlu0
        %v2110 = vsel %vm623, %v2101, 0
        %v2113 = vsel %vm623, %v2102, 0
        %v2116 = vsel %vm623, %v2103, 0
        %v2119 = vsel %vm623, %v2104, 0
        %v2122 = vsel %vm623, %v2105, 0
        %v2125 = vsel %vm623, %v2106, 0
        %v2128 = vsel %vm623, %v2107, 0
        %v2131 = vsel %vm623, %v2108, 0
        %v2134 = vsel %vm648, %v2091, 0
        %2136 = vmatprep.subr.bf16.mxu0 0
        %2137 = vmatpush1.bf16.msra.mxu0 %v2134
        %2138 = vmatprep.subr.bf16.mxu0 0
        %2139 = vmatpush1.bf16.msra.mxu0 0
        %2140 = vmatprep.subr.bf16.mxu0 0
        %2141 = vmatpush1.bf16.msra.mxu0 0
        %2142 = vmatprep.subr.bf16.mxu0 0
        %2143 = vmatpush1.bf16.msra.mxu0 0
        %2144 = vmatprep.subr.bf16.mxu0 0
        %2145 = vmatpush1.bf16.msra.mxu0 0
        %2146 = vmatprep.subr.bf16.mxu0 0
        %2147 = vmatpush1.bf16.msra.mxu0 0
        %2148 = vmatprep.subr.bf16.mxu0 0
        %2149 = vmatpush1.bf16.msra.mxu0 0
        %2150 = vmatprep.subr.bf16.mxu0 0
        %2151 = vmatpush1.bf16.msra.mxu0 0
        %2152 = vmatprep.subr.bf16.mxu0 0
        %2153 = vmatpush1.bf16.msra.mxu0 0
        %2154 = vmatprep.subr.bf16.mxu0 0
        %2155 = vmatpush1.bf16.msra.mxu0 0
        %2156 = vmatprep.subr.bf16.mxu0 0
        %2157 = vmatpush1.bf16.msra.mxu0 0
        %2158 = vmatprep.subr.bf16.mxu0 0
        %2159 = vmatpush1.bf16.msra.mxu0 0
        %2160 = vmatprep.subr.bf16.mxu0 0
        %2161 = vmatpush1.bf16.msra.mxu0 0
        %2162 = vmatprep.subr.bf16.mxu0 0
        %2163 = vmatpush1.bf16.msra.mxu0 0
        %2164 = vmatprep.subr.bf16.mxu0 0
        %2165 = vmatpush1.bf16.msra.mxu0 0
        %2166 = vmatprep.subr.bf16.mxu0 0
        %2167 = vmatpush1.bf16.msra.mxu0 0
        %2168 = vmatprep.mubr.bf16.mxu0 0
        %2169 = vmatmul.mubr.bf16.gmra.mrb[0].mxu0 %v2110
        %v2170 = vpop.f32.mrb[0].mxu0
        %v2171 = vadd.f32 0.0, %v2170
        %v2172 = vpop.f32.mrb[0].mxu0
        %v2173 = vpop.f32.mrb[0].mxu0
        %v2174 = vadd.f32 0.0, %v2173
        %v2175 = vpop.f32.mrb[0].mxu0
        %2176 = vmatprep.mubr.bf16.mxu0 0
        %2177 = vmatmul.mubr.bf16.gmra.mrb[0].mxu0 %v2113
        %v2178 = vpop.f32.mrb[0].mxu0
        %v2179 = vadd.f32 0.0, %v2178
        %v2180 = vpop.f32.mrb[0].mxu0
        %v2181 = vpop.f32.mrb[0].mxu0
        %v2182 = vadd.f32 0.0, %v2181
        %v2183 = vpop.f32.mrb[0].mxu0
        %2184 = vmatprep.mubr.bf16.mxu0 0
        %2185 = vmatmul.mubr.bf16.gmra.mrb[0].mxu0 %v2116
        %v2186 = vpop.f32.mrb[0].mxu0
        %v2187 = vadd.f32 0.0, %v2186
        %v2188 = vpop.f32.mrb[0].mxu0
        %v2189 = vpop.f32.mrb[0].mxu0
        %v2190 = vadd.f32 0.0, %v2189
        %v2191 = vpop.f32.mrb[0].mxu0
        %2192 = vmatprep.mubr.bf16.mxu0 0
        %2193 = vmatmul.mubr.bf16.gmra.mrb[0].mxu0 %v2119
        %v2194 = vpop.f32.mrb[0].mxu0
        %v2195 = vadd.f32 0.0, %v2194
        %v2196 = vpop.f32.mrb[0].mxu0
        %v2197 = vpop.f32.mrb[0].mxu0
        %v2198 = vadd.f32 0.0, %v2197
        %v2199 = vpop.f32.mrb[0].mxu0
        %2200 = vmatprep.mubr.bf16.mxu0 0
        %2201 = vmatmul.mubr.bf16.gmra.mrb[0].mxu0 %v2122
        %v2202 = vpop.f32.mrb[0].mxu0
        %v2203 = vadd.f32 0.0, %v2202
        %v2204 = vpop.f32.mrb[0].mxu0
        %v2205 = vpop.f32.mrb[0].mxu0
        %v2206 = vadd.f32 0.0, %v2205
        %v2207 = vpop.f32.mrb[0].mxu0
        %2208 = vmatprep.mubr.bf16.mxu0 0
        %2209 = vmatmul.mubr.bf16.gmra.mrb[0].mxu0 %v2125
        %v2210 = vpop.f32.mrb[0].mxu0
        %v2211 = vadd.f32 0.0, %v2210
        %v2212 = vpop.f32.mrb[0].mxu0
        %v2213 = vpop.f32.mrb[0].mxu0
        %v2214 = vadd.f32 0.0, %v2213
        %v2215 = vpop.f32.mrb[0].mxu0
        %2216 = vmatprep.mubr.bf16.mxu0 0
        %2217 = vmatmul.mubr.bf16.gmra.mrb[0].mxu0 %v2128
        %v2218 = vpop.f32.mrb[0].mxu0
        %v2219 = vadd.f32 0.0, %v2218
        %v2220 = vpop.f32.mrb[0].mxu0
        %v2221 = vpop.f32.mrb[0].mxu0
        %v2222 = vadd.f32 0.0, %v2221
        %v2223 = vpop.f32.mrb[0].mxu0
        %2224 = vmatprep.mubr.bf16.mxu0 0
        %2225 = vmatmul.mubr.bf16.gmra.mrb[0].mxu0 %v2131
        %v2226 = vpop.f32.mrb[0].mxu0
        %v2227 = vadd.f32 0.0, %v2226
        %v2228 = vpop.f32.mrb[0].mxu0
        %v2229 = vpop.f32.mrb[0].mxu0
        %v2230 = vadd.f32 0.0, %v2229
        %v2231 = vpop.f32.mrb[0].mxu0
        %2232 = vdwg.mxu0
        %v2233 = vsel %vm750, %v2171, -3.4028235e+38
        %v2234 = vsel %vm750, %v2174, -3.4028235e+38
        %v2235 = vsel %vm750, %v2179, -3.4028235e+38
        %v2236 = vsel %vm750, %v2182, -3.4028235e+38
        %v2237 = vsel %vm750, %v2187, -3.4028235e+38
        %v2238 = vsel %vm750, %v2190, -3.4028235e+38
        %v2239 = vsel %vm750, %v2195, -3.4028235e+38
        %v2240 = vsel %vm750, %v2198, -3.4028235e+38
        %v2241 = vsel %vm750, %v2203, -3.4028235e+38
        %v2242 = vsel %vm750, %v2206, -3.4028235e+38
        %v2243 = vsel %vm750, %v2211, -3.4028235e+38
        %v2244 = vsel %vm750, %v2214, -3.4028235e+38
        %v2245 = vsel %vm750, %v2219, -3.4028235e+38
        %v2246 = vsel %vm750, %v2222, -3.4028235e+38
        %v2247 = vsel %vm750, %v2227, -3.4028235e+38
        %v2248 = vsel %vm750, %v2230, -3.4028235e+38
        %2249 = vmax.xlane.f32.xlu0 %v2233
        %v2250 = vpop.xlane.xlu0 %2249
        %2251 = vmax.xlane.f32.xlu0 %v2234
        %v2252 = vpop.xlane.xlu0 %2251
        %2253 = vmax.xlane.f32.xlu0 %v2235
        %v2254 = vpop.xlane.xlu0 %2253
        %2255 = vmax.xlane.f32.xlu0 %v2236
        %v2256 = vpop.xlane.xlu0 %2255
        %2257 = vmax.xlane.f32.xlu0 %v2237
        %v2258 = vpop.xlane.xlu0 %2257
        %2259 = vmax.xlane.f32.xlu0 %v2238
        %v2260 = vpop.xlane.xlu0 %2259
        %2261 = vmax.xlane.f32.xlu0 %v2239
        %v2262 = vpop.xlane.xlu0 %2261
        %2263 = vmax.xlane.f32.xlu0 %v2240
        %v2264 = vpop.xlane.xlu0 %2263
        %2265 = vmax.xlane.f32.xlu0 %v2241
        %v2266 = vpop.xlane.xlu0 %2265
        %2267 = vmax.xlane.f32.xlu0 %v2242
        %v2268 = vpop.xlane.xlu0 %2267
        %2269 = vmax.xlane.f32.xlu0 %v2243
        %v2270 = vpop.xlane.xlu0 %2269
        %2271 = vmax.xlane.f32.xlu0 %v2244
        %v2272 = vpop.xlane.xlu0 %2271
        %2273 = vmax.xlane.f32.xlu0 %v2245
        %v2274 = vpop.xlane.xlu0 %2273
        %2275 = vmax.xlane.f32.xlu0 %v2246
        %v2276 = vpop.xlane.xlu0 %2275
        %2277 = vmax.xlane.f32.xlu0 %v2247
        %v2278 = vpop.xlane.xlu0 %2277
        %2279 = vmax.xlane.f32.xlu0 %v2248
        %v2280 = vpop.xlane.xlu0 %2279
        %v2281 = vsub.f32 %v2233, %v2250
        %v2282 = vsub.f32 %v2234, %v2252
        %v2283 = vsub.f32 %v2235, %v2254
        %v2284 = vsub.f32 %v2236, %v2256
        %v2285 = vsub.f32 %v2237, %v2258
        %v2286 = vsub.f32 %v2238, %v2260
        %v2287 = vsub.f32 %v2239, %v2262
        %v2288 = vsub.f32 %v2240, %v2264
        %v2289 = vsub.f32 %v2241, %v2266
        %v2290 = vsub.f32 %v2242, %v2268
        %v2291 = vsub.f32 %v2243, %v2270
        %v2292 = vsub.f32 %v2244, %v2272
        %v2293 = vsub.f32 %v2245, %v2274
        %v2294 = vsub.f32 %v2246, %v2276
        %v2295 = vsub.f32 %v2247, %v2278
        %v2296 = vsub.f32 %v2248, %v2280
        %v2297 = vmul.f32 %v2281, 1.442695
        %v2298 = vpow.pop %v2297
        %v2299 = vmul.f32 %v2282, 1.442695
        %v2300 = vpow.pop %v2299
        %v2301 = vmul.f32 %v2283, 1.442695
        %v2302 = vpow.pop %v2301
        %v2303 = vmul.f32 %v2284, 1.442695
        %v2304 = vpow.pop %v2303
        %v2305 = vmul.f32 %v2285, 1.442695
        %v2306 = vpow.pop %v2305
        %v2307 = vmul.f32 %v2286, 1.442695
        %v2308 = vpow.pop %v2307
        %v2309 = vmul.f32 %v2287, 1.442695
        %v2310 = vpow.pop %v2309
        %v2311 = vmul.f32 %v2288, 1.442695
        %v2312 = vpow.pop %v2311
        %v2313 = vmul.f32 %v2289, 1.442695
        %v2314 = vpow.pop %v2313
        %v2315 = vmul.f32 %v2290, 1.442695
        %v2316 = vpow.pop %v2315
        %v2317 = vmul.f32 %v2291, 1.442695
        %v2318 = vpow.pop %v2317
        %v2319 = vmul.f32 %v2292, 1.442695
        %v2320 = vpow.pop %v2319
        %v2321 = vmul.f32 %v2293, 1.442695
        %v2322 = vpow.pop %v2321
        %v2323 = vmul.f32 %v2294, 1.442695
        %v2324 = vpow.pop %v2323
        %v2325 = vmul.f32 %v2295, 1.442695
        %v2326 = vpow.pop %v2325
        %v2327 = vmul.f32 %v2296, 1.442695
        %v2328 = vpow.pop %v2327
        %2329 = vadd.xlane.f32.xlu0 %v2298
        %v2330 = vpop.xlane.xlu0 %2329
        %2331 = vadd.xlane.f32.xlu0 %v2300
        %v2332 = vpop.xlane.xlu0 %2331
        %2333 = vadd.xlane.f32.xlu0 %v2302
        %v2334 = vpop.xlane.xlu0 %2333
        %2335 = vadd.xlane.f32.xlu0 %v2304
        %v2336 = vpop.xlane.xlu0 %2335
        %2337 = vadd.xlane.f32.xlu0 %v2306
        %v2338 = vpop.xlane.xlu0 %2337
        %2339 = vadd.xlane.f32.xlu0 %v2308
        %v2340 = vpop.xlane.xlu0 %2339
        %2341 = vadd.xlane.f32.xlu0 %v2310
        %v2342 = vpop.xlane.xlu0 %2341
        %2343 = vadd.xlane.f32.xlu0 %v2312
        %v2344 = vpop.xlane.xlu0 %2343
        %2345 = vadd.xlane.f32.xlu0 %v2314
        %v2346 = vpop.xlane.xlu0 %2345
        %2347 = vadd.xlane.f32.xlu0 %v2316
        %v2348 = vpop.xlane.xlu0 %2347
        %2349 = vadd.xlane.f32.xlu0 %v2318
        %v2350 = vpop.xlane.xlu0 %2349
        %2351 = vadd.xlane.f32.xlu0 %v2320
        %v2352 = vpop.xlane.xlu0 %2351
        %2353 = vadd.xlane.f32.xlu0 %v2322
        %v2354 = vpop.xlane.xlu0 %2353
        %2355 = vadd.xlane.f32.xlu0 %v2324
        %v2356 = vpop.xlane.xlu0 %2355
        %2357 = vadd.xlane.f32.xlu0 %v2326
        %v2358 = vpop.xlane.xlu0 %2357
        %2359 = vadd.xlane.f32.xlu0 %v2328
        %v2360 = vpop.xlane.xlu0 %2359
        %v2361 = vmul.f32 %v2330, 5.656854
        %v2362 = vmul.f32 %v2332, 5.656854
        %v2363 = vmul.f32 %v2334, 5.656854
        %v2364 = vmul.f32 %v2336, 5.656854
        %v2365 = vmul.f32 %v2338, 5.656854
        %v2366 = vmul.f32 %v2340, 5.656854
        %v2367 = vmul.f32 %v2342, 5.656854
        %v2368 = vmul.f32 %v2344, 5.656854
        %v2369 = vmul.f32 %v2346, 5.656854
        %v2370 = vmul.f32 %v2348, 5.656854
        %v2371 = vmul.f32 %v2350, 5.656854
        %v2372 = vmul.f32 %v2352, 5.656854
        %v2373 = vmul.f32 %v2354, 5.656854
        %v2374 = vmul.f32 %v2356, 5.656854
        %v2375 = vmul.f32 %v2358, 5.656854
        %v2376 = vmul.f32 %v2360, 5.656854
        %v2377 = vrcp.pop %v2361
        %v2378 = vrcp.pop %v2362
        %v2379 = vrcp.pop %v2363
        %v2380 = vrcp.pop %v2364
        %v2381 = vrcp.pop %v2365
        %v2382 = vrcp.pop %v2366
        %v2383 = vrcp.pop %v2367
        %v2384 = vrcp.pop %v2368
        %v2385 = vrcp.pop %v2369
        %v2386 = vrcp.pop %v2370
        %v2387 = vrcp.pop %v2371
        %v2388 = vrcp.pop %v2372
        %v2389 = vrcp.pop %v2373
        %v2390 = vrcp.pop %v2374
        %v2391 = vrcp.pop %v2375
        %v2392 = vrcp.pop %v2376
        %v2393 = vmul.f32 %v2298, %v2377
        %v2394 = vmul.f32 %v2300, %v2378
        %v2395 = vmul.f32 %v2302, %v2379
        %v2396 = vmul.f32 %v2304, %v2380
        %v2397 = vmul.f32 %v2306, %v2381
        %v2398 = vmul.f32 %v2308, %v2382
        %v2399 = vmul.f32 %v2310, %v2383
        %v2400 = vmul.f32 %v2312, %v2384
        %v2401 = vmul.f32 %v2314, %v2385
        %v2402 = vmul.f32 %v2316, %v2386
        %v2403 = vmul.f32 %v2318, %v2387
        %v2404 = vmul.f32 %v2320, %v2388
        %v2405 = vmul.f32 %v2322, %v2389
        %v2406 = vmul.f32 %v2324, %v2390
        %v2407 = vmul.f32 %v2326, %v2391
        %v2408 = vmul.f32 %v2328, %v2392
        %v2409 = vpack.c.bf16 %v2394, %v2393
        %v2410 = vpack.c.bf16 %v2396, %v2395
        %v2411 = vpack.c.bf16 %v2398, %v2397
        %v2412 = vpack.c.bf16 %v2400, %v2399
        %v2413 = vpack.c.bf16 %v2402, %v2401
        %v2414 = vpack.c.bf16 %v2404, %v2403
        %v2415 = vpack.c.bf16 %v2406, %v2405
        %v2416 = vpack.c.bf16 %v2408, %v2407
        %2417 = vmatprep.subr.bf16.mxu0 0
        %2418 = vmatpush1.bf16.xpose.msra.mxu0 %v2409
        %2419 = vmatprep.subr.bf16.mxu0 0
        %2420 = vmatpush1.bf16.xpose.msra.mxu0 %v2410
        %2421 = vmatprep.subr.bf16.mxu0 0
        %2422 = vmatpush1.bf16.xpose.msra.mxu0 %v2411
        %2423 = vmatprep.subr.bf16.mxu0 0
        %2424 = vmatpush1.bf16.xpose.msra.mxu0 %v2412
        %2425 = vmatprep.subr.bf16.mxu0 0
        %2426 = vmatpush1.bf16.xpose.msra.mxu0 %v2413
        %2427 = vmatprep.subr.bf16.mxu0 0
        %2428 = vmatpush1.bf16.xpose.msra.mxu0 %v2414
        %2429 = vmatprep.subr.bf16.mxu0 0
        %2430 = vmatpush1.bf16.xpose.msra.mxu0 %v2415
        %2431 = vmatprep.subr.bf16.mxu0 0
        %2432 = vmatpush1.bf16.xpose.msra.mxu0 %v2416
        %2433 = vmatprep.subr.bf16.mxu0 0
        %2434 = vmatpush1.bf16.xpose.msra.mxu0 0
        %2435 = vmatprep.subr.bf16.mxu0 0
        %2436 = vmatpush1.bf16.xpose.msra.mxu0 0
        %2437 = vmatprep.subr.bf16.mxu0 0
        %2438 = vmatpush1.bf16.xpose.msra.mxu0 0
        %2439 = vmatprep.subr.bf16.mxu0 0
        %2440 = vmatpush1.bf16.xpose.msra.mxu0 0
        %2441 = vmatprep.subr.bf16.mxu0 0
        %2442 = vmatpush1.bf16.xpose.msra.mxu0 0
        %2443 = vmatprep.subr.bf16.mxu0 0
        %2444 = vmatpush1.bf16.xpose.msra.mxu0 0
        %2445 = vmatprep.subr.bf16.mxu0 0
        %2446 = vmatpush1.bf16.xpose.msra.mxu0 0
        %2447 = vmatprep.subr.bf16.mxu0 0
        %2448 = vmatpush1.bf16.xpose.msra.mxu0 0
        %2449 = vmatprep.mubr.bf16.mxu0 0
        %2450 = vmatmul.mubr.bf16.gmra.mrb[0].mxu0 %v2092
        %v2451 = vpop.f32.mrb[0].mxu0
        %v2452 = vadd.f32 0.0, %v2451
        %v2453 = vpop.f32.mrb[0].mxu0
        %v2454 = vpop.f32.mrb[0].mxu0
        %v2455 = vpop.f32.mrb[0].mxu0
        %2456 = vdwg.mxu0
        %v2457 = vpack.c.bf16 %v2452, %v2452
        %v2459 = vrot.slane %v2090, 2
        %2461 = vxpose.xlu0.c.b16.start [1/8] %v2459, 128
        %2462 = vxpose.xlu0.c.b16.cont [2/8] 0, 128
        %2463 = vxpose.xlu0.c.b16.cont [3/8] 0, 128
        %2464 = vxpose.xlu0.c.b16.cont [4/8] 0, 128
        %2465 = vxpose.xlu0.c.b16.cont [5/8] 0, 128
        %2466 = vxpose.xlu0.c.b16.cont [6/8] 0, 128
        %2467 = vxpose.xlu0.c.b16.cont [7/8] 0, 128
        %2468 = vxpose.xlu0.c.b16.end [8/8] 0, 128
        %v2469 = vpop.trf.xlu0
        %v2470 = vpop.trf.xlu0
        %v2471 = vpop.trf.xlu0
        %v2472 = vpop.trf.xlu0
        %v2473 = vpop.trf.xlu0
        %v2474 = vpop.trf.xlu0
        %v2475 = vpop.trf.xlu0
        %v2476 = vpop.trf.xlu0
        %v2478 = vrot.slane %v2091, 2
        %v2480 = vsel %vm623, %v2469, 0
        %v2483 = vsel %vm623, %v2470, 0
        %v2486 = vsel %vm623, %v2471, 0
        %v2489 = vsel %vm623, %v2472, 0
        %v2492 = vsel %vm623, %v2473, 0
        %v2495 = vsel %vm623, %v2474, 0
        %v2498 = vsel %vm623, %v2475, 0
        %v2501 = vsel %vm623, %v2476, 0
        %v2504 = vsel %vm648, %v2478, 0
        %2506 = vmatprep.subr.bf16.mxu0 0
        %2507 = vmatpush1.bf16.msra.mxu0 %v2504
        %2508 = vmatprep.subr.bf16.mxu0 0
        %2509 = vmatpush1.bf16.msra.mxu0 0
        %2510 = vmatprep.subr.bf16.mxu0 0
        %2511 = vmatpush1.bf16.msra.mxu0 0
        %2512 = vmatprep.subr.bf16.mxu0 0
        %2513 = vmatpush1.bf16.msra.mxu0 0
        %2514 = vmatprep.subr.bf16.mxu0 0
        %2515 = vmatpush1.bf16.msra.mxu0 0
        %2516 = vmatprep.subr.bf16.mxu0 0
        %2517 = vmatpush1.bf16.msra.mxu0 0
        %2518 = vmatprep.subr.bf16.mxu0 0
        %2519 = vmatpush1.bf16.msra.mxu0 0
        %2520 = vmatprep.subr.bf16.mxu0 0
        %2521 = vmatpush1.bf16.msra.mxu0 0
        %2522 = vmatprep.subr.bf16.mxu0 0
        %2523 = vmatpush1.bf16.msra.mxu0 0
        %2524 = vmatprep.subr.bf16.mxu0 0
        %2525 = vmatpush1.bf16.msra.mxu0 0
        %2526 = vmatprep.subr.bf16.mxu0 0
        %2527 = vmatpush1.bf16.msra.mxu0 0
        %2528 = vmatprep.subr.bf16.mxu0 0
        %2529 = vmatpush1.bf16.msra.mxu0 0
        %2530 = vmatprep.subr.bf16.mxu0 0
        %2531 = vmatpush1.bf16.msra.mxu0 0
        %2532 = vmatprep.subr.bf16.mxu0 0
        %2533 = vmatpush1.bf16.msra.mxu0 0
        %2534 = vmatprep.subr.bf16.mxu0 0
        %2535 = vmatpush1.bf16.msra.mxu0 0
        %2536 = vmatprep.subr.bf16.mxu0 0
        %2537 = vmatpush1.bf16.msra.mxu0 0
        %2538 = vmatprep.mubr.bf16.mxu0 0
        %2539 = vmatmul.mubr.bf16.gmra.mrb[0].mxu0 %v2480
        %v2540 = vpop.f32.mrb[0].mxu0
        %v2541 = vadd.f32 0.0, %v2540
        %v2542 = vpop.f32.mrb[0].mxu0
        %v2543 = vpop.f32.mrb[0].mxu0
        %v2544 = vadd.f32 0.0, %v2543
        %v2545 = vpop.f32.mrb[0].mxu0
        %2546 = vmatprep.mubr.bf16.mxu0 0
        %2547 = vmatmul.mubr.bf16.gmra.mrb[0].mxu0 %v2483
        %v2548 = vpop.f32.mrb[0].mxu0
        %v2549 = vadd.f32 0.0, %v2548
        %v2550 = vpop.f32.mrb[0].mxu0
        %v2551 = vpop.f32.mrb[0].mxu0
        %v2552 = vadd.f32 0.0, %v2551
        %v2553 = vpop.f32.mrb[0].mxu0
        %2554 = vmatprep.mubr.bf16.mxu0 0
        %2555 = vmatmul.mubr.bf16.gmra.mrb[0].mxu0 %v2486
        %v2556 = vpop.f32.mrb[0].mxu0
        %v2557 = vadd.f32 0.0, %v2556
        %v2558 = vpop.f32.mrb[0].mxu0
        %v2559 = vpop.f32.mrb[0].mxu0
        %v2560 = vadd.f32 0.0, %v2559
        %v2561 = vpop.f32.mrb[0].mxu0
        %2562 = vmatprep.mubr.bf16.mxu0 0
        %2563 = vmatmul.mubr.bf16.gmra.mrb[0].mxu0 %v2489
        %v2564 = vpop.f32.mrb[0].mxu0
        %v2565 = vadd.f32 0.0, %v2564
        %v2566 = vpop.f32.mrb[0].mxu0
        %v2567 = vpop.f32.mrb[0].mxu0
        %v2568 = vadd.f32 0.0, %v2567
        %v2569 = vpop.f32.mrb[0].mxu0
        %2570 = vmatprep.mubr.bf16.mxu0 0
        %2571 = vmatmul.mubr.bf16.gmra.mrb[0].mxu0 %v2492
        %v2572 = vpop.f32.mrb[0].mxu0
        %v2573 = vadd.f32 0.0, %v2572
        %v2574 = vpop.f32.mrb[0].mxu0
        %v2575 = vpop.f32.mrb[0].mxu0
        %v2576 = vadd.f32 0.0, %v2575
        %v2577 = vpop.f32.mrb[0].mxu0
        %2578 = vmatprep.mubr.bf16.mxu0 0
        %2579 = vmatmul.mubr.bf16.gmra.mrb[0].mxu0 %v2495
        %v2580 = vpop.f32.mrb[0].mxu0
        %v2581 = vadd.f32 0.0, %v2580
        %v2582 = vpop.f32.mrb[0].mxu0
        %v2583 = vpop.f32.mrb[0].mxu0
        %v2584 = vadd.f32 0.0, %v2583
        %v2585 = vpop.f32.mrb[0].mxu0
        %2586 = vmatprep.mubr.bf16.mxu0 0
        %2587 = vmatmul.mubr.bf16.gmra.mrb[0].mxu0 %v2498
        %v2588 = vpop.f32.mrb[0].mxu0
        %v2589 = vadd.f32 0.0, %v2588
        %v2590 = vpop.f32.mrb[0].mxu0
        %v2591 = vpop.f32.mrb[0].mxu0
        %v2592 = vadd.f32 0.0, %v2591
        %v2593 = vpop.f32.mrb[0].mxu0
        %2594 = vmatprep.mubr.bf16.mxu0 0
        %2595 = vmatmul.mubr.bf16.gmra.mrb[0].mxu0 %v2501
        %v2596 = vpop.f32.mrb[0].mxu0
        %v2597 = vadd.f32 0.0, %v2596
        %v2598 = vpop.f32.mrb[0].mxu0
        %v2599 = vpop.f32.mrb[0].mxu0
        %v2600 = vadd.f32 0.0, %v2599
        %v2601 = vpop.f32.mrb[0].mxu0
        %2602 = vdwg.mxu0
        %v2603 = vsel %vm750, %v2541, -3.4028235e+38
        %v2604 = vsel %vm750, %v2544, -3.4028235e+38
        %v2605 = vsel %vm750, %v2549, -3.4028235e+38
        %v2606 = vsel %vm750, %v2552, -3.4028235e+38
        %v2607 = vsel %vm750, %v2557, -3.4028235e+38
        %v2608 = vsel %vm750, %v2560, -3.4028235e+38
        %v2609 = vsel %vm750, %v2565, -3.4028235e+38
        %v2610 = vsel %vm750, %v2568, -3.4028235e+38
        %v2611 = vsel %vm750, %v2573, -3.4028235e+38
        %v2612 = vsel %vm750, %v2576, -3.4028235e+38
        %v2613 = vsel %vm750, %v2581, -3.4028235e+38
        %v2614 = vsel %vm750, %v2584, -3.4028235e+38
        %v2615 = vsel %vm750, %v2589, -3.4028235e+38
        %v2616 = vsel %vm750, %v2592, -3.4028235e+38
        %v2617 = vsel %vm750, %v2597, -3.4028235e+38
        %v2618 = vsel %vm750, %v2600, -3.4028235e+38
        %2619 = vmax.xlane.f32.xlu0 %v2603
        %v2620 = vpop.xlane.xlu0 %2619
        %2621 = vmax.xlane.f32.xlu0 %v2604
        %v2622 = vpop.xlane.xlu0 %2621
        %2623 = vmax.xlane.f32.xlu0 %v2605
        %v2624 = vpop.xlane.xlu0 %2623
        %2625 = vmax.xlane.f32.xlu0 %v2606
        %v2626 = vpop.xlane.xlu0 %2625
        %2627 = vmax.xlane.f32.xlu0 %v2607
        %v2628 = vpop.xlane.xlu0 %2627
        %2629 = vmax.xlane.f32.xlu0 %v2608
        %v2630 = vpop.xlane.xlu0 %2629
        %2631 = vmax.xlane.f32.xlu0 %v2609
        %v2632 = vpop.xlane.xlu0 %2631
        %2633 = vmax.xlane.f32.xlu0 %v2610
        %v2634 = vpop.xlane.xlu0 %2633
        %2635 = vmax.xlane.f32.xlu0 %v2611
        %v2636 = vpop.xlane.xlu0 %2635
        %2637 = vmax.xlane.f32.xlu0 %v2612
        %v2638 = vpop.xlane.xlu0 %2637
        %2639 = vmax.xlane.f32.xlu0 %v2613
        %v2640 = vpop.xlane.xlu0 %2639
        %2641 = vmax.xlane.f32.xlu0 %v2614
        %v2642 = vpop.xlane.xlu0 %2641
        %2643 = vmax.xlane.f32.xlu0 %v2615
        %v2644 = vpop.xlane.xlu0 %2643
        %2645 = vmax.xlane.f32.xlu0 %v2616
        %v2646 = vpop.xlane.xlu0 %2645
        %2647 = vmax.xlane.f32.xlu0 %v2617
        %v2648 = vpop.xlane.xlu0 %2647
        %2649 = vmax.xlane.f32.xlu0 %v2618
        %v2650 = vpop.xlane.xlu0 %2649
        %v2651 = vsub.f32 %v2603, %v2620
        %v2652 = vsub.f32 %v2604, %v2622
        %v2653 = vsub.f32 %v2605, %v2624
        %v2654 = vsub.f32 %v2606, %v2626
        %v2655 = vsub.f32 %v2607, %v2628
        %v2656 = vsub.f32 %v2608, %v2630
        %v2657 = vsub.f32 %v2609, %v2632
        %v2658 = vsub.f32 %v2610, %v2634
        %v2659 = vsub.f32 %v2611, %v2636
        %v2660 = vsub.f32 %v2612, %v2638
        %v2661 = vsub.f32 %v2613, %v2640
        %v2662 = vsub.f32 %v2614, %v2642
        %v2663 = vsub.f32 %v2615, %v2644
        %v2664 = vsub.f32 %v2616, %v2646
        %v2665 = vsub.f32 %v2617, %v2648
        %v2666 = vsub.f32 %v2618, %v2650
        %v2667 = vmul.f32 %v2651, 1.442695
        %v2668 = vpow.pop %v2667
        %v2669 = vmul.f32 %v2652, 1.442695
        %v2670 = vpow.pop %v2669
        %v2671 = vmul.f32 %v2653, 1.442695
        %v2672 = vpow.pop %v2671
        %v2673 = vmul.f32 %v2654, 1.442695
        %v2674 = vpow.pop %v2673
        %v2675 = vmul.f32 %v2655, 1.442695
        %v2676 = vpow.pop %v2675
        %v2677 = vmul.f32 %v2656, 1.442695
        %v2678 = vpow.pop %v2677
        %v2679 = vmul.f32 %v2657, 1.442695
        %v2680 = vpow.pop %v2679
        %v2681 = vmul.f32 %v2658, 1.442695
        %v2682 = vpow.pop %v2681
        %v2683 = vmul.f32 %v2659, 1.442695
        %v2684 = vpow.pop %v2683
        %v2685 = vmul.f32 %v2660, 1.442695
        %v2686 = vpow.pop %v2685
        %v2687 = vmul.f32 %v2661, 1.442695
        %v2688 = vpow.pop %v2687
        %v2689 = vmul.f32 %v2662, 1.442695
        %v2690 = vpow.pop %v2689
        %v2691 = vmul.f32 %v2663, 1.442695
        %v2692 = vpow.pop %v2691
        %v2693 = vmul.f32 %v2664, 1.442695
        %v2694 = vpow.pop %v2693
        %v2695 = vmul.f32 %v2665, 1.442695
        %v2696 = vpow.pop %v2695
        %v2697 = vmul.f32 %v2666, 1.442695
        %v2698 = vpow.pop %v2697
        %2699 = vadd.xlane.f32.xlu0 %v2668
        %v2700 = vpop.xlane.xlu0 %2699
        %2701 = vadd.xlane.f32.xlu0 %v2670
        %v2702 = vpop.xlane.xlu0 %2701
        %2703 = vadd.xlane.f32.xlu0 %v2672
        %v2704 = vpop.xlane.xlu0 %2703
        %2705 = vadd.xlane.f32.xlu0 %v2674
        %v2706 = vpop.xlane.xlu0 %2705
        %2707 = vadd.xlane.f32.xlu0 %v2676
        %v2708 = vpop.xlane.xlu0 %2707
        %2709 = vadd.xlane.f32.xlu0 %v2678
        %v2710 = vpop.xlane.xlu0 %2709
        %2711 = vadd.xlane.f32.xlu0 %v2680
        %v2712 = vpop.xlane.xlu0 %2711
        %2713 = vadd.xlane.f32.xlu0 %v2682
        %v2714 = vpop.xlane.xlu0 %2713
        %2715 = vadd.xlane.f32.xlu0 %v2684
        %v2716 = vpop.xlane.xlu0 %2715
        %2717 = vadd.xlane.f32.xlu0 %v2686
        %v2718 = vpop.xlane.xlu0 %2717
        %2719 = vadd.xlane.f32.xlu0 %v2688
        %v2720 = vpop.xlane.xlu0 %2719
        %2721 = vadd.xlane.f32.xlu0 %v2690
        %v2722 = vpop.xlane.xlu0 %2721
        %2723 = vadd.xlane.f32.xlu0 %v2692
        %v2724 = vpop.xlane.xlu0 %2723
        %2725 = vadd.xlane.f32.xlu0 %v2694
        %v2726 = vpop.xlane.xlu0 %2725
        %2727 = vadd.xlane.f32.xlu0 %v2696
        %v2728 = vpop.xlane.xlu0 %2727
        %2729 = vadd.xlane.f32.xlu0 %v2698
        %v2730 = vpop.xlane.xlu0 %2729
        %v2731 = vmul.f32 %v2700, 5.656854
        %v2732 = vmul.f32 %v2702, 5.656854
        %v2733 = vmul.f32 %v2704, 5.656854
        %v2734 = vmul.f32 %v2706, 5.656854
        %v2735 = vmul.f32 %v2708, 5.656854
        %v2736 = vmul.f32 %v2710, 5.656854
        %v2737 = vmul.f32 %v2712, 5.656854
        %v2738 = vmul.f32 %v2714, 5.656854
        %v2739 = vmul.f32 %v2716, 5.656854
        %v2740 = vmul.f32 %v2718, 5.656854
        %v2741 = vmul.f32 %v2720, 5.656854
        %v2742 = vmul.f32 %v2722, 5.656854
        %v2743 = vmul.f32 %v2724, 5.656854
        %v2744 = vmul.f32 %v2726, 5.656854
        %v2745 = vmul.f32 %v2728, 5.656854
        %v2746 = vmul.f32 %v2730, 5.656854
        %v2747 = vrcp.pop %v2731
        %v2748 = vrcp.pop %v2732
        %v2749 = vrcp.pop %v2733
        %v2750 = vrcp.pop %v2734
        %v2751 = vrcp.pop %v2735
        %v2752 = vrcp.pop %v2736
        %v2753 = vrcp.pop %v2737
        %v2754 = vrcp.pop %v2738
        %v2755 = vrcp.pop %v2739
        %v2756 = vrcp.pop %v2740
        %v2757 = vrcp.pop %v2741
        %v2758 = vrcp.pop %v2742
        %v2759 = vrcp.pop %v2743
        %v2760 = vrcp.pop %v2744
        %v2761 = vrcp.pop %v2745
        %v2762 = vrcp.pop %v2746
        %v2763 = vmul.f32 %v2668, %v2747
        %v2764 = vmul.f32 %v2670, %v2748
        %v2765 = vmul.f32 %v2672, %v2749
        %v2766 = vmul.f32 %v2674, %v2750
        %v2767 = vmul.f32 %v2676, %v2751
        %v2768 = vmul.f32 %v2678, %v2752
        %v2769 = vmul.f32 %v2680, %v2753
        %v2770 = vmul.f32 %v2682, %v2754
        %v2771 = vmul.f32 %v2684, %v2755
        %v2772 = vmul.f32 %v2686, %v2756
        %v2773 = vmul.f32 %v2688, %v2757
        %v2774 = vmul.f32 %v2690, %v2758
        %v2775 = vmul.f32 %v2692, %v2759
        %v2776 = vmul.f32 %v2694, %v2760
        %v2777 = vmul.f32 %v2696, %v2761
        %v2778 = vmul.f32 %v2698, %v2762
        %v2779 = vpack.c.bf16 %v2764, %v2763
        %v2780 = vpack.c.bf16 %v2766, %v2765
        %v2781 = vpack.c.bf16 %v2768, %v2767
        %v2782 = vpack.c.bf16 %v2770, %v2769
        %v2783 = vpack.c.bf16 %v2772, %v2771
        %v2784 = vpack.c.bf16 %v2774, %v2773
        %v2785 = vpack.c.bf16 %v2776, %v2775
        %v2786 = vpack.c.bf16 %v2778, %v2777
        %v2788 = vrot.slane %v2092, 2
        %2790 = vmatprep.subr.bf16.mxu0 0
        %2791 = vmatpush1.bf16.xpose.msra.mxu0 %v2779
        %2792 = vmatprep.subr.bf16.mxu0 0
        %2793 = vmatpush1.bf16.xpose.msra.mxu0 %v2780
        %2794 = vmatprep.subr.bf16.mxu0 0
        %2795 = vmatpush1.bf16.xpose.msra.mxu0 %v2781
        %2796 = vmatprep.subr.bf16.mxu0 0
        %2797 = vmatpush1.bf16.xpose.msra.mxu0 %v2782
        %2798 = vmatprep.subr.bf16.mxu0 0
        %2799 = vmatpush1.bf16.xpose.msra.mxu0 %v2783
        %2800 = vmatprep.subr.bf16.mxu0 0
        %2801 = vmatpush1.bf16.xpose.msra.mxu0 %v2784
        %2802 = vmatprep.subr.bf16.mxu0 0
        %2803 = vmatpush1.bf16.xpose.msra.mxu0 %v2785
        %2804 = vmatprep.subr.bf16.mxu0 0
        %2805 = vmatpush1.bf16.xpose.msra.mxu0 %v2786
        %2806 = vmatprep.subr.bf16.mxu0 0
        %2807 = vmatpush1.bf16.xpose.msra.mxu0 0
        %2808 = vmatprep.subr.bf16.mxu0 0
        %2809 = vmatpush1.bf16.xpose.msra.mxu0 0
        %2810 = vmatprep.subr.bf16.mxu0 0
        %2811 = vmatpush1.bf16.xpose.msra.mxu0 0
        %2812 = vmatprep.subr.bf16.mxu0 0
        %2813 = vmatpush1.bf16.xpose.msra.mxu0 0
        %2814 = vmatprep.subr.bf16.mxu0 0
        %2815 = vmatpush1.bf16.xpose.msra.mxu0 0
        %2816 = vmatprep.subr.bf16.mxu0 0
        %2817 = vmatpush1.bf16.xpose.msra.mxu0 0
        %2818 = vmatprep.subr.bf16.mxu0 0
        %2819 = vmatpush1.bf16.xpose.msra.mxu0 0
        %2820 = vmatprep.subr.bf16.mxu0 0
        %2821 = vmatpush1.bf16.xpose.msra.mxu0 0
        %2822 = vmatprep.mubr.bf16.mxu0 0
        %2823 = vmatmul.mubr.bf16.gmra.mrb[0].mxu0 %v2788
        %v2824 = vpop.f32.mrb[0].mxu0
        %v2825 = vadd.f32 0.0, %v2824
        %v2826 = vpop.f32.mrb[0].mxu0
        %v2827 = vpop.f32.mrb[0].mxu0
        %v2828 = vpop.f32.mrb[0].mxu0
        %2829 = vdwg.mxu0
        %v2830 = vpack.c.bf16 %v2825, %v2825
        %v2831 = vpack.c.bf16 %v566, %v566
        %v2832 = vpack.c.bf16 %v582, %v582
        %v2833 = vpack.c.bf16 %v598, %v598
        %2834 = vxpose.xlu0.c.b16.start [1/8] %v2831, 128
        %2835 = vxpose.xlu0.c.b16.cont [2/8] 0, 128
        %2836 = vxpose.xlu0.c.b16.cont [3/8] 0, 128
        %2837 = vxpose.xlu0.c.b16.cont [4/8] 0, 128
        %2838 = vxpose.xlu0.c.b16.cont [5/8] 0, 128
        %2839 = vxpose.xlu0.c.b16.cont [6/8] 0, 128
        %2840 = vxpose.xlu0.c.b16.cont [7/8] 0, 128
        %2841 = vxpose.xlu0.c.b16.end [8/8] 0, 128
        %v2842 = vpop.trf.xlu0
        %v2843 = vpop.trf.xlu0
        %v2844 = vpop.trf.xlu0
        %v2845 = vpop.trf.xlu0
        %v2846 = vpop.trf.xlu0
        %v2847 = vpop.trf.xlu0
        %v2848 = vpop.trf.xlu0
        %v2849 = vpop.trf.xlu0
        %v2851 = vsel %vm623, %v2842, 0
        %v2854 = vsel %vm623, %v2843, 0
        %v2857 = vsel %vm623, %v2844, 0
        %v2860 = vsel %vm623, %v2845, 0
        %v2863 = vsel %vm623, %v2846, 0
        %v2866 = vsel %vm623, %v2847, 0
        %v2869 = vsel %vm623, %v2848, 0
        %v2872 = vsel %vm623, %v2849, 0
        %v2875 = vsel %vm648, %v2832, 0
        %2877 = vmatprep.subr.bf16.mxu0 0
        %2878 = vmatpush1.bf16.msra.mxu0 %v2875
        %2879 = vmatprep.subr.bf16.mxu0 0
        %2880 = vmatpush1.bf16.msra.mxu0 0
        %2881 = vmatprep.subr.bf16.mxu0 0
        %2882 = vmatpush1.bf16.msra.mxu0 0
        %2883 = vmatprep.subr.bf16.mxu0 0
        %2884 = vmatpush1.bf16.msra.mxu0 0
        %2885 = vmatprep.subr.bf16.mxu0 0
        %2886 = vmatpush1.bf16.msra.mxu0 0
        %2887 = vmatprep.subr.bf16.mxu0 0
        %2888 = vmatpush1.bf16.msra.mxu0 0
        %2889 = vmatprep.subr.bf16.mxu0 0
        %2890 = vmatpush1.bf16.msra.mxu0 0
        %2891 = vmatprep.subr.bf16.mxu0 0
        %2892 = vmatpush1.bf16.msra.mxu0 0
        %2893 = vmatprep.subr.bf16.mxu0 0
        %2894 = vmatpush1.bf16.msra.mxu0 0
        %2895 = vmatprep.subr.bf16.mxu0 0
        %2896 = vmatpush1.bf16.msra.mxu0 0
        %2897 = vmatprep.subr.bf16.mxu0 0
        %2898 = vmatpush1.bf16.msra.mxu0 0
        %2899 = vmatprep.subr.bf16.mxu0 0
        %2900 = vmatpush1.bf16.msra.mxu0 0
        %2901 = vmatprep.subr.bf16.mxu0 0
        %2902 = vmatpush1.bf16.msra.mxu0 0
        %2903 = vmatprep.subr.bf16.mxu0 0
        %2904 = vmatpush1.bf16.msra.mxu0 0
        %2905 = vmatprep.subr.bf16.mxu0 0
        %2906 = vmatpush1.bf16.msra.mxu0 0
        %2907 = vmatprep.subr.bf16.mxu0 0
        %2908 = vmatpush1.bf16.msra.mxu0 0
        %2909 = vmatprep.mubr.bf16.mxu0 0
        %2910 = vmatmul.mubr.bf16.gmra.mrb[0].mxu0 %v2851
        %v2911 = vpop.f32.mrb[0].mxu0
        %v2912 = vadd.f32 0.0, %v2911
        %v2913 = vpop.f32.mrb[0].mxu0
        %v2914 = vpop.f32.mrb[0].mxu0
        %v2915 = vadd.f32 0.0, %v2914
        %v2916 = vpop.f32.mrb[0].mxu0
        %2917 = vmatprep.mubr.bf16.mxu0 0
        %2918 = vmatmul.mubr.bf16.gmra.mrb[0].mxu0 %v2854
        %v2919 = vpop.f32.mrb[0].mxu0
        %v2920 = vadd.f32 0.0, %v2919
        %v2921 = vpop.f32.mrb[0].mxu0
        %v2922 = vpop.f32.mrb[0].mxu0
        %v2923 = vadd.f32 0.0, %v2922
        %v2924 = vpop.f32.mrb[0].mxu0
        %2925 = vmatprep.mubr.bf16.mxu0 0
        %2926 = vmatmul.mubr.bf16.gmra.mrb[0].mxu0 %v2857
        %v2927 = vpop.f32.mrb[0].mxu0
        %v2928 = vadd.f32 0.0, %v2927
        %v2929 = vpop.f32.mrb[0].mxu0
        %v2930 = vpop.f32.mrb[0].mxu0
        %v2931 = vadd.f32 0.0, %v2930
        %v2932 = vpop.f32.mrb[0].mxu0
        %2933 = vmatprep.mubr.bf16.mxu0 0
        %2934 = vmatmul.mubr.bf16.gmra.mrb[0].mxu0 %v2860
        %v2935 = vpop.f32.mrb[0].mxu0
        %v2936 = vadd.f32 0.0, %v2935
        %v2937 = vpop.f32.mrb[0].mxu0
        %v2938 = vpop.f32.mrb[0].mxu0
        %v2939 = vadd.f32 0.0, %v2938
        %v2940 = vpop.f32.mrb[0].mxu0
        %2941 = vmatprep.mubr.bf16.mxu0 0
        %2942 = vmatmul.mubr.bf16.gmra.mrb[0].mxu0 %v2863
        %v2943 = vpop.f32.mrb[0].mxu0
        %v2944 = vadd.f32 0.0, %v2943
        %v2945 = vpop.f32.mrb[0].mxu0
        %v2946 = vpop.f32.mrb[0].mxu0
        %v2947 = vadd.f32 0.0, %v2946
        %v2948 = vpop.f32.mrb[0].mxu0
        %2949 = vmatprep.mubr.bf16.mxu0 0
        %2950 = vmatmul.mubr.bf16.gmra.mrb[0].mxu0 %v2866
        %v2951 = vpop.f32.mrb[0].mxu0
        %v2952 = vadd.f32 0.0, %v2951
        %v2953 = vpop.f32.mrb[0].mxu0
        %v2954 = vpop.f32.mrb[0].mxu0
        %v2955 = vadd.f32 0.0, %v2954
        %v2956 = vpop.f32.mrb[0].mxu0
        %2957 = vmatprep.mubr.bf16.mxu0 0
        %2958 = vmatmul.mubr.bf16.gmra.mrb[0].mxu0 %v2869
        %v2959 = vpop.f32.mrb[0].mxu0
        %v2960 = vadd.f32 0.0, %v2959
        %v2961 = vpop.f32.mrb[0].mxu0
        %v2962 = vpop.f32.mrb[0].mxu0
        %v2963 = vadd.f32 0.0, %v2962
        %v2964 = vpop.f32.mrb[0].mxu0
        %2965 = vmatprep.mubr.bf16.mxu0 0
        %2966 = vmatmul.mubr.bf16.gmra.mrb[0].mxu0 %v2872
        %v2967 = vpop.f32.mrb[0].mxu0
        %v2968 = vadd.f32 0.0, %v2967
        %v2969 = vpop.f32.mrb[0].mxu0
        %v2970 = vpop.f32.mrb[0].mxu0
        %v2971 = vadd.f32 0.0, %v2970
        %v2972 = vpop.f32.mrb[0].mxu0
        %2973 = vdwg.mxu0
        %v2974 = vsel %vm750, %v2912, -3.4028235e+38
        %v2975 = vsel %vm750, %v2915, -3.4028235e+38
        %v2976 = vsel %vm750, %v2920, -3.4028235e+38
        %v2977 = vsel %vm750, %v2923, -3.4028235e+38
        %v2978 = vsel %vm750, %v2928, -3.4028235e+38
        %v2979 = vsel %vm750, %v2931, -3.4028235e+38
        %v2980 = vsel %vm750, %v2936, -3.4028235e+38
        %v2981 = vsel %vm750, %v2939, -3.4028235e+38
        %v2982 = vsel %vm750, %v2944, -3.4028235e+38
        %v2983 = vsel %vm750, %v2947, -3.4028235e+38
        %v2984 = vsel %vm750, %v2952, -3.4028235e+38
        %v2985 = vsel %vm750, %v2955, -3.4028235e+38
        %v2986 = vsel %vm750, %v2960, -3.4028235e+38
        %v2987 = vsel %vm750, %v2963, -3.4028235e+38
        %v2988 = vsel %vm750, %v2968, -3.4028235e+38
        %v2989 = vsel %vm750, %v2971, -3.4028235e+38
        %2990 = vmax.xlane.f32.xlu0 %v2974
        %v2991 = vpop.xlane.xlu0 %2990
        %2992 = vmax.xlane.f32.xlu0 %v2975
        %v2993 = vpop.xlane.xlu0 %2992
        %2994 = vmax.xlane.f32.xlu0 %v2976
        %v2995 = vpop.xlane.xlu0 %2994
        %2996 = vmax.xlane.f32.xlu0 %v2977
        %v2997 = vpop.xlane.xlu0 %2996
        %2998 = vmax.xlane.f32.xlu0 %v2978
        %v2999 = vpop.xlane.xlu0 %2998
        %3000 = vmax.xlane.f32.xlu0 %v2979
        %v3001 = vpop.xlane.xlu0 %3000
        %3002 = vmax.xlane.f32.xlu0 %v2980
        %v3003 = vpop.xlane.xlu0 %3002
        %3004 = vmax.xlane.f32.xlu0 %v2981
        %v3005 = vpop.xlane.xlu0 %3004
        %3006 = vmax.xlane.f32.xlu0 %v2982
        %v3007 = vpop.xlane.xlu0 %3006
        %3008 = vmax.xlane.f32.xlu0 %v2983
        %v3009 = vpop.xlane.xlu0 %3008
        %3010 = vmax.xlane.f32.xlu0 %v2984
        %v3011 = vpop.xlane.xlu0 %3010
        %3012 = vmax.xlane.f32.xlu0 %v2985
        %v3013 = vpop.xlane.xlu0 %3012
        %3014 = vmax.xlane.f32.xlu0 %v2986
        %v3015 = vpop.xlane.xlu0 %3014
        %3016 = vmax.xlane.f32.xlu0 %v2987
        %v3017 = vpop.xlane.xlu0 %3016
        %3018 = vmax.xlane.f32.xlu0 %v2988
        %v3019 = vpop.xlane.xlu0 %3018
        %3020 = vmax.xlane.f32.xlu0 %v2989
        %v3021 = vpop.xlane.xlu0 %3020
        %v3022 = vsub.f32 %v2974, %v2991
        %v3023 = vsub.f32 %v2975, %v2993
        %v3024 = vsub.f32 %v2976, %v2995
        %v3025 = vsub.f32 %v2977, %v2997
        %v3026 = vsub.f32 %v2978, %v2999
        %v3027 = vsub.f32 %v2979, %v3001
        %v3028 = vsub.f32 %v2980, %v3003
        %v3029 = vsub.f32 %v2981, %v3005
        %v3030 = vsub.f32 %v2982, %v3007
        %v3031 = vsub.f32 %v2983, %v3009
        %v3032 = vsub.f32 %v2984, %v3011
        %v3033 = vsub.f32 %v2985, %v3013
        %v3034 = vsub.f32 %v2986, %v3015
        %v3035 = vsub.f32 %v2987, %v3017
        %v3036 = vsub.f32 %v2988, %v3019
        %v3037 = vsub.f32 %v2989, %v3021
        %v3038 = vmul.f32 %v3022, 1.442695
        %v3039 = vpow.pop %v3038
        %v3040 = vmul.f32 %v3023, 1.442695
        %v3041 = vpow.pop %v3040
        %v3042 = vmul.f32 %v3024, 1.442695
        %v3043 = vpow.pop %v3042
        %v3044 = vmul.f32 %v3025, 1.442695
        %v3045 = vpow.pop %v3044
        %v3046 = vmul.f32 %v3026, 1.442695
        %v3047 = vpow.pop %v3046
        %v3048 = vmul.f32 %v3027, 1.442695
        %v3049 = vpow.pop %v3048
        %v3050 = vmul.f32 %v3028, 1.442695
        %v3051 = vpow.pop %v3050
        %v3052 = vmul.f32 %v3029, 1.442695
        %v3053 = vpow.pop %v3052
        %v3054 = vmul.f32 %v3030, 1.442695
        %v3055 = vpow.pop %v3054
        %v3056 = vmul.f32 %v3031, 1.442695
        %v3057 = vpow.pop %v3056
        %v3058 = vmul.f32 %v3032, 1.442695
        %v3059 = vpow.pop %v3058
        %v3060 = vmul.f32 %v3033, 1.442695
        %v3061 = vpow.pop %v3060
        %v3062 = vmul.f32 %v3034, 1.442695
        %v3063 = vpow.pop %v3062
        %v3064 = vmul.f32 %v3035, 1.442695
        %v3065 = vpow.pop %v3064
        %v3066 = vmul.f32 %v3036, 1.442695
        %v3067 = vpow.pop %v3066
        %v3068 = vmul.f32 %v3037, 1.442695
        %v3069 = vpow.pop %v3068
        %3070 = vadd.xlane.f32.xlu0 %v3039
        %v3071 = vpop.xlane.xlu0 %3070
        %3072 = vadd.xlane.f32.xlu0 %v3041
        %v3073 = vpop.xlane.xlu0 %3072
        %3074 = vadd.xlane.f32.xlu0 %v3043
        %v3075 = vpop.xlane.xlu0 %3074
        %3076 = vadd.xlane.f32.xlu0 %v3045
        %v3077 = vpop.xlane.xlu0 %3076
        %3078 = vadd.xlane.f32.xlu0 %v3047
        %v3079 = vpop.xlane.xlu0 %3078
        %3080 = vadd.xlane.f32.xlu0 %v3049
        %v3081 = vpop.xlane.xlu0 %3080
        %3082 = vadd.xlane.f32.xlu0 %v3051
        %v3083 = vpop.xlane.xlu0 %3082
        %3084 = vadd.xlane.f32.xlu0 %v3053
        %v3085 = vpop.xlane.xlu0 %3084
        %3086 = vadd.xlane.f32.xlu0 %v3055
        %v3087 = vpop.xlane.xlu0 %3086
        %3088 = vadd.xlane.f32.xlu0 %v3057
        %v3089 = vpop.xlane.xlu0 %3088
        %3090 = vadd.xlane.f32.xlu0 %v3059
        %v3091 = vpop.xlane.xlu0 %3090
        %3092 = vadd.xlane.f32.xlu0 %v3061
        %v3093 = vpop.xlane.xlu0 %3092
        %3094 = vadd.xlane.f32.xlu0 %v3063
        %v3095 = vpop.xlane.xlu0 %3094
        %3096 = vadd.xlane.f32.xlu0 %v3065
        %v3097 = vpop.xlane.xlu0 %3096
        %3098 = vadd.xlane.f32.xlu0 %v3067
        %v3099 = vpop.xlane.xlu0 %3098
        %3100 = vadd.xlane.f32.xlu0 %v3069
        %v3101 = vpop.xlane.xlu0 %3100
        %v3102 = vmul.f32 %v3071, 5.656854
        %v3103 = vmul.f32 %v3073, 5.656854
        %v3104 = vmul.f32 %v3075, 5.656854
        %v3105 = vmul.f32 %v3077, 5.656854
        %v3106 = vmul.f32 %v3079, 5.656854
        %v3107 = vmul.f32 %v3081, 5.656854
        %v3108 = vmul.f32 %v3083, 5.656854
        %v3109 = vmul.f32 %v3085, 5.656854
        %v3110 = vmul.f32 %v3087, 5.656854
        %v3111 = vmul.f32 %v3089, 5.656854
        %v3112 = vmul.f32 %v3091, 5.656854
        %v3113 = vmul.f32 %v3093, 5.656854
        %v3114 = vmul.f32 %v3095, 5.656854
        %v3115 = vmul.f32 %v3097, 5.656854
        %v3116 = vmul.f32 %v3099, 5.656854
        %v3117 = vmul.f32 %v3101, 5.656854
        %v3118 = vrcp.pop %v3102
        %v3119 = vrcp.pop %v3103
        %v3120 = vrcp.pop %v3104
        %v3121 = vrcp.pop %v3105
        %v3122 = vrcp.pop %v3106
        %v3123 = vrcp.pop %v3107
        %v3124 = vrcp.pop %v3108
        %v3125 = vrcp.pop %v3109
        %v3126 = vrcp.pop %v3110
        %v3127 = vrcp.pop %v3111
        %v3128 = vrcp.pop %v3112
        %v3129 = vrcp.pop %v3113
        %v3130 = vrcp.pop %v3114
        %v3131 = vrcp.pop %v3115
        %v3132 = vrcp.pop %v3116
        %v3133 = vrcp.pop %v3117
        %v3134 = vmul.f32 %v3039, %v3118
        %v3135 = vmul.f32 %v3041, %v3119
        %v3136 = vmul.f32 %v3043, %v3120
        %v3137 = vmul.f32 %v3045, %v3121
        %v3138 = vmul.f32 %v3047, %v3122
        %v3139 = vmul.f32 %v3049, %v3123
        %v3140 = vmul.f32 %v3051, %v3124
        %v3141 = vmul.f32 %v3053, %v3125
        %v3142 = vmul.f32 %v3055, %v3126
        %v3143 = vmul.f32 %v3057, %v3127
        %v3144 = vmul.f32 %v3059, %v3128
        %v3145 = vmul.f32 %v3061, %v3129
        %v3146 = vmul.f32 %v3063, %v3130
        %v3147 = vmul.f32 %v3065, %v3131
        %v3148 = vmul.f32 %v3067, %v3132
        %v3149 = vmul.f32 %v3069, %v3133
        %v3150 = vpack.c.bf16 %v3135, %v3134
        %v3151 = vpack.c.bf16 %v3137, %v3136
        %v3152 = vpack.c.bf16 %v3139, %v3138
        %v3153 = vpack.c.bf16 %v3141, %v3140
        %v3154 = vpack.c.bf16 %v3143, %v3142
        %v3155 = vpack.c.bf16 %v3145, %v3144
        %v3156 = vpack.c.bf16 %v3147, %v3146
        %v3157 = vpack.c.bf16 %v3149, %v3148
        %3158 = vmatprep.subr.bf16.mxu0 0
        %3159 = vmatpush1.bf16.xpose.msra.mxu0 %v3150
        %3160 = vmatprep.subr.bf16.mxu0 0
        %3161 = vmatpush1.bf16.xpose.msra.mxu0 %v3151
        %3162 = vmatprep.subr.bf16.mxu0 0
        %3163 = vmatpush1.bf16.xpose.msra.mxu0 %v3152
        %3164 = vmatprep.subr.bf16.mxu0 0
        %3165 = vmatpush1.bf16.xpose.msra.mxu0 %v3153
        %3166 = vmatprep.subr.bf16.mxu0 0
        %3167 = vmatpush1.bf16.xpose.msra.mxu0 %v3154
        %3168 = vmatprep.subr.bf16.mxu0 0
        %3169 = vmatpush1.bf16.xpose.msra.mxu0 %v3155
        %3170 = vmatprep.subr.bf16.mxu0 0
        %3171 = vmatpush1.bf16.xpose.msra.mxu0 %v3156
        %3172 = vmatprep.subr.bf16.mxu0 0
        %3173 = vmatpush1.bf16.xpose.msra.mxu0 %v3157
        %3174 = vmatprep.subr.bf16.mxu0 0
        %3175 = vmatpush1.bf16.xpose.msra.mxu0 0
        %3176 = vmatprep.subr.bf16.mxu0 0
        %3177 = vmatpush1.bf16.xpose.msra.mxu0 0
        %3178 = vmatprep.subr.bf16.mxu0 0
        %3179 = vmatpush1.bf16.xpose.msra.mxu0 0
        %3180 = vmatprep.subr.bf16.mxu0 0
        %3181 = vmatpush1.bf16.xpose.msra.mxu0 0
        %3182 = vmatprep.subr.bf16.mxu0 0
        %3183 = vmatpush1.bf16.xpose.msra.mxu0 0
        %3184 = vmatprep.subr.bf16.mxu0 0
        %3185 = vmatpush1.bf16.xpose.msra.mxu0 0
        %3186 = vmatprep.subr.bf16.mxu0 0
        %3187 = vmatpush1.bf16.xpose.msra.mxu0 0
        %3188 = vmatprep.subr.bf16.mxu0 0
        %3189 = vmatpush1.bf16.xpose.msra.mxu0 0
        %3190 = vmatprep.mubr.bf16.mxu0 0
        %3191 = vmatmul.mubr.bf16.gmra.mrb[0].mxu0 %v2833
        %v3192 = vpop.f32.mrb[0].mxu0
        %v3193 = vadd.f32 0.0, %v3192
        %v3194 = vpop.f32.mrb[0].mxu0
        %v3195 = vpop.f32.mrb[0].mxu0
        %v3196 = vpop.f32.mrb[0].mxu0
        %3197 = vdwg.mxu0
        %v3198 = vpack.c.bf16 %v3193, %v3193
        %v3200 = vrot.slane %v2831, 2
        %3202 = vxpose.xlu0.c.b16.start [1/8] %v3200, 128
        %3203 = vxpose.xlu0.c.b16.cont [2/8] 0, 128
        %3204 = vxpose.xlu0.c.b16.cont [3/8] 0, 128
        %3205 = vxpose.xlu0.c.b16.cont [4/8] 0, 128
        %3206 = vxpose.xlu0.c.b16.cont [5/8] 0, 128
        %3207 = vxpose.xlu0.c.b16.cont [6/8] 0, 128
        %3208 = vxpose.xlu0.c.b16.cont [7/8] 0, 128
        %3209 = vxpose.xlu0.c.b16.end [8/8] 0, 128
        %v3210 = vpop.trf.xlu0
        %v3211 = vpop.trf.xlu0
        %v3212 = vpop.trf.xlu0
        %v3213 = vpop.trf.xlu0
        %v3214 = vpop.trf.xlu0
        %v3215 = vpop.trf.xlu0
        %v3216 = vpop.trf.xlu0
        %v3217 = vpop.trf.xlu0
        %v3219 = vrot.slane %v2832, 2
        %v3221 = vsel %vm623, %v3210, 0
        %v3224 = vsel %vm623, %v3211, 0
        %v3227 = vsel %vm623, %v3212, 0
        %v3230 = vsel %vm623, %v3213, 0
        %v3233 = vsel %vm623, %v3214, 0
        %v3236 = vsel %vm623, %v3215, 0
        %v3239 = vsel %vm623, %v3216, 0
        %v3242 = vsel %vm623, %v3217, 0
        %v3245 = vsel %vm648, %v3219, 0
        %3247 = vmatprep.subr.bf16.mxu0 0
        %3248 = vmatpush1.bf16.msra.mxu0 %v3245
        %3249 = vmatprep.subr.bf16.mxu0 0
        %3250 = vmatpush1.bf16.msra.mxu0 0
        %3251 = vmatprep.subr.bf16.mxu0 0
        %3252 = vmatpush1.bf16.msra.mxu0 0
        %3253 = vmatprep.subr.bf16.mxu0 0
        %3254 = vmatpush1.bf16.msra.mxu0 0
        %3255 = vmatprep.subr.bf16.mxu0 0
        %3256 = vmatpush1.bf16.msra.mxu0 0
        %3257 = vmatprep.subr.bf16.mxu0 0
        %3258 = vmatpush1.bf16.msra.mxu0 0
        %3259 = vmatprep.subr.bf16.mxu0 0
        %3260 = vmatpush1.bf16.msra.mxu0 0
        %3261 = vmatprep.subr.bf16.mxu0 0
        %3262 = vmatpush1.bf16.msra.mxu0 0
        %3263 = vmatprep.subr.bf16.mxu0 0
        %3264 = vmatpush1.bf16.msra.mxu0 0
        %3265 = vmatprep.subr.bf16.mxu0 0
        %3266 = vmatpush1.bf16.msra.mxu0 0
        %3267 = vmatprep.subr.bf16.mxu0 0
        %3268 = vmatpush1.bf16.msra.mxu0 0
        %3269 = vmatprep.subr.bf16.mxu0 0
        %3270 = vmatpush1.bf16.msra.mxu0 0
        %3271 = vmatprep.subr.bf16.mxu0 0
        %3272 = vmatpush1.bf16.msra.mxu0 0
        %3273 = vmatprep.subr.bf16.mxu0 0
        %3274 = vmatpush1.bf16.msra.mxu0 0
        %3275 = vmatprep.subr.bf16.mxu0 0
        %3276 = vmatpush1.bf16.msra.mxu0 0
        %3277 = vmatprep.subr.bf16.mxu0 0
        %3278 = vmatpush1.bf16.msra.mxu0 0
        %3279 = vmatprep.mubr.bf16.mxu0 0
        %3280 = vmatmul.mubr.bf16.gmra.mrb[0].mxu0 %v3221
        %v3281 = vpop.f32.mrb[0].mxu0
        %v3282 = vadd.f32 0.0, %v3281
        %v3283 = vpop.f32.mrb[0].mxu0
        %v3284 = vpop.f32.mrb[0].mxu0
        %v3285 = vadd.f32 0.0, %v3284
        %v3286 = vpop.f32.mrb[0].mxu0
        %3287 = vmatprep.mubr.bf16.mxu0 0
        %3288 = vmatmul.mubr.bf16.gmra.mrb[0].mxu0 %v3224
        %v3289 = vpop.f32.mrb[0].mxu0
        %v3290 = vadd.f32 0.0, %v3289
        %v3291 = vpop.f32.mrb[0].mxu0
        %v3292 = vpop.f32.mrb[0].mxu0
        %v3293 = vadd.f32 0.0, %v3292
        %v3294 = vpop.f32.mrb[0].mxu0
        %3295 = vmatprep.mubr.bf16.mxu0 0
        %3296 = vmatmul.mubr.bf16.gmra.mrb[0].mxu0 %v3227
        %v3297 = vpop.f32.mrb[0].mxu0
        %v3298 = vadd.f32 0.0, %v3297
        %v3299 = vpop.f32.mrb[0].mxu0
        %v3300 = vpop.f32.mrb[0].mxu0
        %v3301 = vadd.f32 0.0, %v3300
        %v3302 = vpop.f32.mrb[0].mxu0
        %3303 = vmatprep.mubr.bf16.mxu0 0
        %3304 = vmatmul.mubr.bf16.gmra.mrb[0].mxu0 %v3230
        %v3305 = vpop.f32.mrb[0].mxu0
        %v3306 = vadd.f32 0.0, %v3305
        %v3307 = vpop.f32.mrb[0].mxu0
        %v3308 = vpop.f32.mrb[0].mxu0
        %v3309 = vadd.f32 0.0, %v3308
        %v3310 = vpop.f32.mrb[0].mxu0
        %3311 = vmatprep.mubr.bf16.mxu0 0
        %3312 = vmatmul.mubr.bf16.gmra.mrb[0].mxu0 %v3233
        %v3313 = vpop.f32.mrb[0].mxu0
        %v3314 = vadd.f32 0.0, %v3313
        %v3315 = vpop.f32.mrb[0].mxu0
        %v3316 = vpop.f32.mrb[0].mxu0
        %v3317 = vadd.f32 0.0, %v3316
        %v3318 = vpop.f32.mrb[0].mxu0
        %3319 = vmatprep.mubr.bf16.mxu0 0
        %3320 = vmatmul.mubr.bf16.gmra.mrb[0].mxu0 %v3236
        %v3321 = vpop.f32.mrb[0].mxu0
        %v3322 = vadd.f32 0.0, %v3321
        %v3323 = vpop.f32.mrb[0].mxu0
        %v3324 = vpop.f32.mrb[0].mxu0
        %v3325 = vadd.f32 0.0, %v3324
        %v3326 = vpop.f32.mrb[0].mxu0
        %3327 = vmatprep.mubr.bf16.mxu0 0
        %3328 = vmatmul.mubr.bf16.gmra.mrb[0].mxu0 %v3239
        %v3329 = vpop.f32.mrb[0].mxu0
        %v3330 = vadd.f32 0.0, %v3329
        %v3331 = vpop.f32.mrb[0].mxu0
        %v3332 = vpop.f32.mrb[0].mxu0
        %v3333 = vadd.f32 0.0, %v3332
        %v3334 = vpop.f32.mrb[0].mxu0
        %3335 = vmatprep.mubr.bf16.mxu0 0
        %3336 = vmatmul.mubr.bf16.gmra.mrb[0].mxu0 %v3242
        %v3337 = vpop.f32.mrb[0].mxu0
        %v3338 = vadd.f32 0.0, %v3337
        %v3339 = vpop.f32.mrb[0].mxu0
        %v3340 = vpop.f32.mrb[0].mxu0
        %v3341 = vadd.f32 0.0, %v3340
        %v3342 = vpop.f32.mrb[0].mxu0
        %3343 = vdwg.mxu0
        %v3344 = vsel %vm750, %v3282, -3.4028235e+38
        %v3345 = vsel %vm750, %v3285, -3.4028235e+38
        %v3346 = vsel %vm750, %v3290, -3.4028235e+38
        %v3347 = vsel %vm750, %v3293, -3.4028235e+38
        %v3348 = vsel %vm750, %v3298, -3.4028235e+38
        %v3349 = vsel %vm750, %v3301, -3.4028235e+38
        %v3350 = vsel %vm750, %v3306, -3.4028235e+38
        %v3351 = vsel %vm750, %v3309, -3.4028235e+38
        %v3352 = vsel %vm750, %v3314, -3.4028235e+38
        %v3353 = vsel %vm750, %v3317, -3.4028235e+38
        %v3354 = vsel %vm750, %v3322, -3.4028235e+38
        %v3355 = vsel %vm750, %v3325, -3.4028235e+38
        %v3356 = vsel %vm750, %v3330, -3.4028235e+38
        %v3357 = vsel %vm750, %v3333, -3.4028235e+38
        %v3358 = vsel %vm750, %v3338, -3.4028235e+38
        %v3359 = vsel %vm750, %v3341, -3.4028235e+38
        %3360 = vmax.xlane.f32.xlu0 %v3344
        %v3361 = vpop.xlane.xlu0 %3360
        %3362 = vmax.xlane.f32.xlu0 %v3345
        %v3363 = vpop.xlane.xlu0 %3362
        %3364 = vmax.xlane.f32.xlu0 %v3346
        %v3365 = vpop.xlane.xlu0 %3364
        %3366 = vmax.xlane.f32.xlu0 %v3347
        %v3367 = vpop.xlane.xlu0 %3366
        %3368 = vmax.xlane.f32.xlu0 %v3348
        %v3369 = vpop.xlane.xlu0 %3368
        %3370 = vmax.xlane.f32.xlu0 %v3349
        %v3371 = vpop.xlane.xlu0 %3370
        %3372 = vmax.xlane.f32.xlu0 %v3350
        %v3373 = vpop.xlane.xlu0 %3372
        %3374 = vmax.xlane.f32.xlu0 %v3351
        %v3375 = vpop.xlane.xlu0 %3374
        %3376 = vmax.xlane.f32.xlu0 %v3352
        %v3377 = vpop.xlane.xlu0 %3376
        %3378 = vmax.xlane.f32.xlu0 %v3353
        %v3379 = vpop.xlane.xlu0 %3378
        %3380 = vmax.xlane.f32.xlu0 %v3354
        %v3381 = vpop.xlane.xlu0 %3380
        %3382 = vmax.xlane.f32.xlu0 %v3355
        %v3383 = vpop.xlane.xlu0 %3382
        %3384 = vmax.xlane.f32.xlu0 %v3356
        %v3385 = vpop.xlane.xlu0 %3384
        %3386 = vmax.xlane.f32.xlu0 %v3357
        %v3387 = vpop.xlane.xlu0 %3386
        %3388 = vmax.xlane.f32.xlu0 %v3358
        %v3389 = vpop.xlane.xlu0 %3388
        %3390 = vmax.xlane.f32.xlu0 %v3359
        %v3391 = vpop.xlane.xlu0 %3390
        %v3392 = vsub.f32 %v3344, %v3361
        %v3393 = vsub.f32 %v3345, %v3363
        %v3394 = vsub.f32 %v3346, %v3365
        %v3395 = vsub.f32 %v3347, %v3367
        %v3396 = vsub.f32 %v3348, %v3369
        %v3397 = vsub.f32 %v3349, %v3371
        %v3398 = vsub.f32 %v3350, %v3373
        %v3399 = vsub.f32 %v3351, %v3375
        %v3400 = vsub.f32 %v3352, %v3377
        %v3401 = vsub.f32 %v3353, %v3379
        %v3402 = vsub.f32 %v3354, %v3381
        %v3403 = vsub.f32 %v3355, %v3383
        %v3404 = vsub.f32 %v3356, %v3385
        %v3405 = vsub.f32 %v3357, %v3387
        %v3406 = vsub.f32 %v3358, %v3389
        %v3407 = vsub.f32 %v3359, %v3391
        %v3408 = vmul.f32 %v3392, 1.442695
        %v3409 = vpow.pop %v3408
        %v3410 = vmul.f32 %v3393, 1.442695
        %v3411 = vpow.pop %v3410
        %v3412 = vmul.f32 %v3394, 1.442695
        %v3413 = vpow.pop %v3412
        %v3414 = vmul.f32 %v3395, 1.442695
        %v3415 = vpow.pop %v3414
        %v3416 = vmul.f32 %v3396, 1.442695
        %v3417 = vpow.pop %v3416
        %v3418 = vmul.f32 %v3397, 1.442695
        %v3419 = vpow.pop %v3418
        %v3420 = vmul.f32 %v3398, 1.442695
        %v3421 = vpow.pop %v3420
        %v3422 = vmul.f32 %v3399, 1.442695
        %v3423 = vpow.pop %v3422
        %v3424 = vmul.f32 %v3400, 1.442695
        %v3425 = vpow.pop %v3424
        %v3426 = vmul.f32 %v3401, 1.442695
        %v3427 = vpow.pop %v3426
        %v3428 = vmul.f32 %v3402, 1.442695
        %v3429 = vpow.pop %v3428
        %v3430 = vmul.f32 %v3403, 1.442695
        %v3431 = vpow.pop %v3430
        %v3432 = vmul.f32 %v3404, 1.442695
        %v3433 = vpow.pop %v3432
        %v3434 = vmul.f32 %v3405, 1.442695
        %v3435 = vpow.pop %v3434
        %v3436 = vmul.f32 %v3406, 1.442695
        %v3437 = vpow.pop %v3436
        %v3438 = vmul.f32 %v3407, 1.442695
        %v3439 = vpow.pop %v3438
        %3440 = vadd.xlane.f32.xlu0 %v3409
        %v3441 = vpop.xlane.xlu0 %3440
        %3442 = vadd.xlane.f32.xlu0 %v3411
        %v3443 = vpop.xlane.xlu0 %3442
        %3444 = vadd.xlane.f32.xlu0 %v3413
        %v3445 = vpop.xlane.xlu0 %3444
        %3446 = vadd.xlane.f32.xlu0 %v3415
        %v3447 = vpop.xlane.xlu0 %3446
        %3448 = vadd.xlane.f32.xlu0 %v3417
        %v3449 = vpop.xlane.xlu0 %3448
        %3450 = vadd.xlane.f32.xlu0 %v3419
        %v3451 = vpop.xlane.xlu0 %3450
        %3452 = vadd.xlane.f32.xlu0 %v3421
        %v3453 = vpop.xlane.xlu0 %3452
        %3454 = vadd.xlane.f32.xlu0 %v3423
        %v3455 = vpop.xlane.xlu0 %3454
        %3456 = vadd.xlane.f32.xlu0 %v3425
        %v3457 = vpop.xlane.xlu0 %3456
        %3458 = vadd.xlane.f32.xlu0 %v3427
        %v3459 = vpop.xlane.xlu0 %3458
        %3460 = vadd.xlane.f32.xlu0 %v3429
        %v3461 = vpop.xlane.xlu0 %3460
        %3462 = vadd.xlane.f32.xlu0 %v3431
        %v3463 = vpop.xlane.xlu0 %3462
        %3464 = vadd.xlane.f32.xlu0 %v3433
        %v3465 = vpop.xlane.xlu0 %3464
        %3466 = vadd.xlane.f32.xlu0 %v3435
        %v3467 = vpop.xlane.xlu0 %3466
        %3468 = vadd.xlane.f32.xlu0 %v3437
        %v3469 = vpop.xlane.xlu0 %3468
        %3470 = vadd.xlane.f32.xlu0 %v3439
        %v3471 = vpop.xlane.xlu0 %3470
        %v3472 = vmul.f32 %v3441, 5.656854
        %v3473 = vmul.f32 %v3443, 5.656854
        %v3474 = vmul.f32 %v3445, 5.656854
        %v3475 = vmul.f32 %v3447, 5.656854
        %v3476 = vmul.f32 %v3449, 5.656854
        %v3477 = vmul.f32 %v3451, 5.656854
        %v3478 = vmul.f32 %v3453, 5.656854
        %v3479 = vmul.f32 %v3455, 5.656854
        %v3480 = vmul.f32 %v3457, 5.656854
        %v3481 = vmul.f32 %v3459, 5.656854
        %v3482 = vmul.f32 %v3461, 5.656854
        %v3483 = vmul.f32 %v3463, 5.656854
        %v3484 = vmul.f32 %v3465, 5.656854
        %v3485 = vmul.f32 %v3467, 5.656854
        %v3486 = vmul.f32 %v3469, 5.656854
        %v3487 = vmul.f32 %v3471, 5.656854
        %v3488 = vrcp.pop %v3472
        %v3489 = vrcp.pop %v3473
        %v3490 = vrcp.pop %v3474
        %v3491 = vrcp.pop %v3475
        %v3492 = vrcp.pop %v3476
        %v3493 = vrcp.pop %v3477
        %v3494 = vrcp.pop %v3478
        %v3495 = vrcp.pop %v3479
        %v3496 = vrcp.pop %v3480
        %v3497 = vrcp.pop %v3481
        %v3498 = vrcp.pop %v3482
        %v3499 = vrcp.pop %v3483
        %v3500 = vrcp.pop %v3484
        %v3501 = vrcp.pop %v3485
        %v3502 = vrcp.pop %v3486
        %v3503 = vrcp.pop %v3487
        %v3504 = vmul.f32 %v3409, %v3488
        %v3505 = vmul.f32 %v3411, %v3489
        %v3506 = vmul.f32 %v3413, %v3490
        %v3507 = vmul.f32 %v3415, %v3491
        %v3508 = vmul.f32 %v3417, %v3492
        %v3509 = vmul.f32 %v3419, %v3493
        %v3510 = vmul.f32 %v3421, %v3494
        %v3511 = vmul.f32 %v3423, %v3495
        %v3512 = vmul.f32 %v3425, %v3496
        %v3513 = vmul.f32 %v3427, %v3497
        %v3514 = vmul.f32 %v3429, %v3498
        %v3515 = vmul.f32 %v3431, %v3499
        %v3516 = vmul.f32 %v3433, %v3500
        %v3517 = vmul.f32 %v3435, %v3501
        %v3518 = vmul.f32 %v3437, %v3502
        %v3519 = vmul.f32 %v3439, %v3503
        %v3520 = vpack.c.bf16 %v3505, %v3504
        %v3521 = vpack.c.bf16 %v3507, %v3506
        %v3522 = vpack.c.bf16 %v3509, %v3508
        %v3523 = vpack.c.bf16 %v3511, %v3510
        %v3524 = vpack.c.bf16 %v3513, %v3512
        %v3525 = vpack.c.bf16 %v3515, %v3514
        %v3526 = vpack.c.bf16 %v3517, %v3516
        %v3527 = vpack.c.bf16 %v3519, %v3518
        %v3529 = vrot.slane %v2833, 2
        %3531 = vmatprep.subr.bf16.mxu0 0
        %3532 = vmatpush1.bf16.xpose.msra.mxu0 %v3520
        %3533 = vmatprep.subr.bf16.mxu0 0
        %3534 = vmatpush1.bf16.xpose.msra.mxu0 %v3521
        %3535 = vmatprep.subr.bf16.mxu0 0
        %3536 = vmatpush1.bf16.xpose.msra.mxu0 %v3522
        %3537 = vmatprep.subr.bf16.mxu0 0
        %3538 = vmatpush1.bf16.xpose.msra.mxu0 %v3523
        %3539 = vmatprep.subr.bf16.mxu0 0
        %3540 = vmatpush1.bf16.xpose.msra.mxu0 %v3524
        %3541 = vmatprep.subr.bf16.mxu0 0
        %3542 = vmatpush1.bf16.xpose.msra.mxu0 %v3525
        %3543 = vmatprep.subr.bf16.mxu0 0
        %3544 = vmatpush1.bf16.xpose.msra.mxu0 %v3526
        %3545 = vmatprep.subr.bf16.mxu0 0
        %3546 = vmatpush1.bf16.xpose.msra.mxu0 %v3527
        %3547 = vmatprep.subr.bf16.mxu0 0
        %3548 = vmatpush1.bf16.xpose.msra.mxu0 0
        %3549 = vmatprep.subr.bf16.mxu0 0
        %3550 = vmatpush1.bf16.xpose.msra.mxu0 0
        %3551 = vmatprep.subr.bf16.mxu0 0
        %3552 = vmatpush1.bf16.xpose.msra.mxu0 0
        %3553 = vmatprep.subr.bf16.mxu0 0
        %3554 = vmatpush1.bf16.xpose.msra.mxu0 0
        %3555 = vmatprep.subr.bf16.mxu0 0
        %3556 = vmatpush1.bf16.xpose.msra.mxu0 0
        %3557 = vmatprep.subr.bf16.mxu0 0
        %3558 = vmatpush1.bf16.xpose.msra.mxu0 0
        %3559 = vmatprep.subr.bf16.mxu0 0
        %3560 = vmatpush1.bf16.xpose.msra.mxu0 0
        %3561 = vmatprep.subr.bf16.mxu0 0
        %3562 = vmatpush1.bf16.xpose.msra.mxu0 0
        %3563 = vmatprep.mubr.bf16.mxu0 0
        %3564 = vmatmul.mubr.bf16.gmra.mrb[0].mxu0 %v3529
        %v3565 = vpop.f32.mrb[0].mxu0
        %v3566 = vadd.f32 0.0, %v3565
        %v3567 = vpop.f32.mrb[0].mxu0
        %v3568 = vpop.f32.mrb[0].mxu0
        %v3569 = vpop.f32.mrb[0].mxu0
        %3570 = vdwg.mxu0
        %v3571 = vpack.c.bf16 %v3566, %v3566
        %v3573 = vrot.slane %v1348, 6
        %v3575 = vrot.slane %v1716, 4
        %v3577 = vrot.slane %v2089, 2
        %v3579 = vrot.slane %v2830, 6
        %v3581 = vrot.slane %v3198, 4
        %v3583 = vrot.slane %v3571, 2
        %v3586 = vsel %vm648, %v975, %v3573
        %vm3587 = vcmask 1043456
        %v3589 = vsel %vm3587, %v3586, %v3575
        %vm3590 = vcmask 1045504
        %v3592 = vsel %vm3590, %v3589, %v3577
        %v3596 = vsel %vm648, %v2457, %v3579
        %v3598 = vsel %vm3587, %v3596, %v3581
        %v3600 = vsel %vm3590, %v3598, %v3583
        %v3602 = vld [vmem:[#allocation9] sm:$0xf]
        %v3603 = vld [vmem:[#allocation9 + $0x4] sm:$0xf]
        %v3604 = vld [vmem:[#allocation9 + $0x8] sm:$0xf]
        %v3605 = vld [vmem:[#allocation9 + $0xc] sm:$0xf]
        %3606 = vxpose.xlu0.c.b16.start [1/8] %v3592, 128
        %3607 = vxpose.xlu0.c.b16.cont [2/8] %v3600, 128
        %3608 = vxpose.xlu0.c.b16.cont [3/8] 0, 128
        %3609 = vxpose.xlu0.c.b16.cont [4/8] 0, 128
        %3610 = vxpose.xlu0.c.b16.cont [5/8] 0, 128
        %3611 = vxpose.xlu0.c.b16.cont [6/8] 0, 128
        %3612 = vxpose.xlu0.c.b16.cont [7/8] 0, 128
        %3613 = vxpose.xlu0.c.b16.end [8/8] 0, 128
        %v3614 = vpop.trf.xlu0
        %v3615 = vpop.trf.xlu0
        %v3616 = vpop.trf.xlu0
        %v3617 = vpop.trf.xlu0
        %v3618 = vpop.trf.xlu0
        %v3619 = vpop.trf.xlu0
        %v3620 = vpop.trf.xlu0
        %v3621 = vpop.trf.xlu0
        %v3626 = vunpack.c.l.b16 %v3602
        %v3627 = vunpack.c.l.b16 %v3603
        %v3628 = vunpack.c.l.b16 %v3604
        %v3629 = vunpack.c.l.b16 %v3605
        %v3630 = vpack.c.b16 %v3627, %v3626
        %v3631 = vpack.c.b16 %v3629, %v3628
        %vm3634 = vcmask 261120
        %v3636 = vsel %vm3634, %v3614, 0
        %v3639 = vsel %vm3634, %v3615, 0
        %v3642 = vsel %vm3634, %v3616, 0
        %v3645 = vsel %vm3634, %v3617, 0
        %v3648 = vsel %vm3634, %v3618, 0
        %v3651 = vsel %vm3634, %v3619, 0
        %v3654 = vsel %vm3634, %v3620, 0
        %v3657 = vsel %vm3634, %v3621, 0
        %3659 = vmatprep.subr.bf16.mxu0 0
        %3660 = vmatpush1.bf16.msra.mxu0 %v3630
        %3661 = vmatprep.subr.bf16.mxu0 0
        %3662 = vmatpush1.bf16.msra.mxu0 %v3631
        %3663 = vmatprep.subr.bf16.mxu0 0
        %3664 = vmatpush1.bf16.msra.mxu0 0
        %3665 = vmatprep.subr.bf16.mxu0 0
        %3666 = vmatpush1.bf16.msra.mxu0 0
        %3667 = vmatprep.subr.bf16.mxu0 0
        %3668 = vmatpush1.bf16.msra.mxu0 0
        %3669 = vmatprep.subr.bf16.mxu0 0
        %3670 = vmatpush1.bf16.msra.mxu0 0
        %3671 = vmatprep.subr.bf16.mxu0 0
        %3672 = vmatpush1.bf16.msra.mxu0 0
        %3673 = vmatprep.subr.bf16.mxu0 0
        %3674 = vmatpush1.bf16.msra.mxu0 0
        %3675 = vmatprep.subr.bf16.mxu0 0
        %3676 = vmatpush1.bf16.msra.mxu0 0
        %3677 = vmatprep.subr.bf16.mxu0 0
        %3678 = vmatpush1.bf16.msra.mxu0 0
        %3679 = vmatprep.subr.bf16.mxu0 0
        %3680 = vmatpush1.bf16.msra.mxu0 0
        %3681 = vmatprep.subr.bf16.mxu0 0
        %3682 = vmatpush1.bf16.msra.mxu0 0
        %3683 = vmatprep.subr.bf16.mxu0 0
        %3684 = vmatpush1.bf16.msra.mxu0 0
        %3685 = vmatprep.subr.bf16.mxu0 0
        %3686 = vmatpush1.bf16.msra.mxu0 0
        %3687 = vmatprep.subr.bf16.mxu0 0
        %3688 = vmatpush1.bf16.msra.mxu0 0
        %3689 = vmatprep.subr.bf16.mxu0 0
        %3690 = vmatpush1.bf16.msra.mxu0 0
        %3691 = vmatprep.mubr.bf16.mxu0 0
        %3692 = vmatmul.mubr.bf16.gmra.mrb[0].mxu0 %v3636
        %v3693 = vpop.f32.mrb[0].mxu0
        %v3694 = vadd.f32 0.0, %v3693
        %v3695 = vpop.f32.mrb[0].mxu0
        %v3696 = vpop.f32.mrb[0].mxu0
        %v3697 = vadd.f32 0.0, %v3696
        %v3698 = vpop.f32.mrb[0].mxu0
        %3699 = vmatprep.mubr.bf16.mxu0 0
        %3700 = vmatmul.mubr.bf16.gmra.mrb[0].mxu0 %v3639
        %v3701 = vpop.f32.mrb[0].mxu0
        %v3702 = vadd.f32 0.0, %v3701
        %v3703 = vpop.f32.mrb[0].mxu0
        %v3704 = vpop.f32.mrb[0].mxu0
        %v3705 = vadd.f32 0.0, %v3704
        %v3706 = vpop.f32.mrb[0].mxu0
        %3707 = vmatprep.mubr.bf16.mxu0 0
        %3708 = vmatmul.mubr.bf16.gmra.mrb[0].mxu0 %v3642
        %v3709 = vpop.f32.mrb[0].mxu0
        %v3710 = vadd.f32 0.0, %v3709
        %v3711 = vpop.f32.mrb[0].mxu0
        %v3712 = vpop.f32.mrb[0].mxu0
        %v3713 = vadd.f32 0.0, %v3712
        %v3714 = vpop.f32.mrb[0].mxu0
        %3715 = vmatprep.mubr.bf16.mxu0 0
        %3716 = vmatmul.mubr.bf16.gmra.mrb[0].mxu0 %v3645
        %v3717 = vpop.f32.mrb[0].mxu0
        %v3718 = vadd.f32 0.0, %v3717
        %v3719 = vpop.f32.mrb[0].mxu0
        %v3720 = vpop.f32.mrb[0].mxu0
        %v3721 = vadd.f32 0.0, %v3720
        %v3722 = vpop.f32.mrb[0].mxu0
        %3723 = vmatprep.mubr.bf16.mxu0 0
        %3724 = vmatmul.mubr.bf16.gmra.mrb[0].mxu0 %v3648
        %v3725 = vpop.f32.mrb[0].mxu0
        %v3726 = vadd.f32 0.0, %v3725
        %v3727 = vpop.f32.mrb[0].mxu0
        %v3728 = vpop.f32.mrb[0].mxu0
        %v3729 = vadd.f32 0.0, %v3728
        %v3730 = vpop.f32.mrb[0].mxu0
        %3731 = vmatprep.mubr.bf16.mxu0 0
        %3732 = vmatmul.mubr.bf16.gmra.mrb[0].mxu0 %v3651
        %v3733 = vpop.f32.mrb[0].mxu0
        %v3734 = vadd.f32 0.0, %v3733
        %v3735 = vpop.f32.mrb[0].mxu0
        %v3736 = vpop.f32.mrb[0].mxu0
        %v3737 = vadd.f32 0.0, %v3736
        %v3738 = vpop.f32.mrb[0].mxu0
        %3739 = vmatprep.mubr.bf16.mxu0 0
        %3740 = vmatmul.mubr.bf16.gmra.mrb[0].mxu0 %v3654
        %v3741 = vpop.f32.mrb[0].mxu0
        %v3742 = vadd.f32 0.0, %v3741
        %v3743 = vpop.f32.mrb[0].mxu0
        %v3744 = vpop.f32.mrb[0].mxu0
        %v3745 = vadd.f32 0.0, %v3744
        %v3746 = vpop.f32.mrb[0].mxu0
        %3747 = vmatprep.mubr.bf16.mxu0 0
        %3748 = vmatmul.mubr.bf16.gmra.mrb[0].mxu0 %v3657
        %v3749 = vpop.f32.mrb[0].mxu0
        %v3750 = vadd.f32 0.0, %v3749
        %v3751 = vpop.f32.mrb[0].mxu0
        %v3752 = vpop.f32.mrb[0].mxu0
        %v3753 = vadd.f32 0.0, %v3752
        %v3754 = vpop.f32.mrb[0].mxu0
        %3755 = vdwg.mxu0
        %p3756 = scmp.eq.s32.totalorder %s29, 0
        // Predicated region
        $region61: #{tpu_custom_call.1} parent=39 // pred_check
          %p3757 = pneg %p3756
        $region62: #{tpu_custom_call.1} parent=39 // pred_check_branch
          %3759 = sbr.rel (%p3757) target = $region64
        $region63: #{tpu_custom_call.1} parent=39 // pred_region
          %v3760 = vld [vmem:[#allocation11] sm:$0x1]
          %v3762 = vlaneseq
          %v3763 = vshrl.u32 %v3762, 7
          %v3764 = vsub.s32 0, %v3763
          %v3765 = vrot.slane %v3760, %v3764
          %v3767 = vadd.f32 %v3694, %v3765
          %v3768 = vadd.f32 %v3697, %v3765
          %v3769 = vadd.f32 %v3702, %v3765
          %v3770 = vadd.f32 %v3705, %v3765
          %v3771 = vadd.f32 %v3710, %v3765
          %v3772 = vadd.f32 %v3713, %v3765
          %v3773 = vadd.f32 %v3718, %v3765
          %v3774 = vadd.f32 %v3721, %v3765
          %v3775 = vadd.f32 %v3726, %v3765
          %v3776 = vadd.f32 %v3729, %v3765
          %v3777 = vadd.f32 %v3734, %v3765
          %v3778 = vadd.f32 %v3737, %v3765
          %v3779 = vadd.f32 %v3742, %v3765
          %v3780 = vadd.f32 %v3745, %v3765
          %v3781 = vadd.f32 %v3750, %v3765
          %v3782 = vadd.f32 %v3753, %v3765
          %3783 = vst [vmem:[#allocation2] sm:$0xff] %v3767
          %3784 = vst [vmem:[#allocation2 + $0x8] sm:$0xff] %v3768
          %3785 = vst [vmem:[#allocation2 + $0x10] sm:$0xff] %v3769
          %3786 = vst [vmem:[#allocation2 + $0x18] sm:$0xff] %v3770
          %3787 = vst [vmem:[#allocation2 + $0x20] sm:$0xff] %v3771
          %3788 = vst [vmem:[#allocation2 + $0x28] sm:$0xff] %v3772
          %3789 = vst [vmem:[#allocation2 + $0x30] sm:$0xff] %v3773
          %3790 = vst [vmem:[#allocation2 + $0x38] sm:$0xff] %v3774
          %3791 = vst [vmem:[#allocation2 + $0x40] sm:$0xff] %v3775
          %3792 = vst [vmem:[#allocation2 + $0x48] sm:$0xff] %v3776
          %3793 = vst [vmem:[#allocation2 + $0x50] sm:$0xff] %v3777
          %3794 = vst [vmem:[#allocation2 + $0x58] sm:$0xff] %v3778
          %3795 = vst [vmem:[#allocation2 + $0x60] sm:$0xff] %v3779
          %3796 = vst [vmem:[#allocation2 + $0x68] sm:$0xff] %v3780
          %3797 = vst [vmem:[#allocation2 + $0x70] sm:$0xff] %v3781
          %3798 = vst [vmem:[#allocation2 + $0x78] sm:$0xff] %v3782
        $region64: #{tpu_custom_call.1} parent=39 // pred_fallthru
          _
        %p3799 = scmp.gt.s32.totalorder %s29, 0
        // Predicated region
        $region65: #{tpu_custom_call.1} parent=39 // pred_check
          %p3800 = pneg %p3799
        $region66: #{tpu_custom_call.1} parent=39 // pred_check_branch
          %3802 = sbr.rel (%p3800) target = $region68
        $region67: #{tpu_custom_call.1} parent=39 // pred_region
          %v3803 = vld [vmem:[#allocation2] sm:$0xff]
          %v3804 = vld [vmem:[#allocation2 + $0x8] sm:$0xff]
          %v3805 = vld [vmem:[#allocation2 + $0x10] sm:$0xff]
          %v3806 = vld [vmem:[#allocation2 + $0x18] sm:$0xff]
          %v3807 = vld [vmem:[#allocation2 + $0x20] sm:$0xff]
          %v3808 = vld [vmem:[#allocation2 + $0x28] sm:$0xff]
          %v3809 = vld [vmem:[#allocation2 + $0x30] sm:$0xff]
          %v3810 = vld [vmem:[#allocation2 + $0x38] sm:$0xff]
          %v3811 = vld [vmem:[#allocation2 + $0x40] sm:$0xff]
          %v3812 = vld [vmem:[#allocation2 + $0x48] sm:$0xff]
          %v3813 = vld [vmem:[#allocation2 + $0x50] sm:$0xff]
          %v3814 = vld [vmem:[#allocation2 + $0x58] sm:$0xff]
          %v3815 = vld [vmem:[#allocation2 + $0x60] sm:$0xff]
          %v3816 = vld [vmem:[#allocation2 + $0x68] sm:$0xff]
          %v3817 = vld [vmem:[#allocation2 + $0x70] sm:$0xff]
          %v3818 = vld [vmem:[#allocation2 + $0x78] sm:$0xff]
          %v3819 = vadd.f32 %v3803, %v3694
          %v3820 = vadd.f32 %v3804, %v3697
          %v3821 = vadd.f32 %v3805, %v3702
          %v3822 = vadd.f32 %v3806, %v3705
          %v3823 = vadd.f32 %v3807, %v3710
          %v3824 = vadd.f32 %v3808, %v3713
          %v3825 = vadd.f32 %v3809, %v3718
          %v3826 = vadd.f32 %v3810, %v3721
          %v3827 = vadd.f32 %v3811, %v3726
          %v3828 = vadd.f32 %v3812, %v3729
          %v3829 = vadd.f32 %v3813, %v3734
          %v3830 = vadd.f32 %v3814, %v3737
          %v3831 = vadd.f32 %v3815, %v3742
          %v3832 = vadd.f32 %v3816, %v3745
          %v3833 = vadd.f32 %v3817, %v3750
          %v3834 = vadd.f32 %v3818, %v3753
          %3835 = vst [vmem:[#allocation2] sm:$0xff] %v3819
          %3836 = vst [vmem:[#allocation2 + $0x8] sm:$0xff] %v3820
          %3837 = vst [vmem:[#allocation2 + $0x10] sm:$0xff] %v3821
          %3838 = vst [vmem:[#allocation2 + $0x18] sm:$0xff] %v3822
          %3839 = vst [vmem:[#allocation2 + $0x20] sm:$0xff] %v3823
          %3840 = vst [vmem:[#allocation2 + $0x28] sm:$0xff] %v3824
          %3841 = vst [vmem:[#allocation2 + $0x30] sm:$0xff] %v3825
          %3842 = vst [vmem:[#allocation2 + $0x38] sm:$0xff] %v3826
          %3843 = vst [vmem:[#allocation2 + $0x40] sm:$0xff] %v3827
          %3844 = vst [vmem:[#allocation2 + $0x48] sm:$0xff] %v3828
          %3845 = vst [vmem:[#allocation2 + $0x50] sm:$0xff] %v3829
          %3846 = vst [vmem:[#allocation2 + $0x58] sm:$0xff] %v3830
          %3847 = vst [vmem:[#allocation2 + $0x60] sm:$0xff] %v3831
          %3848 = vst [vmem:[#allocation2 + $0x68] sm:$0xff] %v3832
          %3849 = vst [vmem:[#allocation2 + $0x70] sm:$0xff] %v3833
          %3850 = vst [vmem:[#allocation2 + $0x78] sm:$0xff] %v3834
        $region68: #{tpu_custom_call.1} parent=39 // pred_fallthru
          _
        // Predicated region
        $region69: #{tpu_custom_call.1} parent=39 // pred_check
          %p3851 = pneg %p3756
        $region70: #{tpu_custom_call.1} parent=39 // pred_check_branch
          %3853 = sbr.rel (%p3851) target = $region72
        $region71: #{tpu_custom_call.1} parent=39 // pred_region
          %v3854 = vld [vmem:[#allocation2] sm:$0xff]
          %v3855 = vld [vmem:[#allocation2 + $0x8] sm:$0xff]
          %v3856 = vld [vmem:[#allocation2 + $0x10] sm:$0xff]
          %v3857 = vld [vmem:[#allocation2 + $0x18] sm:$0xff]
          %v3858 = vld [vmem:[#allocation2 + $0x20] sm:$0xff]
          %v3859 = vld [vmem:[#allocation2 + $0x28] sm:$0xff]
          %v3860 = vld [vmem:[#allocation2 + $0x30] sm:$0xff]
          %v3861 = vld [vmem:[#allocation2 + $0x38] sm:$0xff]
          %v3862 = vld [vmem:[#allocation2 + $0x40] sm:$0xff]
          %v3863 = vld [vmem:[#allocation2 + $0x48] sm:$0xff]
          %v3864 = vld [vmem:[#allocation2 + $0x50] sm:$0xff]
          %v3865 = vld [vmem:[#allocation2 + $0x58] sm:$0xff]
          %v3866 = vld [vmem:[#allocation2 + $0x60] sm:$0xff]
          %v3867 = vld [vmem:[#allocation2 + $0x68] sm:$0xff]
          %v3868 = vld [vmem:[#allocation2 + $0x70] sm:$0xff]
          %v3869 = vld [vmem:[#allocation2 + $0x78] sm:$0xff]
          %3870 = vst [vmem:[%s334] sm:$0xff] %v3854
          %3871 = vst [vmem:[%s334 + $0x8] sm:$0xff] %v3855
          %3872 = vst [vmem:[%s334 + $0x10] sm:$0xff] %v3856
          %3873 = vst [vmem:[%s334 + $0x18] sm:$0xff] %v3857
          %3874 = vst [vmem:[%s334 + $0x20] sm:$0xff] %v3858
          %3875 = vst [vmem:[%s334 + $0x28] sm:$0xff] %v3859
          %3876 = vst [vmem:[%s334 + $0x30] sm:$0xff] %v3860
          %3877 = vst [vmem:[%s334 + $0x38] sm:$0xff] %v3861
          %3878 = vst [vmem:[%s334 + $0x40] sm:$0xff] %v3862
          %3879 = vst [vmem:[%s334 + $0x48] sm:$0xff] %v3863
          %3880 = vst [vmem:[%s334 + $0x50] sm:$0xff] %v3864
          %3881 = vst [vmem:[%s334 + $0x58] sm:$0xff] %v3865
          %3882 = vst [vmem:[%s334 + $0x60] sm:$0xff] %v3866
          %3883 = vst [vmem:[%s334 + $0x68] sm:$0xff] %v3867
          %3884 = vst [vmem:[%s334 + $0x70] sm:$0xff] %v3868
          %3885 = vst [vmem:[%s334 + $0x78] sm:$0xff] %v3869
        $region72: #{tpu_custom_call.1} parent=39 // pred_fallthru
          _
        %s3886 = sand.u32 %s169, 1
        %s3887 = scalar_lea.sflag [#allocation5], %s3886
        %s3888 = sand.u32 %s169, 1
        %s3889 = smul.addr %s3888, 128
        %s3890 = scalar_lea.vmem [#allocation12], %s3889
        // Predicated region
        $region73: #{tpu_custom_call.1} parent=39 // pred_check
          %p3891 = pneg %p179
        $region74: #{tpu_custom_call.1} parent=39 // pred_check_branch
          %3893 = sbr.rel (%p3891) target = $region76
        $region75: #{tpu_custom_call.1} parent=39 // pred_region
          %s3895 = ssub.s32 2048, 2048
          %3896 = vsyncadd %s3887, %s3895
          %s3897 = smul.addr %s28, 16
          %s3898 = smul.addr %s3897, 128
          %s3899 = scalar_lea.hbm %s5, %s3898
          %s3900 = sshll.u32 %s3890, 4
          %s3901 = int_to_ptr.vmem [resolvable:$true] %s3900
          %3906 = dma.vmem_to_hbm [thread:$0]  %s3901, 2048, %s3899, %s3887, 128, 128, 8
        $region76: #{tpu_custom_call.1} parent=39 // pred_fallthru
          _
      $region40: #{tpu_custom_call.1} parent=5 // pred_fallthru
        _
      %p3907 = scmp.le.s32.totalorder 2, %s19
      // Predicated region
      $region77: #{tpu_custom_call.1} parent=5 // pred_check
        %p3908 = pneg %p3907
      $region78: #{tpu_custom_call.1} parent=5 // pred_check_branch
        %3910 = sbr.rel (%p3908) target = $region80
      $region79: #{tpu_custom_call.1} parent=5 // pred_region
        %s3911 = ssub.s32 %s19, 2
        // Predicated region
        $region81: #{tpu_custom_call.1} parent=79 // pred_check
          %p3912 = pneg %p185
        $region82: #{tpu_custom_call.1} parent=79 // pred_check_branch
          %3914 = sbr.rel (%p3912) target = $region84
        $region83: #{tpu_custom_call.1} parent=79 // pred_region
          %s3915 = sand.u32 %s170, 1
          %s3916 = scalar_lea.sflag [#allocation5], %s3915
          %s3917 = sand.u32 %s170, 1
          %s3918 = smul.addr %s3917, 128
          %s3919 = scalar_lea.vmem [#allocation12], %s3918
          %3920 = dma.done %s3916, 2048
        $region84: #{tpu_custom_call.1} parent=79 // pred_fallthru
          _
      $region80: #{tpu_custom_call.1} parent=5 // pred_fallthru
        _
    $region6: #{tpu_custom_call.1} parent=1 // loop_footer
      %s23 = sadd.s32 1, %s19
    $region7: #{tpu_custom_call.1} parent=1 // loop_footer_branch
      %18 = sbr.rel target = $region3
    $region8: #{tpu_custom_call.1} parent=1 // loop_exit
      _
    %3921 = vsyncpa [#allocation4], 1
    %s3922 = scalar_lea.sflag [#allocation4], 1
    %3923 = vsyncpa %s3922, 1
    %3924 = vsyncpa [#allocation7], 1
    %3925 = vsyncpa [#allocation10], 1
    %3926 = vsyncpa [#allocation5], 1
    %s3927 = scalar_lea.sflag [#allocation5], 1
    %3928 = vsyncpa %s3927, 1

</llo_original>
